<compile_context>
chip_gen: v6e
topology: v6e:2x2x1
jax: 0.10.0
libtpu: 0.0.40
codegen_flags: <defaults>
</compile_context>

<pallas_src>
import numpy as np
import jax
import jax.numpy as jnp
from jax.experimental import pallas as pl
from jax.experimental.pallas import tpu as pltpu


# ----------------------------------------------------------------------------
# Pallas kernels
# ----------------------------------------------------------------------------
def _conv_block_kernel(p_ref, w_ref, b_ref, o_ref):
    # p_ref: (1, 4, K, Mp)  bf16  pool-quadrant patches for one sample
    #                              (K = 9*Cin taps, Mp = Hp*Wp pooled positions)
    # w_ref: (Cout, K)      bf16  conv weights, channel-major
    # b_ref: (Cout, 1)      f32   conv bias (broadcast over lanes)
    # o_ref: (1, Cout, Mp)  bf16  pooled block output (NCHW-flat per sample)
    w = w_ref[...]
    b = b_ref[...]
    acc = jnp.zeros(o_ref.shape[1:], jnp.float32)
    for q in range(4):  # static unroll over the 4 pooling quadrants
        y = jnp.dot(w, p_ref[0, q], preferred_element_type=jnp.float32)
        acc = acc + jnp.maximum(y + b, 0.0)          # conv + bias + ReLU
    o_ref[0] = (0.25 * acc).astype(o_ref.dtype)      # 2x2 average pool
    # TODO(synk): Dropout2d(p=0.5) is identity in eval mode; not implemented for training.


def _mlp_kernel(x_ref, w1_ref, b1_ref, w2_ref, b2_ref, w3_ref, b3_ref, o_ref):
    # x tile (tb, 2304) bf16; weights bf16; biases f32; output f32.
    h = jnp.dot(x_ref[...], w1_ref[...], preferred_element_type=jnp.float32) + b1_ref[...]
    h = jnp.maximum(h, 0.0)
    # TODO(synk): Dropout(p=0.2) is identity in eval mode; not implemented for training.
    h = jnp.dot(h.astype(jnp.bfloat16), w2_ref[...],
                preferred_element_type=jnp.float32) + b2_ref[...]
    h = jnp.maximum(h, 0.0)
    o_ref[...] = jnp.dot(h.astype(jnp.bfloat16), w3_ref[...],
                         preferred_element_type=jnp.float32) + b3_ref[...]


# ----------------------------------------------------------------------------
# Pallas wrappers
# ----------------------------------------------------------------------------
def conv_block_pallas(patches, w2d, b):
    # patches: (N, 4, K, Mp) bf16, w2d: (Cout, K) bf16, b: (Cout, 1) f32
    N, _, K, Mp = patches.shape
    Cout = w2d.shape[0]
    return pl.pallas_call(
        _conv_block_kernel,
        out_shape=jax.ShapeDtypeStruct((N, Cout, Mp), jnp.bfloat16),
        grid=(N,),
        in_specs=[
            pl.BlockSpec((1, 4, K, Mp), lambda n: (n, 0, 0, 0)),
            pl.BlockSpec((Cout, K), lambda n: (0, 0)),
            pl.BlockSpec((Cout, 1), lambda n: (0, 0)),
        ],
        out_specs=pl.BlockSpec((1, Cout, Mp), lambda n: (n, 0, 0)),
        compiler_params=pltpu.CompilerParams(dimension_semantics=("parallel",)),
    )(patches, w2d, b)


def mlp_pallas(x, w1, b1, w2, b2, w3, b3):
    N, D = x.shape
    C = w3.shape[1]
    # Batch-tiled parallel grid (>=2 steps at realistic batch sizes; for tiny N the
    # tile equals the batch so the (8,128) BlockSpec rule is always satisfied).
    if N > 8 and N % 8 == 0:
        tb = next(c for c in (128, 64, 32, 16, 8) if N % c == 0)
    else:
        tb = N
    full = lambda a: pl.BlockSpec(a.shape, lambda i: (0,) * a.ndim)
    return pl.pallas_call(
        _mlp_kernel,
        out_shape=jax.ShapeDtypeStruct((N, C), jnp.float32),
        grid=(N // tb,),
        in_specs=[pl.BlockSpec((tb, D), lambda i: (i, 0)),
                  full(w1), full(b1), full(w2), full(b2), full(w3), full(b3)],
        out_specs=pl.BlockSpec((tb, C), lambda i: (i, 0)),
        compiler_params=pltpu.CompilerParams(dimension_semantics=("parallel",)),
    )(x, w1, b1, w2, b2, w3, b3)


# ----------------------------------------------------------------------------
# Plain-JAX glue (pure layout / gather work; all FLOPs live in the kernels)
# ----------------------------------------------------------------------------
def pooled_patches(x_nchw, Hp, Wp):
    """(N, Cin, H, W) -> (N, 4, 9*Cin, Hp*Wp) conv patches grouped by pool quadrant.

    patches[n, 2*dh+dw, cin*9 + kh*3 + kw, hp*Wp + wp]
        == x[n, cin, 2*hp + dh + kh, 2*wp + dw + kw]
    Only positions read by AvgPool2d(2) are gathered (odd leftover rows/cols of the
    conv output are dropped, matching PyTorch's floor behaviour).
    """
    N, Cin, _, _ = x_nchw.shape
    quads = []
    for dh in range(2):
        for dw in range(2):
            taps = []
            for kh in range(3):
                for kw in range(3):
                    a, b = dh + kh, dw + kw
                    taps.append(x_nchw[:, :, a:a + 2 * Hp - 1:2, b:b + 2 * Wp - 1:2])
            t = jnp.stack(taps, axis=2)                    # (N, Cin, 9, Hp, Wp)
            quads.append(t.reshape(N, Cin * 9, Hp * Wp))
    return jnp.stack(quads, axis=1)                        # (N, 4, 9*Cin, Hp*Wp)


# ----------------------------------------------------------------------------
# Deterministic parameter init (PyTorch-style uniform(-1/sqrt(fan_in), +))
# ----------------------------------------------------------------------------
def init_conv(key, cin, cout):
    k1, k2 = jax.random.split(key)
    bound = 1.0 / np.sqrt(cin * 9)
    w = jax.random.uniform(k1, (cout, cin, 3, 3), jnp.float32, -bound, bound)  # PyTorch layout
    b = jax.random.uniform(k2, (cout, 1), jnp.float32, -bound, bound)
    # (Cout, Cin, kh, kw) -> (Cout, 9*Cin) with k = cin*9 + kh*3 + kw (matches patches)
    return w.reshape(cout, cin * 9), b


def init_linear(key, din, dout):
    k1, k2 = jax.random.split(key)
    bound = 1.0 / np.sqrt(din)
    w = jax.random.uniform(k1, (dout, din), jnp.float32, -bound, bound)  # PyTorch layout
    b = jax.random.uniform(k2, (1, dout), jnp.float32, -bound, bound)
    return jnp.transpose(w), b  # (din, dout)


def init_firenet_params(classes, seed=42):
    keys = jax.random.split(jax.random.PRNGKey(seed), 6)
    return {
        "blocks": [
            init_conv(keys[0], 3, 16),
            init_conv(keys[1], 16, 32),
            init_conv(keys[2], 32, 64),
        ],
        "lin1": init_linear(keys[3], 64 * 6 * 6, 256),
        "lin2": init_linear(keys[4], 256, 128),
        "lin3": init_linear(keys[5], 128, classes),
    }


# ----------------------------------------------------------------------------
# FireNet forward
# ----------------------------------------------------------------------------
def firenet_forward(x_nchw, params):
    x = x_nchw.astype(jnp.bfloat16)                       # NCHW, bf16 activations
    for (w2d, b) in params["blocks"]:
        N, _, H, W = x.shape
        Hp, Wp = (H - 2) // 2, (W - 2) // 2
        cout = w2d.shape[0]
        patches = pooled_patches(x, Hp, Wp)               # (N, 4, 9*Cin, Hp*Wp) bf16
        out = conv_block_pallas(patches, w2d.astype(jnp.bfloat16), b)  # (N, Cout, Hp*Wp)
        x = out.reshape(N, cout, Hp, Wp)                  # NCHW
    N = x.shape[0]
    feat = x.reshape(N, -1)                               # == PyTorch .flatten(1) (NCHW order)
    w1, b1 = params["lin1"]
    w2, b2 = params["lin2"]
    w3, b3 = params["lin3"]
    return mlp_pallas(feat,
                      w1.astype(jnp.bfloat16), b1,
                      w2.astype(jnp.bfloat16), b2,
                      w3.astype(jnp.bfloat16), b3)


if __name__ == "__main__":
    classes = 10
    batch = 2
    # FireNet's Linear(64*6*6, 256) fixes the spatial input size to 64x64.
    x = jax.random.normal(jax.random.PRNGKey(0), (batch, 3, 64, 64), jnp.float32)
    params = init_firenet_params(classes)

    fwd = jax.jit(firenet_forward)
    out = jax.block_until_ready(fwd(x, params))
    assert out.shape == (batch, classes), out.shape
    assert bool(jnp.all(jnp.isfinite(out)))
    print("KERNEL_OK")
</pallas_src>

<mosaic_0001>
module attributes {stable_mosaic.version = 11 : i64} {
  func.func @_conv_block_kernel(%arg0: i32, %arg1: memref<1x4x27x961xbf16, #tpu.memory_space<vmem>>, %arg2: memref<16x27xbf16, #tpu.memory_space<vmem>>, %arg3: memref<16x1xf32, #tpu.memory_space<vmem>>, %arg4: memref<1x16x961xbf16, #tpu.memory_space<vmem>>) attributes {dimension_semantics = [#tpu.dimension_semantics<parallel>], iteration_bounds = array<i64: 2>, scalar_prefetch = 0 : i64, scratch_operands = 0 : i64, tpu.core_type = #tpu.core_type<tc>, window_params = [{transform_indices = @transform_0, window_bounds = array<i64: 1, 4, 27, 961>}, {pipeline_mode = #tpu.pipeline_mode<synchronous>, transform_indices = @transform_1, window_bounds = array<i64: 16, 27>}, {pipeline_mode = #tpu.pipeline_mode<synchronous>, transform_indices = @transform_2, window_bounds = array<i64: 16, 1>}, {transform_indices = @transform_3, window_bounds = array<i64: 1, 16, 961>}]} {
    %c0 = arith.constant 0 : index
    %c0_0 = arith.constant 0 : index
    %0 = vector.load %arg2[%c0, %c0_0] : memref<16x27xbf16, #tpu.memory_space<vmem>>, vector<16x27xbf16>
    %c0_1 = arith.constant 0 : index
    %c0_2 = arith.constant 0 : index
    %1 = vector.load %arg3[%c0_1, %c0_2] : memref<16x1xf32, #tpu.memory_space<vmem>>, vector<16x1xf32>
    %cst = arith.constant 0.000000e+00 : f32
    %2 = vector.broadcast %cst : f32 to vector<16x961xf32>
    %c0_3 = arith.constant 0 : index
    %c0_4 = arith.constant 0 : index
    %c0_5 = arith.constant 0 : index
    %c0_6 = arith.constant 0 : index
    %3 = vector.load %arg1[%c0_3, %c0_4, %c0_5, %c0_6] : memref<1x4x27x961xbf16, #tpu.memory_space<vmem>>, vector<1x1x27x961xbf16>
    %4 = vector.shape_cast %3 : vector<1x1x27x961xbf16> to vector<27x961xbf16>
    %cst_7 = arith.constant dense<0.000000e+00> : vector<16x961xf32>
    %5 = tpu.matmul %0, %4, %cst_7 {dimension_numbers = #tpu.dot_dimension_numbers<[1], [0], [0], [1], [0, 0, 1, 1], [], []>} : vector<16x27xbf16>, vector<27x961xbf16>, vector<16x961xf32> -> vector<16x961xf32>
    %6 = vector.broadcast %1 : vector<16x1xf32> to vector<16x961xf32>
    %7 = arith.addf %5, %6 : vector<16x961xf32>
    %cst_8 = arith.constant 0.000000e+00 : f32
    %8 = vector.broadcast %cst_8 : f32 to vector<16x961xf32>
    %9 = arith.maximumf %7, %8 : vector<16x961xf32>
    %10 = arith.addf %2, %9 : vector<16x961xf32>
    %c0_9 = arith.constant 0 : index
    %c1 = arith.constant 1 : index
    %c0_10 = arith.constant 0 : index
    %c0_11 = arith.constant 0 : index
    %11 = vector.load %arg1[%c0_9, %c1, %c0_10, %c0_11] : memref<1x4x27x961xbf16, #tpu.memory_space<vmem>>, vector<1x1x27x961xbf16>
    %12 = vector.shape_cast %11 : vector<1x1x27x961xbf16> to vector<27x961xbf16>
    %cst_12 = arith.constant dense<0.000000e+00> : vector<16x961xf32>
    %13 = tpu.matmul %0, %12, %cst_12 {dimension_numbers = #tpu.dot_dimension_numbers<[1], [0], [0], [1], [0, 0, 1, 1], [], []>} : vector<16x27xbf16>, vector<27x961xbf16>, vector<16x961xf32> -> vector<16x961xf32>
    %14 = vector.broadcast %1 : vector<16x1xf32> to vector<16x961xf32>
    %15 = arith.addf %13, %14 : vector<16x961xf32>
    %cst_13 = arith.constant 0.000000e+00 : f32
    %16 = vector.broadcast %cst_13 : f32 to vector<16x961xf32>
    %17 = arith.maximumf %15, %16 : vector<16x961xf32>
    %18 = arith.addf %10, %17 : vector<16x961xf32>
    %c0_14 = arith.constant 0 : index
    %c2 = arith.constant 2 : index
    %c0_15 = arith.constant 0 : index
    %c0_16 = arith.constant 0 : index
    %19 = vector.load %arg1[%c0_14, %c2, %c0_15, %c0_16] : memref<1x4x27x961xbf16, #tpu.memory_space<vmem>>, vector<1x1x27x961xbf16>
    %20 = vector.shape_cast %19 : vector<1x1x27x961xbf16> to vector<27x961xbf16>
    %cst_17 = arith.constant dense<0.000000e+00> : vector<16x961xf32>
    %21 = tpu.matmul %0, %20, %cst_17 {dimension_numbers = #tpu.dot_dimension_numbers<[1], [0], [0], [1], [0, 0, 1, 1], [], []>} : vector<16x27xbf16>, vector<27x961xbf16>, vector<16x961xf32> -> vector<16x961xf32>
    %22 = vector.broadcast %1 : vector<16x1xf32> to vector<16x961xf32>
    %23 = arith.addf %21, %22 : vector<16x961xf32>
    %cst_18 = arith.constant 0.000000e+00 : f32
    %24 = vector.broadcast %cst_18 : f32 to vector<16x961xf32>
    %25 = arith.maximumf %23, %24 : vector<16x961xf32>
    %26 = arith.addf %18, %25 : vector<16x961xf32>
    %c0_19 = arith.constant 0 : index
    %c3 = arith.constant 3 : index
    %c0_20 = arith.constant 0 : index
    %c0_21 = arith.constant 0 : index
    %27 = vector.load %arg1[%c0_19, %c3, %c0_20, %c0_21] : memref<1x4x27x961xbf16, #tpu.memory_space<vmem>>, vector<1x1x27x961xbf16>
    %28 = vector.shape_cast %27 : vector<1x1x27x961xbf16> to vector<27x961xbf16>
    %cst_22 = arith.constant dense<0.000000e+00> : vector<16x961xf32>
    %29 = tpu.matmul %0, %28, %cst_22 {dimension_numbers = #tpu.dot_dimension_numbers<[1], [0], [0], [1], [0, 0, 1, 1], [], []>} : vector<16x27xbf16>, vector<27x961xbf16>, vector<16x961xf32> -> vector<16x961xf32>
    %30 = vector.broadcast %1 : vector<16x1xf32> to vector<16x961xf32>
    %31 = arith.addf %29, %30 : vector<16x961xf32>
    %cst_23 = arith.constant 0.000000e+00 : f32
    %32 = vector.broadcast %cst_23 : f32 to vector<16x961xf32>
    %33 = arith.maximumf %31, %32 : vector<16x961xf32>
    %34 = arith.addf %26, %33 : vector<16x961xf32>
    %cst_24 = arith.constant 2.500000e-01 : f32
    %35 = vector.broadcast %cst_24 : f32 to vector<16x961xf32>
    %36 = arith.mulf %35, %34 : vector<16x961xf32>
    %37 = arith.truncf %36 : vector<16x961xf32> to vector<16x961xbf16>
    %c0_25 = arith.constant 0 : index
    %c0_26 = arith.constant 0 : index
    %c0_27 = arith.constant 0 : index
    %38 = vector.load %arg4[%c0_25, %c0_26, %c0_27] : memref<1x16x961xbf16, #tpu.memory_space<vmem>>, vector<1x16x961xbf16>
    %39 = vector.shape_cast %38 : vector<1x16x961xbf16> to vector<16x961xbf16>
    %40 = vector.shape_cast %37 : vector<16x961xbf16> to vector<1x16x961xbf16>
    tpu.vector_store %arg4[%c0_25, %c0_26, %c0_27], %40 {strides = array<i32>} : memref<1x16x961xbf16, #tpu.memory_space<vmem>>, vector<1x16x961xbf16>,
    return
  }
  func.func @transform_0(%arg0: i32) -> (i32, i32, i32, i32) {
    %c0_i32 = arith.constant 0 : i32
    %c0_i32_0 = arith.constant 0 : i32
    %c0_i32_1 = arith.constant 0 : i32
    %c0_i32_2 = arith.constant 0 : i32
    return %arg0, %c0_i32, %c0_i32_0, %c0_i32_1 : i32, i32, i32, i32
  }
  func.func @transform_1(%arg0: i32) -> (i32, i32) {
    %c0_i32 = arith.constant 0 : i32
    %c0_i32_0 = arith.constant 0 : i32
    %c0_i32_1 = arith.constant 0 : i32
    return %c0_i32, %c0_i32_0 : i32, i32
  }
  func.func @transform_2(%arg0: i32) -> (i32, i32) {
    %c0_i32 = arith.constant 0 : i32
    %c0_i32_0 = arith.constant 0 : i32
    %c0_i32_1 = arith.constant 0 : i32
    return %c0_i32, %c0_i32_0 : i32, i32
  }
  func.func @transform_3(%arg0: i32) -> (i32, i32, i32) {
    %c0_i32 = arith.constant 0 : i32
    %c0_i32_0 = arith.constant 0 : i32
    %c0_i32_1 = arith.constant 0 : i32
    return %arg0, %c0_i32, %c0_i32_0 : i32, i32, i32
  }
}

module attributes {stable_mosaic.version = 11 : i64} {
  func.func @_conv_block_kernel(%arg0: i32, %arg1: memref<1x4x144x196xbf16, #tpu.memory_space<vmem>>, %arg2: memref<32x144xbf16, #tpu.memory_space<vmem>>, %arg3: memref<32x1xf32, #tpu.memory_space<vmem>>, %arg4: memref<1x32x196xbf16, #tpu.memory_space<vmem>>) attributes {dimension_semantics = [#tpu.dimension_semantics<parallel>], iteration_bounds = array<i64: 2>, scalar_prefetch = 0 : i64, scratch_operands = 0 : i64, tpu.core_type = #tpu.core_type<tc>, window_params = [{transform_indices = @transform_0, window_bounds = array<i64: 1, 4, 144, 196>}, {pipeline_mode = #tpu.pipeline_mode<synchronous>, transform_indices = @transform_1, window_bounds = array<i64: 32, 144>}, {pipeline_mode = #tpu.pipeline_mode<synchronous>, transform_indices = @transform_2, window_bounds = array<i64: 32, 1>}, {transform_indices = @transform_3, window_bounds = array<i64: 1, 32, 196>}]} {
    %c0 = arith.constant 0 : index
    %c0_0 = arith.constant 0 : index
    %0 = vector.load %arg2[%c0, %c0_0] : memref<32x144xbf16, #tpu.memory_space<vmem>>, vector<32x144xbf16>
    %c0_1 = arith.constant 0 : index
    %c0_2 = arith.constant 0 : index
    %1 = vector.load %arg3[%c0_1, %c0_2] : memref<32x1xf32, #tpu.memory_space<vmem>>, vector<32x1xf32>
    %cst = arith.constant 0.000000e+00 : f32
    %2 = vector.broadcast %cst : f32 to vector<32x196xf32>
    %c0_3 = arith.constant 0 : index
    %c0_4 = arith.constant 0 : index
    %c0_5 = arith.constant 0 : index
    %c0_6 = arith.constant 0 : index
    %3 = vector.load %arg1[%c0_3, %c0_4, %c0_5, %c0_6] : memref<1x4x144x196xbf16, #tpu.memory_space<vmem>>, vector<1x1x144x196xbf16>
    %4 = vector.shape_cast %3 : vector<1x1x144x196xbf16> to vector<144x196xbf16>
    %cst_7 = arith.constant dense<0.000000e+00> : vector<32x196xf32>
    %5 = tpu.matmul %0, %4, %cst_7 {dimension_numbers = #tpu.dot_dimension_numbers<[1], [0], [0], [1], [0, 0, 1, 1], [], []>} : vector<32x144xbf16>, vector<144x196xbf16>, vector<32x196xf32> -> vector<32x196xf32>
    %6 = vector.broadcast %1 : vector<32x1xf32> to vector<32x196xf32>
    %7 = arith.addf %5, %6 : vector<32x196xf32>
    %cst_8 = arith.constant 0.000000e+00 : f32
    %8 = vector.broadcast %cst_8 : f32 to vector<32x196xf32>
    %9 = arith.maximumf %7, %8 : vector<32x196xf32>
    %10 = arith.addf %2, %9 : vector<32x196xf32>
    %c0_9 = arith.constant 0 : index
    %c1 = arith.constant 1 : index
    %c0_10 = arith.constant 0 : index
    %c0_11 = arith.constant 0 : index
    %11 = vector.load %arg1[%c0_9, %c1, %c0_10, %c0_11] : memref<1x4x144x196xbf16, #tpu.memory_space<vmem>>, vector<1x1x144x196xbf16>
    %12 = vector.shape_cast %11 : vector<1x1x144x196xbf16> to vector<144x196xbf16>
    %cst_12 = arith.constant dense<0.000000e+00> : vector<32x196xf32>
    %13 = tpu.matmul %0, %12, %cst_12 {dimension_numbers = #tpu.dot_dimension_numbers<[1], [0], [0], [1], [0, 0, 1, 1], [], []>} : vector<32x144xbf16>, vector<144x196xbf16>, vector<32x196xf32> -> vector<32x196xf32>
    %14 = vector.broadcast %1 : vector<32x1xf32> to vector<32x196xf32>
    %15 = arith.addf %13, %14 : vector<32x196xf32>
    %cst_13 = arith.constant 0.000000e+00 : f32
    %16 = vector.broadcast %cst_13 : f32 to vector<32x196xf32>
    %17 = arith.maximumf %15, %16 : vector<32x196xf32>
    %18 = arith.addf %10, %17 : vector<32x196xf32>
    %c0_14 = arith.constant 0 : index
    %c2 = arith.constant 2 : index
    %c0_15 = arith.constant 0 : index
    %c0_16 = arith.constant 0 : index
    %19 = vector.load %arg1[%c0_14, %c2, %c0_15, %c0_16] : memref<1x4x144x196xbf16, #tpu.memory_space<vmem>>, vector<1x1x144x196xbf16>
    %20 = vector.shape_cast %19 : vector<1x1x144x196xbf16> to vector<144x196xbf16>
    %cst_17 = arith.constant dense<0.000000e+00> : vector<32x196xf32>
    %21 = tpu.matmul %0, %20, %cst_17 {dimension_numbers = #tpu.dot_dimension_numbers<[1], [0], [0], [1], [0, 0, 1, 1], [], []>} : vector<32x144xbf16>, vector<144x196xbf16>, vector<32x196xf32> -> vector<32x196xf32>
    %22 = vector.broadcast %1 : vector<32x1xf32> to vector<32x196xf32>
    %23 = arith.addf %21, %22 : vector<32x196xf32>
    %cst_18 = arith.constant 0.000000e+00 : f32
    %24 = vector.broadcast %cst_18 : f32 to vector<32x196xf32>
    %25 = arith.maximumf %23, %24 : vector<32x196xf32>
    %26 = arith.addf %18, %25 : vector<32x196xf32>
    %c0_19 = arith.constant 0 : index
    %c3 = arith.constant 3 : index
    %c0_20 = arith.constant 0 : index
    %c0_21 = arith.constant 0 : index
    %27 = vector.load %arg1[%c0_19, %c3, %c0_20, %c0_21] : memref<1x4x144x196xbf16, #tpu.memory_space<vmem>>, vector<1x1x144x196xbf16>
    %28 = vector.shape_cast %27 : vector<1x1x144x196xbf16> to vector<144x196xbf16>
    %cst_22 = arith.constant dense<0.000000e+00> : vector<32x196xf32>
    %29 = tpu.matmul %0, %28, %cst_22 {dimension_numbers = #tpu.dot_dimension_numbers<[1], [0], [0], [1], [0, 0, 1, 1], [], []>} : vector<32x144xbf16>, vector<144x196xbf16>, vector<32x196xf32> -> vector<32x196xf32>
    %30 = vector.broadcast %1 : vector<32x1xf32> to vector<32x196xf32>
    %31 = arith.addf %29, %30 : vector<32x196xf32>
    %cst_23 = arith.constant 0.000000e+00 : f32
    %32 = vector.broadcast %cst_23 : f32 to vector<32x196xf32>
    %33 = arith.maximumf %31, %32 : vector<32x196xf32>
    %34 = arith.addf %26, %33 : vector<32x196xf32>
    %cst_24 = arith.constant 2.500000e-01 : f32
    %35 = vector.broadcast %cst_24 : f32 to vector<32x196xf32>
    %36 = arith.mulf %35, %34 : vector<32x196xf32>
    %37 = arith.truncf %36 : vector<32x196xf32> to vector<32x196xbf16>
    %c0_25 = arith.constant 0 : index
    %c0_26 = arith.constant 0 : index
    %c0_27 = arith.constant 0 : index
    %38 = vector.load %arg4[%c0_25, %c0_26, %c0_27] : memref<1x32x196xbf16, #tpu.memory_space<vmem>>, vector<1x32x196xbf16>
    %39 = vector.shape_cast %38 : vector<1x32x196xbf16> to vector<32x196xbf16>
    %40 = vector.shape_cast %37 : vector<32x196xbf16> to vector<1x32x196xbf16>
    tpu.vector_store %arg4[%c0_25, %c0_26, %c0_27], %40 {strides = array<i32>} : memref<1x32x196xbf16, #tpu.memory_space<vmem>>, vector<1x32x196xbf16>,
    return
  }
  func.func @transform_0(%arg0: i32) -> (i32, i32, i32, i32) {
    %c0_i32 = arith.constant 0 : i32
    %c0_i32_0 = arith.constant 0 : i32
    %c0_i32_1 = arith.constant 0 : i32
    %c0_i32_2 = arith.constant 0 : i32
    return %arg0, %c0_i32, %c0_i32_0, %c0_i32_1 : i32, i32, i32, i32
  }
  func.func @transform_1(%arg0: i32) -> (i32, i32) {
    %c0_i32 = arith.constant 0 : i32
    %c0_i32_0 = arith.constant 0 : i32
    %c0_i32_1 = arith.constant 0 : i32
    return %c0_i32, %c0_i32_0 : i32, i32
  }
  func.func @transform_2(%arg0: i32) -> (i32, i32) {
    %c0_i32 = arith.constant 0 : i32
    %c0_i32_0 = arith.constant 0 : i32
    %c0_i32_1 = arith.constant 0 : i32
    return %c0_i32, %c0_i32_0 : i32, i32
  }
  func.func @transform_3(%arg0: i32) -> (i32, i32, i32) {
    %c0_i32 = arith.constant 0 : i32
    %c0_i32_0 = arith.constant 0 : i32
    %c0_i32_1 = arith.constant 0 : i32
    return %arg0, %c0_i32, %c0_i32_0 : i32, i32, i32
  }
}

module attributes {stable_mosaic.version = 11 : i64} {
  func.func @_conv_block_kernel(%arg0: i32, %arg1: memref<1x4x288x36xbf16, #tpu.memory_space<vmem>>, %arg2: memref<64x288xbf16, #tpu.memory_space<vmem>>, %arg3: memref<64x1xf32, #tpu.memory_space<vmem>>, %arg4: memref<1x64x36xbf16, #tpu.memory_space<vmem>>) attributes {dimension_semantics = [#tpu.dimension_semantics<parallel>], iteration_bounds = array<i64: 2>, scalar_prefetch = 0 : i64, scratch_operands = 0 : i64, tpu.core_type = #tpu.core_type<tc>, window_params = [{transform_indices = @transform_0, window_bounds = array<i64: 1, 4, 288, 36>}, {pipeline_mode = #tpu.pipeline_mode<synchronous>, transform_indices = @transform_1, window_bounds = array<i64: 64, 288>}, {pipeline_mode = #tpu.pipeline_mode<synchronous>, transform_indices = @transform_2, window_bounds = array<i64: 64, 1>}, {transform_indices = @transform_3, window_bounds = array<i64: 1, 64, 36>}]} {
    %c0 = arith.constant 0 : index
    %c0_0 = arith.constant 0 : index
    %0 = vector.load %arg2[%c0, %c0_0] : memref<64x288xbf16, #tpu.memory_space<vmem>>, vector<64x288xbf16>
    %c0_1 = arith.constant 0 : index
    %c0_2 = arith.constant 0 : index
    %1 = vector.load %arg3[%c0_1, %c0_2] : memref<64x1xf32, #tpu.memory_space<vmem>>, vector<64x1xf32>
    %cst = arith.constant 0.000000e+00 : f32
    %2 = vector.broadcast %cst : f32 to vector<64x36xf32>
    %c0_3 = arith.constant 0 : index
    %c0_4 = arith.constant 0 : index
    %c0_5 = arith.constant 0 : index
    %c0_6 = arith.constant 0 : index
    %3 = vector.load %arg1[%c0_3, %c0_4, %c0_5, %c0_6] : memref<1x4x288x36xbf16, #tpu.memory_space<vmem>>, vector<1x1x288x36xbf16>
    %4 = vector.shape_cast %3 : vector<1x1x288x36xbf16> to vector<288x36xbf16>
    %cst_7 = arith.constant dense<0.000000e+00> : vector<64x36xf32>
    %5 = tpu.matmul %0, %4, %cst_7 {dimension_numbers = #tpu.dot_dimension_numbers<[1], [0], [0], [1], [0, 0, 1, 1], [], []>} : vector<64x288xbf16>, vector<288x36xbf16>, vector<64x36xf32> -> vector<64x36xf32>
    %6 = vector.broadcast %1 : vector<64x1xf32> to vector<64x36xf32>
    %7 = arith.addf %5, %6 : vector<64x36xf32>
    %cst_8 = arith.constant 0.000000e+00 : f32
    %8 = vector.broadcast %cst_8 : f32 to vector<64x36xf32>
    %9 = arith.maximumf %7, %8 : vector<64x36xf32>
    %10 = arith.addf %2, %9 : vector<64x36xf32>
    %c0_9 = arith.constant 0 : index
    %c1 = arith.constant 1 : index
    %c0_10 = arith.constant 0 : index
    %c0_11 = arith.constant 0 : index
    %11 = vector.load %arg1[%c0_9, %c1, %c0_10, %c0_11] : memref<1x4x288x36xbf16, #tpu.memory_space<vmem>>, vector<1x1x288x36xbf16>
    %12 = vector.shape_cast %11 : vector<1x1x288x36xbf16> to vector<288x36xbf16>
    %cst_12 = arith.constant dense<0.000000e+00> : vector<64x36xf32>
    %13 = tpu.matmul %0, %12, %cst_12 {dimension_numbers = #tpu.dot_dimension_numbers<[1], [0], [0], [1], [0, 0, 1, 1], [], []>} : vector<64x288xbf16>, vector<288x36xbf16>, vector<64x36xf32> -> vector<64x36xf32>
    %14 = vector.broadcast %1 : vector<64x1xf32> to vector<64x36xf32>
    %15 = arith.addf %13, %14 : vector<64x36xf32>
    %cst_13 = arith.constant 0.000000e+00 : f32
    %16 = vector.broadcast %cst_13 : f32 to vector<64x36xf32>
    %17 = arith.maximumf %15, %16 : vector<64x36xf32>
    %18 = arith.addf %10, %17 : vector<64x36xf32>
    %c0_14 = arith.constant 0 : index
    %c2 = arith.constant 2 : index
    %c0_15 = arith.constant 0 : index
    %c0_16 = arith.constant 0 : index
    %19 = vector.load %arg1[%c0_14, %c2, %c0_15, %c0_16] : memref<1x4x288x36xbf16, #tpu.memory_space<vmem>>, vector<1x1x288x36xbf16>
    %20 = vector.shape_cast %19 : vector<1x1x288x36xbf16> to vector<288x36xbf16>
    %cst_17 = arith.constant dense<0.000000e+00> : vector<64x36xf32>
    %21 = tpu.matmul %0, %20, %cst_17 {dimension_numbers = #tpu.dot_dimension_numbers<[1], [0], [0], [1], [0, 0, 1, 1], [], []>} : vector<64x288xbf16>, vector<288x36xbf16>, vector<64x36xf32> -> vector<64x36xf32>
    %22 = vector.broadcast %1 : vector<64x1xf32> to vector<64x36xf32>
    %23 = arith.addf %21, %22 : vector<64x36xf32>
    %cst_18 = arith.constant 0.000000e+00 : f32
    %24 = vector.broadcast %cst_18 : f32 to vector<64x36xf32>
    %25 = arith.maximumf %23, %24 : vector<64x36xf32>
    %26 = arith.addf %18, %25 : vector<64x36xf32>
    %c0_19 = arith.constant 0 : index
    %c3 = arith.constant 3 : index
    %c0_20 = arith.constant 0 : index
    %c0_21 = arith.constant 0 : index
    %27 = vector.load %arg1[%c0_19, %c3, %c0_20, %c0_21] : memref<1x4x288x36xbf16, #tpu.memory_space<vmem>>, vector<1x1x288x36xbf16>
    %28 = vector.shape_cast %27 : vector<1x1x288x36xbf16> to vector<288x36xbf16>
    %cst_22 = arith.constant dense<0.000000e+00> : vector<64x36xf32>
    %29 = tpu.matmul %0, %28, %cst_22 {dimension_numbers = #tpu.dot_dimension_numbers<[1], [0], [0], [1], [0, 0, 1, 1], [], []>} : vector<64x288xbf16>, vector<288x36xbf16>, vector<64x36xf32> -> vector<64x36xf32>
    %30 = vector.broadcast %1 : vector<64x1xf32> to vector<64x36xf32>
    %31 = arith.addf %29, %30 : vector<64x36xf32>
    %cst_23 = arith.constant 0.000000e+00 : f32
    %32 = vector.broadcast %cst_23 : f32 to vector<64x36xf32>
    %33 = arith.maximumf %31, %32 : vector<64x36xf32>
    %34 = arith.addf %26, %33 : vector<64x36xf32>
    %cst_24 = arith.constant 2.500000e-01 : f32
    %35 = vector.broadcast %cst_24 : f32 to vector<64x36xf32>
    %36 = arith.mulf %35, %34 : vector<64x36xf32>
    %37 = arith.truncf %36 : vector<64x36xf32> to vector<64x36xbf16>
    %c0_25 = arith.constant 0 : index
    %c0_26 = arith.constant 0 : index
    %c0_27 = arith.constant 0 : index
    %38 = vector.load %arg4[%c0_25, %c0_26, %c0_27] : memref<1x64x36xbf16, #tpu.memory_space<vmem>>, vector<1x64x36xbf16>
    %39 = vector.shape_cast %38 : vector<1x64x36xbf16> to vector<64x36xbf16>
    %40 = vector.shape_cast %37 : vector<64x36xbf16> to vector<1x64x36xbf16>
    tpu.vector_store %arg4[%c0_25, %c0_26, %c0_27], %40 {strides = array<i32>} : memref<1x64x36xbf16, #tpu.memory_space<vmem>>, vector<1x64x36xbf16>,
    return
  }
  func.func @transform_0(%arg0: i32) -> (i32, i32, i32, i32) {
    %c0_i32 = arith.constant 0 : i32
    %c0_i32_0 = arith.constant 0 : i32
    %c0_i32_1 = arith.constant 0 : i32
    %c0_i32_2 = arith.constant 0 : i32
    return %arg0, %c0_i32, %c0_i32_0, %c0_i32_1 : i32, i32, i32, i32
  }
  func.func @transform_1(%arg0: i32) -> (i32, i32) {
    %c0_i32 = arith.constant 0 : i32
    %c0_i32_0 = arith.constant 0 : i32
    %c0_i32_1 = arith.constant 0 : i32
    return %c0_i32, %c0_i32_0 : i32, i32
  }
  func.func @transform_2(%arg0: i32) -> (i32, i32) {
    %c0_i32 = arith.constant 0 : i32
    %c0_i32_0 = arith.constant 0 : i32
    %c0_i32_1 = arith.constant 0 : i32
    return %c0_i32, %c0_i32_0 : i32, i32
  }
  func.func @transform_3(%arg0: i32) -> (i32, i32, i32) {
    %c0_i32 = arith.constant 0 : i32
    %c0_i32_0 = arith.constant 0 : i32
    %c0_i32_1 = arith.constant 0 : i32
    return %arg0, %c0_i32, %c0_i32_0 : i32, i32, i32
  }
}

module attributes {stable_mosaic.version = 11 : i64} {
  func.func @_mlp_kernel(%arg0: i32, %arg1: memref<2x2304xbf16, #tpu.memory_space<vmem>>, %arg2: memref<2304x256xbf16, #tpu.memory_space<vmem>>, %arg3: memref<1x256xf32, #tpu.memory_space<vmem>>, %arg4: memref<256x128xbf16, #tpu.memory_space<vmem>>, %arg5: memref<1x128xf32, #tpu.memory_space<vmem>>, %arg6: memref<128x10xbf16, #tpu.memory_space<vmem>>, %arg7: memref<1x10xf32, #tpu.memory_space<vmem>>, %arg8: memref<2x10xf32, #tpu.memory_space<vmem>>) attributes {dimension_semantics = [#tpu.dimension_semantics<parallel>], iteration_bounds = array<i64: 1>, scalar_prefetch = 0 : i64, scratch_operands = 0 : i64, tpu.core_type = #tpu.core_type<tc>, window_params = [{transform_indices = @transform_0, window_bounds = array<i64: 2, 2304>}, {pipeline_mode = #tpu.pipeline_mode<synchronous>, transform_indices = @transform_1, window_bounds = array<i64: 2304, 256>}, {pipeline_mode = #tpu.pipeline_mode<synchronous>, transform_indices = @transform_2, window_bounds = array<i64: 1, 256>}, {pipeline_mode = #tpu.pipeline_mode<synchronous>, transform_indices = @transform_3, window_bounds = array<i64: 256, 128>}, {pipeline_mode = #tpu.pipeline_mode<synchronous>, transform_indices = @transform_4, window_bounds = array<i64: 1, 128>}, {pipeline_mode = #tpu.pipeline_mode<synchronous>, transform_indices = @transform_5, window_bounds = array<i64: 128, 10>}, {pipeline_mode = #tpu.pipeline_mode<synchronous>, transform_indices = @transform_6, window_bounds = array<i64: 1, 10>}, {transform_indices = @transform_7, window_bounds = array<i64: 2, 10>}]} {
    %c0 = arith.constant 0 : index
    %c0_0 = arith.constant 0 : index
    %0 = vector.load %arg1[%c0, %c0_0] : memref<2x2304xbf16, #tpu.memory_space<vmem>>, vector<2x2304xbf16>
    %c0_1 = arith.constant 0 : index
    %c0_2 = arith.constant 0 : index
    %1 = vector.load %arg2[%c0_1, %c0_2] : memref<2304x256xbf16, #tpu.memory_space<vmem>>, vector<2304x256xbf16>
    %cst = arith.constant dense<0.000000e+00> : vector<2x256xf32>
    %2 = tpu.matmul %0, %1, %cst {dimension_numbers = #tpu.dot_dimension_numbers<[1], [0], [0], [1], [0, 0, 1, 1], [], []>} : vector<2x2304xbf16>, vector<2304x256xbf16>, vector<2x256xf32> -> vector<2x256xf32>
    %c0_3 = arith.constant 0 : index
    %c0_4 = arith.constant 0 : index
    %3 = vector.load %arg3[%c0_3, %c0_4] : memref<1x256xf32, #tpu.memory_space<vmem>>, vector<1x256xf32>
    %4 = vector.broadcast %3 : vector<1x256xf32> to vector<2x256xf32>
    %5 = arith.addf %2, %4 : vector<2x256xf32>
    %cst_5 = arith.constant 0.000000e+00 : f32
    %6 = vector.broadcast %cst_5 : f32 to vector<2x256xf32>
    %7 = arith.maximumf %5, %6 : vector<2x256xf32>
    %8 = arith.truncf %7 : vector<2x256xf32> to vector<2x256xbf16>
    %c0_6 = arith.constant 0 : index
    %c0_7 = arith.constant 0 : index
    %9 = vector.load %arg4[%c0_6, %c0_7] : memref<256x128xbf16, #tpu.memory_space<vmem>>, vector<256x128xbf16>
    %cst_8 = arith.constant dense<0.000000e+00> : vector<2x128xf32>
    %10 = tpu.matmul %8, %9, %cst_8 {dimension_numbers = #tpu.dot_dimension_numbers<[1], [0], [0], [1], [0, 0, 1, 1], [], []>} : vector<2x256xbf16>, vector<256x128xbf16>, vector<2x128xf32> -> vector<2x128xf32>
    %c0_9 = arith.constant 0 : index
    %c0_10 = arith.constant 0 : index
    %11 = vector.load %arg5[%c0_9, %c0_10] : memref<1x128xf32, #tpu.memory_space<vmem>>, vector<1x128xf32>
    %12 = vector.broadcast %11 : vector<1x128xf32> to vector<2x128xf32>
    %13 = arith.addf %10, %12 : vector<2x128xf32>
    %cst_11 = arith.constant 0.000000e+00 : f32
    %14 = vector.broadcast %cst_11 : f32 to vector<2x128xf32>
    %15 = arith.maximumf %13, %14 : vector<2x128xf32>
    %16 = arith.truncf %15 : vector<2x128xf32> to vector<2x128xbf16>
    %c0_12 = arith.constant 0 : index
    %c0_13 = arith.constant 0 : index
    %17 = vector.load %arg6[%c0_12, %c0_13] : memref<128x10xbf16, #tpu.memory_space<vmem>>, vector<128x10xbf16>
    %cst_14 = arith.constant dense<0.000000e+00> : vector<2x10xf32>
    %18 = tpu.matmul %16, %17, %cst_14 {dimension_numbers = #tpu.dot_dimension_numbers<[1], [0], [0], [1], [0, 0, 1, 1], [], []>} : vector<2x128xbf16>, vector<128x10xbf16>, vector<2x10xf32> -> vector<2x10xf32>
    %c0_15 = arith.constant 0 : index
    %c0_16 = arith.constant 0 : index
    %19 = vector.load %arg7[%c0_15, %c0_16] : memref<1x10xf32, #tpu.memory_space<vmem>>, vector<1x10xf32>
    %20 = vector.broadcast %19 : vector<1x10xf32> to vector<2x10xf32>
    %21 = arith.addf %18, %20 : vector<2x10xf32>
    %c0_17 = arith.constant 0 : index
    %c0_18 = arith.constant 0 : index
    %22 = vector.load %arg8[%c0_17, %c0_18] : memref<2x10xf32, #tpu.memory_space<vmem>>, vector<2x10xf32>
    tpu.vector_store %arg8[%c0_17, %c0_18], %21 {strides = array<i32>} : memref<2x10xf32, #tpu.memory_space<vmem>>, vector<2x10xf32>,
    return
  }
  func.func @transform_0(%arg0: i32) -> (i32, i32) {
    %c0_i32 = arith.constant 0 : i32
    %c0_i32_0 = arith.constant 0 : i32
    return %arg0, %c0_i32 : i32, i32
  }
  func.func @transform_1(%arg0: i32) -> (i32, i32) {
    %c0_i32 = arith.constant 0 : i32
    %c0_i32_0 = arith.constant 0 : i32
    %c0_i32_1 = arith.constant 0 : i32
    return %c0_i32, %c0_i32_0 : i32, i32
  }
  func.func @transform_2(%arg0: i32) -> (i32, i32) {
    %c0_i32 = arith.constant 0 : i32
    %c0_i32_0 = arith.constant 0 : i32
    %c0_i32_1 = arith.constant 0 : i32
    return %c0_i32, %c0_i32_0 : i32, i32
  }
  func.func @transform_3(%arg0: i32) -> (i32, i32) {
    %c0_i32 = arith.constant 0 : i32
    %c0_i32_0 = arith.constant 0 : i32
    %c0_i32_1 = arith.constant 0 : i32
    return %c0_i32, %c0_i32_0 : i32, i32
  }
  func.func @transform_4(%arg0: i32) -> (i32, i32) {
    %c0_i32 = arith.constant 0 : i32
    %c0_i32_0 = arith.constant 0 : i32
    %c0_i32_1 = arith.constant 0 : i32
    return %c0_i32, %c0_i32_0 : i32, i32
  }
  func.func @transform_5(%arg0: i32) -> (i32, i32) {
    %c0_i32 = arith.constant 0 : i32
    %c0_i32_0 = arith.constant 0 : i32
    %c0_i32_1 = arith.constant 0 : i32
    return %c0_i32, %c0_i32_0 : i32, i32
  }
  func.func @transform_6(%arg0: i32) -> (i32, i32) {
    %c0_i32 = arith.constant 0 : i32
    %c0_i32_0 = arith.constant 0 : i32
    %c0_i32_1 = arith.constant 0 : i32
    return %c0_i32, %c0_i32_0 : i32, i32
  }
  func.func @transform_7(%arg0: i32) -> (i32, i32) {
    %c0_i32 = arith.constant 0 : i32
    %c0_i32_0 = arith.constant 0 : i32
    return %arg0, %c0_i32 : i32, i32
  }
}

</mosaic_0001>

<llo_original>
// kernel: firenet_forward.4
$region0: #{firenet_forward.4}
  #allocation0 [shape = 'u32[]', space=smem, size = 0x4, offset = 0x4, fixed_abs, tag = 'smem constant byte address 0x4 - core index']
  #allocation1 [shape = 'u32[144,128]{1,0:T(1,128)}', space=vmem, size = 0x12000, scoped, tag = 'internal scratch']
  %s0 = inlined_call_operand.vmem [shape: bf16[2,4,27,961], index: 0, kind: input, shape index: {}]
  %s1 = inlined_call_operand.vmem [shape: bf16[16,27], index: 1, kind: input, shape index: {}]
  %s2 = inlined_call_operand.vmem [shape: f32[16,1], index: 2, kind: input, shape index: {}]
  %s3 = inlined_call_operand.vmem [shape: bf16[2,16,961], index: 3, kind: output, shape index: {}]
  %s4 = sld [smem:[#allocation0]]
  $region45: #{firenet_forward.4} parent=0
    _
  %s6 = ssub.s32 1, %s4
  %s7 = scalar_select 0, %s6, %s4
  loop: start=0, step=1, limit=4
  $region2: #{firenet_forward.4} parent=0 // loop_pre_header
    _
  $region3: #{firenet_forward.4} parent=0 // loop_header
    %s9 = sphi 0, %s13
    %p10 = scmp.ge.s32.totalorder %s9, 4
    %s19 = sphi 0, %s21
    %s22 = sphi 0, %s19
    %s23 = sphi 0, %s22
    %s39 = sphi 0, %s23
    %s43 = sphi 0, %s43
    %s45 = sphi 0, %s43
    %s46 = sphi 0, %s45
    %s60 = sphi 0, %s46
    %s64 = sphi 0, %s64
    %s66 = sphi 0, %s64
    %s67 = sphi 0, %s66
    %s81 = sphi 0, %s67
    %s87 = sphi 0, %s89
    %s90 = sphi 0, %s87
    %s91 = sphi 0, %s90
    %s107 = sphi 0, %s91
  $region4: #{firenet_forward.4} parent=0 // loop_header_branch
    %12 = sbr.rel (%p10) target = $region8
  $region5: #{firenet_forward.4} parent=0 // loop_body
    %s14 = ssub.s32 %s9, 1
    %s15 = ssub.s32 %s9, 2
    %s16 = sadd.s32 %s9, 1
    %s17 = ssub.s32 %s9, %s16
    %p18 = scmp.eq.s32.totalorder %s17, 0
    %s20 = sadd.s32 %s19, 1
    %s21 = scalar_select %p18, %s19, %s20
    %p24 = pneg %p18
    %p25 = scmp.eq.s32.totalorder %s9, 1
    %p26 = por %p24, %p25
    %p27 = scmp.ne.s32.totalorder %s19, %s22
    %p28 = scmp.eq.s32.totalorder %s9, 0
    %p29 = por %p27, %p28
    %p30 = scmp.ne.s32.totalorder %s19, %s22
    %p31 = scmp.eq.s32.totalorder %s14, 1
    %p32 = por %p30, %p31
    %p33 = scmp.ne.s32.totalorder %s22, %s23
    %p34 = scmp.eq.s32.totalorder %s14, 0
    %p35 = por %p33, %p34
    %p36 = scmp.ne.s32.totalorder %s22, %s23
    %p37 = scmp.eq.s32.totalorder %s15, 1
    %p38 = por %p36, %p37
    %p40 = scmp.ne.s32.totalorder %s23, %s39
    %p41 = scmp.eq.s32.totalorder %s15, 0
    %p42 = por %p40, %p41
    %s44 = sadd.s32 %s43, 1
    %p47 = scmp.eq.s32.totalorder %s9, 1
    %p48 = scmp.ne.s32.totalorder %s43, %s45
    %p49 = scmp.eq.s32.totalorder %s9, 0
    %p50 = por %p48, %p49
    %p51 = scmp.ne.s32.totalorder %s43, %s45
    %p52 = scmp.eq.s32.totalorder %s14, 1
    %p53 = por %p51, %p52
    %p54 = scmp.ne.s32.totalorder %s45, %s46
    %p55 = scmp.eq.s32.totalorder %s14, 0
    %p56 = por %p54, %p55
    %p57 = scmp.ne.s32.totalorder %s45, %s46
    %p58 = scmp.eq.s32.totalorder %s15, 1
    %p59 = por %p57, %p58
    %p61 = scmp.ne.s32.totalorder %s46, %s60
    %p62 = scmp.eq.s32.totalorder %s15, 0
    %p63 = por %p61, %p62
    %s65 = sadd.s32 %s64, 1
    %p68 = scmp.eq.s32.totalorder %s9, 1
    %p69 = scmp.ne.s32.totalorder %s64, %s66
    %p70 = scmp.eq.s32.totalorder %s9, 0
    %p71 = por %p69, %p70
    %p72 = scmp.ne.s32.totalorder %s64, %s66
    %p73 = scmp.eq.s32.totalorder %s14, 1
    %p74 = por %p72, %p73
    %p75 = scmp.ne.s32.totalorder %s66, %s67
    %p76 = scmp.eq.s32.totalorder %s14, 0
    %p77 = por %p75, %p76
    %p78 = scmp.ne.s32.totalorder %s66, %s67
    %p79 = scmp.eq.s32.totalorder %s15, 1
    %p80 = por %p78, %p79
    %p82 = scmp.ne.s32.totalorder %s67, %s81
    %p83 = scmp.eq.s32.totalorder %s15, 0
    %p84 = por %p82, %p83
    %s85 = ssub.s32 %s9, %s16
    %p86 = scmp.eq.s32.totalorder %s85, 0
    %s88 = sadd.s32 %s87, 1
    %s89 = scalar_select %p86, %s87, %s88
    %p92 = pneg %p86
    %p93 = scmp.eq.s32.totalorder %s9, 1
    %p94 = por %p92, %p93
    %p95 = scmp.ne.s32.totalorder %s87, %s90
    %p96 = scmp.eq.s32.totalorder %s9, 0
    %p97 = por %p95, %p96
    %p98 = scmp.ne.s32.totalorder %s87, %s90
    %p99 = scmp.eq.s32.totalorder %s14, 1
    %p100 = por %p98, %p99
    %p101 = scmp.ne.s32.totalorder %s90, %s91
    %p102 = scmp.eq.s32.totalorder %s14, 0
    %p103 = por %p101, %p102
    %p104 = scmp.ne.s32.totalorder %s90, %s91
    %p105 = scmp.eq.s32.totalorder %s15, 1
    %p106 = por %p104, %p105
    %p108 = scmp.ne.s32.totalorder %s91, %s107
    %p109 = scmp.eq.s32.totalorder %s15, 0
    %p110 = por %p108, %p109
    %p111 = scmp.le.s32.totalorder 1, %s9
    %p112 = scmp.lt.s32.totalorder %s9, 3
    %p113 = pnand %p111, %p112
    %p114 = pneg %p113
    // Predicated region
    $region9: #{firenet_forward.4} parent=5 // pred_check
      _
    $region10: #{firenet_forward.4} parent=5 // pred_check_branch
      %116 = sbr.rel (%p113) target = $region12
    $region11: #{firenet_forward.4} parent=5 // pred_region
      %s117 = ssub.s32 %s9, 1
      // Predicated region
      $region13: #{firenet_forward.4} parent=11 // pred_check
        %p118 = pneg %p56
      $region14: #{firenet_forward.4} parent=11 // pred_check_branch
        %120 = sbr.rel (%p118) target = $region16
      $region15: #{firenet_forward.4} parent=11 // pred_region
        _
      $region16: #{firenet_forward.4} parent=11 // pred_fallthru
        _
      // Predicated region
      $region17: #{firenet_forward.4} parent=11 // pred_check
        %p121 = pneg %p77
      $region18: #{firenet_forward.4} parent=11 // pred_check_branch
        %123 = sbr.rel (%p121) target = $region20
      $region19: #{firenet_forward.4} parent=11 // pred_region
        _
      $region20: #{firenet_forward.4} parent=11 // pred_fallthru
        _
    $region12: #{firenet_forward.4} parent=5 // pred_fallthru
      _
    %p124 = scmp.lt.s32.totalorder %s9, 2
    // Predicated region
    $region21: #{firenet_forward.4} parent=5 // pred_check
      %p125 = pneg %p124
    $region22: #{firenet_forward.4} parent=5 // pred_check_branch
      %127 = sbr.rel (%p125) target = $region24
    $region23: #{firenet_forward.4} parent=5 // pred_region
      // Predicated region
      $region25: #{firenet_forward.4} parent=23 // pred_check
        %p128 = pneg %p29
      $region26: #{firenet_forward.4} parent=23 // pred_check_branch
        %130 = sbr.rel (%p128) target = $region28
      $region27: #{firenet_forward.4} parent=23 // pred_region
        %p131 = scmp.lt.s32.totalorder %s9, 1
        %s132 = scalar_select %p131, %s9, 1
        %s133 = smul.addr %s132, 128
        %s134 = smul.addr %s133, 4
        %s135 = scalar_lea.vmem %s0, %s134
      $region28: #{firenet_forward.4} parent=23 // pred_fallthru
        _
    $region24: #{firenet_forward.4} parent=5 // pred_fallthru
      _
    %p136 = scmp.le.s32.totalorder 1, %s9
    %p137 = scmp.lt.s32.totalorder %s9, 3
    %p138 = pnand %p136, %p137
    %p139 = pneg %p138
    // Predicated region
    $region29: #{firenet_forward.4} parent=5 // pred_check
      _
    $region30: #{firenet_forward.4} parent=5 // pred_check_branch
      %141 = sbr.rel (%p138) target = $region32
    $region31: #{firenet_forward.4} parent=5 // pred_region
      %s142 = ssub.s32 %s9, 1
      %p143 = scmp.lt.s32.totalorder %s14, 1
      %s144 = scalar_select %p143, %s14, 1
      %s145 = smul.addr %s144, 128
      %s146 = smul.addr %s145, 4
      %s147 = scalar_lea.vmem %s0, %s146
      %p148 = pneg %p35
      %p149 = pneg %p32
      %p150 = pneg %p56
      %p151 = pneg %p53
      %p152 = pneg %p77
      %p153 = pneg %p74
      %p154 = pneg %p103
      %p155 = pneg %p100
      %p156 = scmp.lt.s32.totalorder %s14, 1
      %s157 = scalar_select %p156, %s14, 1
      %s158 = smul.addr %s157, 16
      %s159 = smul.addr %s158, 4
      %s160 = scalar_lea.vmem %s3, %s159
      %p161 = scmp.lt.s32.totalorder %s14, 1
      %s162 = scalar_select %p161, %s14, 1
      %s163 = smul.addr %s162, 128
      %s164 = smul.addr %s163, 4
      %s165 = scalar_lea.vmem %s0, %s164
      %p166 = scmp.lt.s32.totalorder %s14, 1
      %s167 = scalar_select %p166, %s14, 1
      %s168 = smul.addr %s167, 16
      %s169 = smul.addr %s168, 4
      %s170 = scalar_lea.vmem %s3, %s169
      %v172 = vld [vmem:[%s1] sm:$0xf]
      %v173 = vld [vmem:[%s1 + $0x4] sm:$0xf]
      %v174 = vld [vmem:[%s2] sm:$0xff]
      %v175 = vld [vmem:[%s2 + $0x8] sm:$0xff]
      %v176 = vld [vmem:[%s165] sm:$0xff]
      %v177 = vld [vmem:[%s165 + $0x8] sm:$0xff]
      %v178 = vld [vmem:[%s165 + $0x10] sm:$0xff]
      %v179 = vld [vmem:[%s165 + $0x18] sm:$0xff]
      %v180 = vld [vmem:[%s165 + $0x20] sm:$0xff]
      %v181 = vld [vmem:[%s165 + $0x28] sm:$0xff]
      %v182 = vld [vmem:[%s165 + $0x30] sm:$0xff]
      %v183 = vld [vmem:[%s165 + $0x38] sm:$0xff]
      %v184 = vld [vmem:[%s165 + $0x40] sm:$0xff]
      %v185 = vld [vmem:[%s165 + $0x48] sm:$0xff]
      %v186 = vld [vmem:[%s165 + $0x50] sm:$0xff]
      %v187 = vld [vmem:[%s165 + $0x58] sm:$0xff]
      %v188 = vld [vmem:[%s165 + $0x60] sm:$0x33]
      %v189 = vld [vmem:[%s165 + $0x68] sm:$0x33]
      %v190 = vld [vmem:[%s165 + $0x70] sm:$0x33]
      %v191 = vld [vmem:[%s165 + $0x78] sm:$0x33]
      %193 = vset.pattern.permute.xlu0 0
      %194 = vperm.xlu0 %193, %v174
      %v195 = vpop.permute.xlu0 %194
      %198 = vset.pattern.permute.xlu0 0
      %199 = vperm.xlu0 %198, %v175
      %v200 = vpop.permute.xlu0 %199
      %v204 = vunpack.c.l.b16 %v172
      %v205 = vunpack.c.l.b16 %v173
      %v206 = vpack.c.b16 %v205, %v204
      %v223 = vunpack.c.l.b16 %v176
      %v224 = vunpack.c.h.b16 %v176
      %v225 = vunpack.c.l.b16 %v177
      %v226 = vunpack.c.h.b16 %v177
      %v227 = vunpack.c.l.b16 %v178
      %v228 = vunpack.c.h.b16 %v178
      %v229 = vunpack.c.l.b16 %v179
      %v230 = vunpack.c.h.b16 %v179
      %v231 = vunpack.c.l.b16 %v180
      %v232 = vunpack.c.h.b16 %v180
      %v233 = vunpack.c.l.b16 %v181
      %v234 = vunpack.c.h.b16 %v181
      %v235 = vunpack.c.l.b16 %v182
      %v236 = vunpack.c.h.b16 %v182
      %v237 = vunpack.c.l.b16 %v183
      %v238 = vunpack.c.h.b16 %v183
      %v239 = vunpack.c.l.b16 %v184
      %v240 = vunpack.c.h.b16 %v184
      %v241 = vunpack.c.l.b16 %v185
      %v242 = vunpack.c.h.b16 %v185
      %v243 = vunpack.c.l.b16 %v186
      %v244 = vunpack.c.h.b16 %v186
      %v245 = vunpack.c.l.b16 %v187
      %v246 = vunpack.c.h.b16 %v187
      %v247 = vunpack.c.l.b16 %v188
      %v248 = vunpack.c.h.b16 %v188
      %v249 = vunpack.c.l.b16 %v189
      %v250 = vunpack.c.h.b16 %v189
      %v251 = vunpack.c.l.b16 %v190
      %v252 = vunpack.c.h.b16 %v190
      %v253 = vunpack.c.l.b16 %v191
      %v254 = vunpack.c.h.b16 %v191
      %v255 = vpack.c.b16 %v231, %v223
      %v256 = vpack.c.b16 %v232, %v224
      %v257 = vpack.c.b16 %v233, %v225
      %v258 = vpack.c.b16 %v234, %v226
      %v259 = vpack.c.b16 %v235, %v227
      %v260 = vpack.c.b16 %v236, %v228
      %v261 = vpack.c.b16 %v237, %v229
      %v262 = vpack.c.b16 %v238, %v230
      %v263 = vpack.c.b16 %v247, %v239
      %v264 = vpack.c.b16 %v248, %v240
      %v265 = vpack.c.b16 %v249, %v241
      %v266 = vpack.c.b16 %v250, %v242
      %v267 = vpack.c.b16 %v251, %v243
      %v268 = vpack.c.b16 %v252, %v244
      %v269 = vpack.c.b16 %v253, %v245
      %v270 = vpack.c.b16 %v254, %v246
      %vm279 = vcmask 220160
      %v281 = vsel %vm279, %v206, 0
      %vm283 = vcmask 1044480
      %vm284 = vcmask 1045504
      %v285 = vsel %vm283, 4294967295, 65535
      %v286 = vsel %vm284, %v285, 0
      %v288 = vand.u32 %v263, %v286
      %v291 = vand.u32 %v264, %v286
      %v294 = vand.u32 %v265, %v286
      %v297 = vand.u32 %v266, %v286
      %v300 = vand.u32 %v267, %v286
      %v303 = vand.u32 %v268, %v286
      %v306 = vand.u32 %v269, %v286
      %v309 = vand.u32 %v270, %v286
      %311 = vmatprep.subr.bf16.mxu0 0
      %312 = vmatpush1.bf16.msra.mxu0 0
      %313 = vmatprep.subr.bf16.mxu0 0
      %314 = vmatpush1.bf16.msra.mxu0 0
      %315 = vmatprep.subr.bf16.mxu0 0
      %316 = vmatpush1.bf16.msra.mxu0 0
      %317 = vmatprep.subr.bf16.mxu0 0
      %318 = vmatpush1.bf16.msra.mxu0 0
      %319 = vmatprep.subr.bf16.mxu0 0
      %320 = vmatpush1.bf16.msra.mxu0 0
      %321 = vmatprep.subr.bf16.mxu0 0
      %322 = vmatpush1.bf16.msra.mxu0 0
      %323 = vmatprep.subr.bf16.mxu0 %v291
      %324 = vmatpush1.bf16.msra.mxu0 %v288
      %325 = vmatprep.subr.bf16.mxu0 %v256
      %326 = vmatpush1.bf16.msra.mxu0 %v255
      %327 = vmatprep.subr.bf16.mxu0 0
      %328 = vmatpush2.bf16.msra.mxu0 0
      %329 = vmatprep.subr.bf16.mxu0 0
      %330 = vmatpush2.bf16.msra.mxu0 0
      %331 = vmatprep.subr.bf16.mxu0 0
      %332 = vmatpush2.bf16.msra.mxu0 0
      %333 = vmatprep.subr.bf16.mxu0 0
      %334 = vmatpush2.bf16.msra.mxu0 0
      %335 = vmatprep.subr.bf16.mxu0 0
      %336 = vmatpush2.bf16.msra.mxu0 0
      %337 = vmatprep.subr.bf16.mxu0 0
      %338 = vmatpush2.bf16.msra.mxu0 0
      %339 = vmatprep.subr.bf16.mxu0 0
      %340 = vmatpush2.bf16.msra.mxu0 0
      %341 = vmatprep.subr.bf16.mxu0 0
      %342 = vmatpush2.bf16.msra.mxu0 0
      %343 = vmatprep.mubr.bf16.mxu0 0
      %344 = vmatmul.mubr.bf16.gmra.mxu0 %v281
      %v345 = vpop.f32.mrf.mxu0
      %v346 = vadd.f32 %v195, %v345
      %v347 = vpop.f32.mrf.mxu0
      %v348 = vadd.f32 %v195, %v347
      %v349 = vpop.f32.mrf.mxu0
      %v350 = vadd.f32 %v200, %v349
      %v351 = vpop.f32.mrf.mxu0
      %v352 = vadd.f32 %v200, %v351
      %353 = vdwg.mxu0
      %354 = vmatprep.subr.bf16.mxu0 0
      %355 = vmatpush1.bf16.msra.mxu0 0
      %356 = vmatprep.subr.bf16.mxu0 0
      %357 = vmatpush1.bf16.msra.mxu0 0
      %358 = vmatprep.subr.bf16.mxu0 0
      %359 = vmatpush1.bf16.msra.mxu0 0
      %360 = vmatprep.subr.bf16.mxu0 0
      %361 = vmatpush1.bf16.msra.mxu0 0
      %362 = vmatprep.subr.bf16.mxu0 0
      %363 = vmatpush1.bf16.msra.mxu0 0
      %364 = vmatprep.subr.bf16.mxu0 0
      %365 = vmatpush1.bf16.msra.mxu0 0
      %366 = vmatprep.subr.bf16.mxu0 %v297
      %367 = vmatpush1.bf16.msra.mxu0 %v294
      %368 = vmatprep.subr.bf16.mxu0 %v258
      %369 = vmatpush1.bf16.msra.mxu0 %v257
      %370 = vmatprep.subr.bf16.mxu0 0
      %371 = vmatpush2.bf16.msra.mxu0 0
      %372 = vmatprep.subr.bf16.mxu0 0
      %373 = vmatpush2.bf16.msra.mxu0 0
      %374 = vmatprep.subr.bf16.mxu0 0
      %375 = vmatpush2.bf16.msra.mxu0 0
      %376 = vmatprep.subr.bf16.mxu0 0
      %377 = vmatpush2.bf16.msra.mxu0 0
      %378 = vmatprep.subr.bf16.mxu0 0
      %379 = vmatpush2.bf16.msra.mxu0 0
      %380 = vmatprep.subr.bf16.mxu0 0
      %381 = vmatpush2.bf16.msra.mxu0 0
      %382 = vmatprep.subr.bf16.mxu0 0
      %383 = vmatpush2.bf16.msra.mxu0 0
      %384 = vmatprep.subr.bf16.mxu0 0
      %385 = vmatpush2.bf16.msra.mxu0 0
      %386 = vmatprep.mubr.bf16.mxu0 0
      %387 = vmatmul.mubr.bf16.gmra.mxu0 %v281
      %v388 = vpop.f32.mrf.mxu0
      %v389 = vadd.f32 %v195, %v388
      %v390 = vpop.f32.mrf.mxu0
      %v391 = vadd.f32 %v195, %v390
      %v392 = vpop.f32.mrf.mxu0
      %v393 = vadd.f32 %v200, %v392
      %v394 = vpop.f32.mrf.mxu0
      %v395 = vadd.f32 %v200, %v394
      %396 = vdwg.mxu0
      %397 = vmatprep.subr.bf16.mxu0 0
      %398 = vmatpush1.bf16.msra.mxu0 0
      %399 = vmatprep.subr.bf16.mxu0 0
      %400 = vmatpush1.bf16.msra.mxu0 0
      %401 = vmatprep.subr.bf16.mxu0 0
      %402 = vmatpush1.bf16.msra.mxu0 0
      %403 = vmatprep.subr.bf16.mxu0 0
      %404 = vmatpush1.bf16.msra.mxu0 0
      %405 = vmatprep.subr.bf16.mxu0 0
      %406 = vmatpush1.bf16.msra.mxu0 0
      %407 = vmatprep.subr.bf16.mxu0 0
      %408 = vmatpush1.bf16.msra.mxu0 0
      %409 = vmatprep.subr.bf16.mxu0 %v303
      %410 = vmatpush1.bf16.msra.mxu0 %v300
      %411 = vmatprep.subr.bf16.mxu0 %v260
      %412 = vmatpush1.bf16.msra.mxu0 %v259
      %413 = vmatprep.subr.bf16.mxu0 0
      %414 = vmatpush2.bf16.msra.mxu0 0
      %415 = vmatprep.subr.bf16.mxu0 0
      %416 = vmatpush2.bf16.msra.mxu0 0
      %417 = vmatprep.subr.bf16.mxu0 0
      %418 = vmatpush2.bf16.msra.mxu0 0
      %419 = vmatprep.subr.bf16.mxu0 0
      %420 = vmatpush2.bf16.msra.mxu0 0
      %421 = vmatprep.subr.bf16.mxu0 0
      %422 = vmatpush2.bf16.msra.mxu0 0
      %423 = vmatprep.subr.bf16.mxu0 0
      %424 = vmatpush2.bf16.msra.mxu0 0
      %425 = vmatprep.subr.bf16.mxu0 0
      %426 = vmatpush2.bf16.msra.mxu0 0
      %427 = vmatprep.subr.bf16.mxu0 0
      %428 = vmatpush2.bf16.msra.mxu0 0
      %429 = vmatprep.mubr.bf16.mxu0 0
      %430 = vmatmul.mubr.bf16.gmra.mxu0 %v281
      %v431 = vpop.f32.mrf.mxu0
      %v432 = vadd.f32 %v195, %v431
      %v433 = vpop.f32.mrf.mxu0
      %v434 = vadd.f32 %v195, %v433
      %v435 = vpop.f32.mrf.mxu0
      %v436 = vadd.f32 %v200, %v435
      %v437 = vpop.f32.mrf.mxu0
      %v438 = vadd.f32 %v200, %v437
      %439 = vdwg.mxu0
      %440 = vmatprep.subr.bf16.mxu0 0
      %441 = vmatpush1.bf16.msra.mxu0 0
      %442 = vmatprep.subr.bf16.mxu0 0
      %443 = vmatpush1.bf16.msra.mxu0 0
      %444 = vmatprep.subr.bf16.mxu0 0
      %445 = vmatpush1.bf16.msra.mxu0 0
      %446 = vmatprep.subr.bf16.mxu0 0
      %447 = vmatpush1.bf16.msra.mxu0 0
      %448 = vmatprep.subr.bf16.mxu0 0
      %449 = vmatpush1.bf16.msra.mxu0 0
      %450 = vmatprep.subr.bf16.mxu0 0
      %451 = vmatpush1.bf16.msra.mxu0 0
      %452 = vmatprep.subr.bf16.mxu0 %v309
      %453 = vmatpush1.bf16.msra.mxu0 %v306
      %454 = vmatprep.subr.bf16.mxu0 %v262
      %455 = vmatpush1.bf16.msra.mxu0 %v261
      %456 = vmatprep.subr.bf16.mxu0 0
      %457 = vmatpush2.bf16.msra.mxu0 0
      %458 = vmatprep.subr.bf16.mxu0 0
      %459 = vmatpush2.bf16.msra.mxu0 0
      %460 = vmatprep.subr.bf16.mxu0 0
      %461 = vmatpush2.bf16.msra.mxu0 0
      %462 = vmatprep.subr.bf16.mxu0 0
      %463 = vmatpush2.bf16.msra.mxu0 0
      %464 = vmatprep.subr.bf16.mxu0 0
      %465 = vmatpush2.bf16.msra.mxu0 0
      %466 = vmatprep.subr.bf16.mxu0 0
      %467 = vmatpush2.bf16.msra.mxu0 0
      %468 = vmatprep.subr.bf16.mxu0 0
      %469 = vmatpush2.bf16.msra.mxu0 0
      %470 = vmatprep.subr.bf16.mxu0 0
      %471 = vmatpush2.bf16.msra.mxu0 0
      %472 = vmatprep.mubr.bf16.mxu0 0
      %473 = vmatmul.mubr.bf16.gmra.mxu0 %v281
      %v474 = vpop.f32.mrf.mxu0
      %v475 = vadd.f32 %v195, %v474
      %v476 = vpop.f32.mrf.mxu0
      %v477 = vadd.f32 %v195, %v476
      %v478 = vpop.f32.mrf.mxu0
      %v479 = vadd.f32 %v200, %v478
      %v480 = vpop.f32.mrf.mxu0
      %v481 = vadd.f32 %v200, %v480
      %482 = vdwg.mxu0
      %v483 = vmax.f32 %v346, 0.0
      %v484 = vmax.f32 %v348, 0.0
      %v485 = vmax.f32 %v389, 0.0
      %v486 = vmax.f32 %v391, 0.0
      %v487 = vmax.f32 %v432, 0.0
      %v488 = vmax.f32 %v434, 0.0
      %v489 = vmax.f32 %v475, 0.0
      %v490 = vmax.f32 %v477, 0.0
      %v491 = vmax.f32 %v350, 0.0
      %v492 = vmax.f32 %v352, 0.0
      %v493 = vmax.f32 %v393, 0.0
      %v494 = vmax.f32 %v395, 0.0
      %v495 = vmax.f32 %v436, 0.0
      %v496 = vmax.f32 %v438, 0.0
      %v497 = vmax.f32 %v479, 0.0
      %v498 = vmax.f32 %v481, 0.0
      %v499 = vadd.f32 %v483, 0.0
      %v500 = vadd.f32 %v484, 0.0
      %v501 = vadd.f32 %v485, 0.0
      %v502 = vadd.f32 %v486, 0.0
      %v503 = vadd.f32 %v487, 0.0
      %v504 = vadd.f32 %v488, 0.0
      %v505 = vadd.f32 %v489, 0.0
      %v506 = vadd.f32 %v490, 0.0
      %v507 = vadd.f32 %v491, 0.0
      %v508 = vadd.f32 %v492, 0.0
      %v509 = vadd.f32 %v493, 0.0
      %v510 = vadd.f32 %v494, 0.0
      %v511 = vadd.f32 %v495, 0.0
      %v512 = vadd.f32 %v496, 0.0
      %v513 = vadd.f32 %v497, 0.0
      %v514 = vadd.f32 %v498, 0.0
      %s515 = scalar_lea.vmem %s165, 128
      %v516 = vld [vmem:[%s515] sm:$0xff]
      %v517 = vld [vmem:[%s515 + $0x8] sm:$0xff]
      %v518 = vld [vmem:[%s515 + $0x10] sm:$0xff]
      %v519 = vld [vmem:[%s515 + $0x18] sm:$0xff]
      %v520 = vld [vmem:[%s515 + $0x20] sm:$0xff]
      %v521 = vld [vmem:[%s515 + $0x28] sm:$0xff]
      %v522 = vld [vmem:[%s515 + $0x30] sm:$0xff]
      %v523 = vld [vmem:[%s515 + $0x38] sm:$0xff]
      %v524 = vld [vmem:[%s515 + $0x40] sm:$0xff]
      %v525 = vld [vmem:[%s515 + $0x48] sm:$0xff]
      %v526 = vld [vmem:[%s515 + $0x50] sm:$0xff]
      %v527 = vld [vmem:[%s515 + $0x58] sm:$0xff]
      %v528 = vld [vmem:[%s515 + $0x60] sm:$0x33]
      %v529 = vld [vmem:[%s515 + $0x68] sm:$0x33]
      %v530 = vld [vmem:[%s515 + $0x70] sm:$0x33]
      %v531 = vld [vmem:[%s515 + $0x78] sm:$0x33]
      %v548 = vunpack.c.l.b16 %v516
      %v549 = vunpack.c.h.b16 %v516
      %v550 = vunpack.c.l.b16 %v517
      %v551 = vunpack.c.h.b16 %v517
      %v552 = vunpack.c.l.b16 %v518
      %v553 = vunpack.c.h.b16 %v518
      %v554 = vunpack.c.l.b16 %v519
      %v555 = vunpack.c.h.b16 %v519
      %v556 = vunpack.c.l.b16 %v520
      %v557 = vunpack.c.h.b16 %v520
      %v558 = vunpack.c.l.b16 %v521
      %v559 = vunpack.c.h.b16 %v521
      %v560 = vunpack.c.l.b16 %v522
      %v561 = vunpack.c.h.b16 %v522
      %v562 = vunpack.c.l.b16 %v523
      %v563 = vunpack.c.h.b16 %v523
      %v564 = vunpack.c.l.b16 %v524
      %v565 = vunpack.c.h.b16 %v524
      %v566 = vunpack.c.l.b16 %v525
      %v567 = vunpack.c.h.b16 %v525
      %v568 = vunpack.c.l.b16 %v526
      %v569 = vunpack.c.h.b16 %v526
      %v570 = vunpack.c.l.b16 %v527
      %v571 = vunpack.c.h.b16 %v527
      %v572 = vunpack.c.l.b16 %v528
      %v573 = vunpack.c.h.b16 %v528
      %v574 = vunpack.c.l.b16 %v529
      %v575 = vunpack.c.h.b16 %v529
      %v576 = vunpack.c.l.b16 %v530
      %v577 = vunpack.c.h.b16 %v530
      %v578 = vunpack.c.l.b16 %v531
      %v579 = vunpack.c.h.b16 %v531
      %v580 = vpack.c.b16 %v556, %v548
      %v581 = vpack.c.b16 %v557, %v549
      %v582 = vpack.c.b16 %v558, %v550
      %v583 = vpack.c.b16 %v559, %v551
      %v584 = vpack.c.b16 %v560, %v552
      %v585 = vpack.c.b16 %v561, %v553
      %v586 = vpack.c.b16 %v562, %v554
      %v587 = vpack.c.b16 %v563, %v555
      %v588 = vpack.c.b16 %v572, %v564
      %v589 = vpack.c.b16 %v573, %v565
      %v590 = vpack.c.b16 %v574, %v566
      %v591 = vpack.c.b16 %v575, %v567
      %v592 = vpack.c.b16 %v576, %v568
      %v593 = vpack.c.b16 %v577, %v569
      %v594 = vpack.c.b16 %v578, %v570
      %v595 = vpack.c.b16 %v579, %v571
      %v605 = vand.u32 %v588, %v286
      %v608 = vand.u32 %v589, %v286
      %v611 = vand.u32 %v590, %v286
      %v614 = vand.u32 %v591, %v286
      %v617 = vand.u32 %v592, %v286
      %v620 = vand.u32 %v593, %v286
      %v623 = vand.u32 %v594, %v286
      %v626 = vand.u32 %v595, %v286
      %628 = vmatprep.subr.bf16.mxu0 0
      %629 = vmatpush1.bf16.msra.mxu0 0
      %630 = vmatprep.subr.bf16.mxu0 0
      %631 = vmatpush1.bf16.msra.mxu0 0
      %632 = vmatprep.subr.bf16.mxu0 0
      %633 = vmatpush1.bf16.msra.mxu0 0
      %634 = vmatprep.subr.bf16.mxu0 0
      %635 = vmatpush1.bf16.msra.mxu0 0
      %636 = vmatprep.subr.bf16.mxu0 0
      %637 = vmatpush1.bf16.msra.mxu0 0
      %638 = vmatprep.subr.bf16.mxu0 0
      %639 = vmatpush1.bf16.msra.mxu0 0
      %640 = vmatprep.subr.bf16.mxu0 %v608
      %641 = vmatpush1.bf16.msra.mxu0 %v605
      %642 = vmatprep.subr.bf16.mxu0 %v581
      %643 = vmatpush1.bf16.msra.mxu0 %v580
      %644 = vmatprep.subr.bf16.mxu0 0
      %645 = vmatpush2.bf16.msra.mxu0 0
      %646 = vmatprep.subr.bf16.mxu0 0
      %647 = vmatpush2.bf16.msra.mxu0 0
      %648 = vmatprep.subr.bf16.mxu0 0
      %649 = vmatpush2.bf16.msra.mxu0 0
      %650 = vmatprep.subr.bf16.mxu0 0
      %651 = vmatpush2.bf16.msra.mxu0 0
      %652 = vmatprep.subr.bf16.mxu0 0
      %653 = vmatpush2.bf16.msra.mxu0 0
      %654 = vmatprep.subr.bf16.mxu0 0
      %655 = vmatpush2.bf16.msra.mxu0 0
      %656 = vmatprep.subr.bf16.mxu0 0
      %657 = vmatpush2.bf16.msra.mxu0 0
      %658 = vmatprep.subr.bf16.mxu0 0
      %659 = vmatpush2.bf16.msra.mxu0 0
      %660 = vmatprep.mubr.bf16.mxu0 0
      %661 = vmatmul.mubr.bf16.gmra.mxu0 %v281
      %v662 = vpop.f32.mrf.mxu0
      %v663 = vadd.f32 %v195, %v662
      %v664 = vpop.f32.mrf.mxu0
      %v665 = vadd.f32 %v195, %v664
      %v666 = vpop.f32.mrf.mxu0
      %v667 = vadd.f32 %v200, %v666
      %v668 = vpop.f32.mrf.mxu0
      %v669 = vadd.f32 %v200, %v668
      %670 = vdwg.mxu0
      %671 = vmatprep.subr.bf16.mxu0 0
      %672 = vmatpush1.bf16.msra.mxu0 0
      %673 = vmatprep.subr.bf16.mxu0 0
      %674 = vmatpush1.bf16.msra.mxu0 0
      %675 = vmatprep.subr.bf16.mxu0 0
      %676 = vmatpush1.bf16.msra.mxu0 0
      %677 = vmatprep.subr.bf16.mxu0 0
      %678 = vmatpush1.bf16.msra.mxu0 0
      %679 = vmatprep.subr.bf16.mxu0 0
      %680 = vmatpush1.bf16.msra.mxu0 0
      %681 = vmatprep.subr.bf16.mxu0 0
      %682 = vmatpush1.bf16.msra.mxu0 0
      %683 = vmatprep.subr.bf16.mxu0 %v614
      %684 = vmatpush1.bf16.msra.mxu0 %v611
      %685 = vmatprep.subr.bf16.mxu0 %v583
      %686 = vmatpush1.bf16.msra.mxu0 %v582
      %687 = vmatprep.subr.bf16.mxu0 0
      %688 = vmatpush2.bf16.msra.mxu0 0
      %689 = vmatprep.subr.bf16.mxu0 0
      %690 = vmatpush2.bf16.msra.mxu0 0
      %691 = vmatprep.subr.bf16.mxu0 0
      %692 = vmatpush2.bf16.msra.mxu0 0
      %693 = vmatprep.subr.bf16.mxu0 0
      %694 = vmatpush2.bf16.msra.mxu0 0
      %695 = vmatprep.subr.bf16.mxu0 0
      %696 = vmatpush2.bf16.msra.mxu0 0
      %697 = vmatprep.subr.bf16.mxu0 0
      %698 = vmatpush2.bf16.msra.mxu0 0
      %699 = vmatprep.subr.bf16.mxu0 0
      %700 = vmatpush2.bf16.msra.mxu0 0
      %701 = vmatprep.subr.bf16.mxu0 0
      %702 = vmatpush2.bf16.msra.mxu0 0
      %703 = vmatprep.mubr.bf16.mxu0 0
      %704 = vmatmul.mubr.bf16.gmra.mxu0 %v281
      %v705 = vpop.f32.mrf.mxu0
      %v706 = vadd.f32 %v195, %v705
      %v707 = vpop.f32.mrf.mxu0
      %v708 = vadd.f32 %v195, %v707
      %v709 = vpop.f32.mrf.mxu0
      %v710 = vadd.f32 %v200, %v709
      %v711 = vpop.f32.mrf.mxu0
      %v712 = vadd.f32 %v200, %v711
      %713 = vdwg.mxu0
      %714 = vmatprep.subr.bf16.mxu0 0
      %715 = vmatpush1.bf16.msra.mxu0 0
      %716 = vmatprep.subr.bf16.mxu0 0
      %717 = vmatpush1.bf16.msra.mxu0 0
      %718 = vmatprep.subr.bf16.mxu0 0
      %719 = vmatpush1.bf16.msra.mxu0 0
      %720 = vmatprep.subr.bf16.mxu0 0
      %721 = vmatpush1.bf16.msra.mxu0 0
      %722 = vmatprep.subr.bf16.mxu0 0
      %723 = vmatpush1.bf16.msra.mxu0 0
      %724 = vmatprep.subr.bf16.mxu0 0
      %725 = vmatpush1.bf16.msra.mxu0 0
      %726 = vmatprep.subr.bf16.mxu0 %v620
      %727 = vmatpush1.bf16.msra.mxu0 %v617
      %728 = vmatprep.subr.bf16.mxu0 %v585
      %729 = vmatpush1.bf16.msra.mxu0 %v584
      %730 = vmatprep.subr.bf16.mxu0 0
      %731 = vmatpush2.bf16.msra.mxu0 0
      %732 = vmatprep.subr.bf16.mxu0 0
      %733 = vmatpush2.bf16.msra.mxu0 0
      %734 = vmatprep.subr.bf16.mxu0 0
      %735 = vmatpush2.bf16.msra.mxu0 0
      %736 = vmatprep.subr.bf16.mxu0 0
      %737 = vmatpush2.bf16.msra.mxu0 0
      %738 = vmatprep.subr.bf16.mxu0 0
      %739 = vmatpush2.bf16.msra.mxu0 0
      %740 = vmatprep.subr.bf16.mxu0 0
      %741 = vmatpush2.bf16.msra.mxu0 0
      %742 = vmatprep.subr.bf16.mxu0 0
      %743 = vmatpush2.bf16.msra.mxu0 0
      %744 = vmatprep.subr.bf16.mxu0 0
      %745 = vmatpush2.bf16.msra.mxu0 0
      %746 = vmatprep.mubr.bf16.mxu0 0
      %747 = vmatmul.mubr.bf16.gmra.mxu0 %v281
      %v748 = vpop.f32.mrf.mxu0
      %v749 = vadd.f32 %v195, %v748
      %v750 = vpop.f32.mrf.mxu0
      %v751 = vadd.f32 %v195, %v750
      %v752 = vpop.f32.mrf.mxu0
      %v753 = vadd.f32 %v200, %v752
      %v754 = vpop.f32.mrf.mxu0
      %v755 = vadd.f32 %v200, %v754
      %756 = vdwg.mxu0
      %757 = vmatprep.subr.bf16.mxu0 0
      %758 = vmatpush1.bf16.msra.mxu0 0
      %759 = vmatprep.subr.bf16.mxu0 0
      %760 = vmatpush1.bf16.msra.mxu0 0
      %761 = vmatprep.subr.bf16.mxu0 0
      %762 = vmatpush1.bf16.msra.mxu0 0
      %763 = vmatprep.subr.bf16.mxu0 0
      %764 = vmatpush1.bf16.msra.mxu0 0
      %765 = vmatprep.subr.bf16.mxu0 0
      %766 = vmatpush1.bf16.msra.mxu0 0
      %767 = vmatprep.subr.bf16.mxu0 0
      %768 = vmatpush1.bf16.msra.mxu0 0
      %769 = vmatprep.subr.bf16.mxu0 %v626
      %770 = vmatpush1.bf16.msra.mxu0 %v623
      %771 = vmatprep.subr.bf16.mxu0 %v587
      %772 = vmatpush1.bf16.msra.mxu0 %v586
      %773 = vmatprep.subr.bf16.mxu0 0
      %774 = vmatpush2.bf16.msra.mxu0 0
      %775 = vmatprep.subr.bf16.mxu0 0
      %776 = vmatpush2.bf16.msra.mxu0 0
      %777 = vmatprep.subr.bf16.mxu0 0
      %778 = vmatpush2.bf16.msra.mxu0 0
      %779 = vmatprep.subr.bf16.mxu0 0
      %780 = vmatpush2.bf16.msra.mxu0 0
      %781 = vmatprep.subr.bf16.mxu0 0
      %782 = vmatpush2.bf16.msra.mxu0 0
      %783 = vmatprep.subr.bf16.mxu0 0
      %784 = vmatpush2.bf16.msra.mxu0 0
      %785 = vmatprep.subr.bf16.mxu0 0
      %786 = vmatpush2.bf16.msra.mxu0 0
      %787 = vmatprep.subr.bf16.mxu0 0
      %788 = vmatpush2.bf16.msra.mxu0 0
      %789 = vmatprep.mubr.bf16.mxu0 0
      %790 = vmatmul.mubr.bf16.gmra.mxu0 %v281
      %v791 = vpop.f32.mrf.mxu0
      %v792 = vadd.f32 %v195, %v791
      %v793 = vpop.f32.mrf.mxu0
      %v794 = vadd.f32 %v195, %v793
      %v795 = vpop.f32.mrf.mxu0
      %v796 = vadd.f32 %v200, %v795
      %v797 = vpop.f32.mrf.mxu0
      %v798 = vadd.f32 %v200, %v797
      %799 = vdwg.mxu0
      %v800 = vmax.f32 %v663, 0.0
      %v801 = vmax.f32 %v665, 0.0
      %v802 = vmax.f32 %v706, 0.0
      %v803 = vmax.f32 %v708, 0.0
      %v804 = vmax.f32 %v749, 0.0
      %v805 = vmax.f32 %v751, 0.0
      %v806 = vmax.f32 %v792, 0.0
      %v807 = vmax.f32 %v794, 0.0
      %v808 = vmax.f32 %v667, 0.0
      %v809 = vmax.f32 %v669, 0.0
      %v810 = vmax.f32 %v710, 0.0
      %v811 = vmax.f32 %v712, 0.0
      %v812 = vmax.f32 %v753, 0.0
      %v813 = vmax.f32 %v755, 0.0
      %v814 = vmax.f32 %v796, 0.0
      %v815 = vmax.f32 %v798, 0.0
      %v816 = vadd.f32 %v499, %v800
      %v817 = vadd.f32 %v500, %v801
      %v818 = vadd.f32 %v501, %v802
      %v819 = vadd.f32 %v502, %v803
      %v820 = vadd.f32 %v503, %v804
      %v821 = vadd.f32 %v504, %v805
      %v822 = vadd.f32 %v505, %v806
      %v823 = vadd.f32 %v506, %v807
      %v824 = vadd.f32 %v507, %v808
      %v825 = vadd.f32 %v508, %v809
      %v826 = vadd.f32 %v509, %v810
      %v827 = vadd.f32 %v510, %v811
      %v828 = vadd.f32 %v511, %v812
      %v829 = vadd.f32 %v512, %v813
      %v830 = vadd.f32 %v513, %v814
      %v831 = vadd.f32 %v514, %v815
      %s832 = scalar_lea.vmem %s165, 256
      %v833 = vld [vmem:[%s832] sm:$0xff]
      %v834 = vld [vmem:[%s832 + $0x8] sm:$0xff]
      %v835 = vld [vmem:[%s832 + $0x10] sm:$0xff]
      %v836 = vld [vmem:[%s832 + $0x18] sm:$0xff]
      %v837 = vld [vmem:[%s832 + $0x20] sm:$0xff]
      %v838 = vld [vmem:[%s832 + $0x28] sm:$0xff]
      %v839 = vld [vmem:[%s832 + $0x30] sm:$0xff]
      %v840 = vld [vmem:[%s832 + $0x38] sm:$0xff]
      %v841 = vld [vmem:[%s832 + $0x40] sm:$0xff]
      %v842 = vld [vmem:[%s832 + $0x48] sm:$0xff]
      %v843 = vld [vmem:[%s832 + $0x50] sm:$0xff]
      %v844 = vld [vmem:[%s832 + $0x58] sm:$0xff]
      %v845 = vld [vmem:[%s832 + $0x60] sm:$0x33]
      %v846 = vld [vmem:[%s832 + $0x68] sm:$0x33]
      %v847 = vld [vmem:[%s832 + $0x70] sm:$0x33]
      %v848 = vld [vmem:[%s832 + $0x78] sm:$0x33]
      %v865 = vunpack.c.l.b16 %v833
      %v866 = vunpack.c.h.b16 %v833
      %v867 = vunpack.c.l.b16 %v834
      %v868 = vunpack.c.h.b16 %v834
      %v869 = vunpack.c.l.b16 %v835
      %v870 = vunpack.c.h.b16 %v835
      %v871 = vunpack.c.l.b16 %v836
      %v872 = vunpack.c.h.b16 %v836
      %v873 = vunpack.c.l.b16 %v837
      %v874 = vunpack.c.h.b16 %v837
      %v875 = vunpack.c.l.b16 %v838
      %v876 = vunpack.c.h.b16 %v838
      %v877 = vunpack.c.l.b16 %v839
      %v878 = vunpack.c.h.b16 %v839
      %v879 = vunpack.c.l.b16 %v840
      %v880 = vunpack.c.h.b16 %v840
      %v881 = vunpack.c.l.b16 %v841
      %v882 = vunpack.c.h.b16 %v841
      %v883 = vunpack.c.l.b16 %v842
      %v884 = vunpack.c.h.b16 %v842
      %v885 = vunpack.c.l.b16 %v843
      %v886 = vunpack.c.h.b16 %v843
      %v887 = vunpack.c.l.b16 %v844
      %v888 = vunpack.c.h.b16 %v844
      %v889 = vunpack.c.l.b16 %v845
      %v890 = vunpack.c.h.b16 %v845
      %v891 = vunpack.c.l.b16 %v846
      %v892 = vunpack.c.h.b16 %v846
      %v893 = vunpack.c.l.b16 %v847
      %v894 = vunpack.c.h.b16 %v847
      %v895 = vunpack.c.l.b16 %v848
      %v896 = vunpack.c.h.b16 %v848
      %v897 = vpack.c.b16 %v873, %v865
      %v898 = vpack.c.b16 %v874, %v866
      %v899 = vpack.c.b16 %v875, %v867
      %v900 = vpack.c.b16 %v876, %v868
      %v901 = vpack.c.b16 %v877, %v869
      %v902 = vpack.c.b16 %v878, %v870
      %v903 = vpack.c.b16 %v879, %v871
      %v904 = vpack.c.b16 %v880, %v872
      %v905 = vpack.c.b16 %v889, %v881
      %v906 = vpack.c.b16 %v890, %v882
      %v907 = vpack.c.b16 %v891, %v883
      %v908 = vpack.c.b16 %v892, %v884
      %v909 = vpack.c.b16 %v893, %v885
      %v910 = vpack.c.b16 %v894, %v886
      %v911 = vpack.c.b16 %v895, %v887
      %v912 = vpack.c.b16 %v896, %v888
      %v922 = vand.u32 %v905, %v286
      %v925 = vand.u32 %v906, %v286
      %v928 = vand.u32 %v907, %v286
      %v931 = vand.u32 %v908, %v286
      %v934 = vand.u32 %v909, %v286
      %v937 = vand.u32 %v910, %v286
      %v940 = vand.u32 %v911, %v286
      %v943 = vand.u32 %v912, %v286
      %945 = vmatprep.subr.bf16.mxu0 0
      %946 = vmatpush1.bf16.msra.mxu0 0
      %947 = vmatprep.subr.bf16.mxu0 0
      %948 = vmatpush1.bf16.msra.mxu0 0
      %949 = vmatprep.subr.bf16.mxu0 0
      %950 = vmatpush1.bf16.msra.mxu0 0
      %951 = vmatprep.subr.bf16.mxu0 0
      %952 = vmatpush1.bf16.msra.mxu0 0
      %953 = vmatprep.subr.bf16.mxu0 0
      %954 = vmatpush1.bf16.msra.mxu0 0
      %955 = vmatprep.subr.bf16.mxu0 0
      %956 = vmatpush1.bf16.msra.mxu0 0
      %957 = vmatprep.subr.bf16.mxu0 %v925
      %958 = vmatpush1.bf16.msra.mxu0 %v922
      %959 = vmatprep.subr.bf16.mxu0 %v898
      %960 = vmatpush1.bf16.msra.mxu0 %v897
      %961 = vmatprep.subr.bf16.mxu0 0
      %962 = vmatpush2.bf16.msra.mxu0 0
      %963 = vmatprep.subr.bf16.mxu0 0
      %964 = vmatpush2.bf16.msra.mxu0 0
      %965 = vmatprep.subr.bf16.mxu0 0
      %966 = vmatpush2.bf16.msra.mxu0 0
      %967 = vmatprep.subr.bf16.mxu0 0
      %968 = vmatpush2.bf16.msra.mxu0 0
      %969 = vmatprep.subr.bf16.mxu0 0
      %970 = vmatpush2.bf16.msra.mxu0 0
      %971 = vmatprep.subr.bf16.mxu0 0
      %972 = vmatpush2.bf16.msra.mxu0 0
      %973 = vmatprep.subr.bf16.mxu0 0
      %974 = vmatpush2.bf16.msra.mxu0 0
      %975 = vmatprep.subr.bf16.mxu0 0
      %976 = vmatpush2.bf16.msra.mxu0 0
      %977 = vmatprep.mubr.bf16.mxu0 0
      %978 = vmatmul.mubr.bf16.gmra.mxu0 %v281
      %v979 = vpop.f32.mrf.mxu0
      %v980 = vadd.f32 %v195, %v979
      %v981 = vpop.f32.mrf.mxu0
      %v982 = vadd.f32 %v195, %v981
      %v983 = vpop.f32.mrf.mxu0
      %v984 = vadd.f32 %v200, %v983
      %v985 = vpop.f32.mrf.mxu0
      %v986 = vadd.f32 %v200, %v985
      %987 = vdwg.mxu0
      %988 = vmatprep.subr.bf16.mxu0 0
      %989 = vmatpush1.bf16.msra.mxu0 0
      %990 = vmatprep.subr.bf16.mxu0 0
      %991 = vmatpush1.bf16.msra.mxu0 0
      %992 = vmatprep.subr.bf16.mxu0 0
      %993 = vmatpush1.bf16.msra.mxu0 0
      %994 = vmatprep.subr.bf16.mxu0 0
      %995 = vmatpush1.bf16.msra.mxu0 0
      %996 = vmatprep.subr.bf16.mxu0 0
      %997 = vmatpush1.bf16.msra.mxu0 0
      %998 = vmatprep.subr.bf16.mxu0 0
      %999 = vmatpush1.bf16.msra.mxu0 0
      %1000 = vmatprep.subr.bf16.mxu0 %v931
      %1001 = vmatpush1.bf16.msra.mxu0 %v928
      %1002 = vmatprep.subr.bf16.mxu0 %v900
      %1003 = vmatpush1.bf16.msra.mxu0 %v899
      %1004 = vmatprep.subr.bf16.mxu0 0
      %1005 = vmatpush2.bf16.msra.mxu0 0
      %1006 = vmatprep.subr.bf16.mxu0 0
      %1007 = vmatpush2.bf16.msra.mxu0 0
      %1008 = vmatprep.subr.bf16.mxu0 0
      %1009 = vmatpush2.bf16.msra.mxu0 0
      %1010 = vmatprep.subr.bf16.mxu0 0
      %1011 = vmatpush2.bf16.msra.mxu0 0
      %1012 = vmatprep.subr.bf16.mxu0 0
      %1013 = vmatpush2.bf16.msra.mxu0 0
      %1014 = vmatprep.subr.bf16.mxu0 0
      %1015 = vmatpush2.bf16.msra.mxu0 0
      %1016 = vmatprep.subr.bf16.mxu0 0
      %1017 = vmatpush2.bf16.msra.mxu0 0
      %1018 = vmatprep.subr.bf16.mxu0 0
      %1019 = vmatpush2.bf16.msra.mxu0 0
      %1020 = vmatprep.mubr.bf16.mxu0 0
      %1021 = vmatmul.mubr.bf16.gmra.mxu0 %v281
      %v1022 = vpop.f32.mrf.mxu0
      %v1023 = vadd.f32 %v195, %v1022
      %v1024 = vpop.f32.mrf.mxu0
      %v1025 = vadd.f32 %v195, %v1024
      %v1026 = vpop.f32.mrf.mxu0
      %v1027 = vadd.f32 %v200, %v1026
      %v1028 = vpop.f32.mrf.mxu0
      %v1029 = vadd.f32 %v200, %v1028
      %1030 = vdwg.mxu0
      %1031 = vmatprep.subr.bf16.mxu0 0
      %1032 = vmatpush1.bf16.msra.mxu0 0
      %1033 = vmatprep.subr.bf16.mxu0 0
      %1034 = vmatpush1.bf16.msra.mxu0 0
      %1035 = vmatprep.subr.bf16.mxu0 0
      %1036 = vmatpush1.bf16.msra.mxu0 0
      %1037 = vmatprep.subr.bf16.mxu0 0
      %1038 = vmatpush1.bf16.msra.mxu0 0
      %1039 = vmatprep.subr.bf16.mxu0 0
      %1040 = vmatpush1.bf16.msra.mxu0 0
      %1041 = vmatprep.subr.bf16.mxu0 0
      %1042 = vmatpush1.bf16.msra.mxu0 0
      %1043 = vmatprep.subr.bf16.mxu0 %v937
      %1044 = vmatpush1.bf16.msra.mxu0 %v934
      %1045 = vmatprep.subr.bf16.mxu0 %v902
      %1046 = vmatpush1.bf16.msra.mxu0 %v901
      %1047 = vmatprep.subr.bf16.mxu0 0
      %1048 = vmatpush2.bf16.msra.mxu0 0
      %1049 = vmatprep.subr.bf16.mxu0 0
      %1050 = vmatpush2.bf16.msra.mxu0 0
      %1051 = vmatprep.subr.bf16.mxu0 0
      %1052 = vmatpush2.bf16.msra.mxu0 0
      %1053 = vmatprep.subr.bf16.mxu0 0
      %1054 = vmatpush2.bf16.msra.mxu0 0
      %1055 = vmatprep.subr.bf16.mxu0 0
      %1056 = vmatpush2.bf16.msra.mxu0 0
      %1057 = vmatprep.subr.bf16.mxu0 0
      %1058 = vmatpush2.bf16.msra.mxu0 0
      %1059 = vmatprep.subr.bf16.mxu0 0
      %1060 = vmatpush2.bf16.msra.mxu0 0
      %1061 = vmatprep.subr.bf16.mxu0 0
      %1062 = vmatpush2.bf16.msra.mxu0 0
      %1063 = vmatprep.mubr.bf16.mxu0 0
      %1064 = vmatmul.mubr.bf16.gmra.mxu0 %v281
      %v1065 = vpop.f32.mrf.mxu0
      %v1066 = vadd.f32 %v195, %v1065
      %v1067 = vpop.f32.mrf.mxu0
      %v1068 = vadd.f32 %v195, %v1067
      %v1069 = vpop.f32.mrf.mxu0
      %v1070 = vadd.f32 %v200, %v1069
      %v1071 = vpop.f32.mrf.mxu0
      %v1072 = vadd.f32 %v200, %v1071
      %1073 = vdwg.mxu0
      %1074 = vmatprep.subr.bf16.mxu0 0
      %1075 = vmatpush1.bf16.msra.mxu0 0
      %1076 = vmatprep.subr.bf16.mxu0 0
      %1077 = vmatpush1.bf16.msra.mxu0 0
      %1078 = vmatprep.subr.bf16.mxu0 0
      %1079 = vmatpush1.bf16.msra.mxu0 0
      %1080 = vmatprep.subr.bf16.mxu0 0
      %1081 = vmatpush1.bf16.msra.mxu0 0
      %1082 = vmatprep.subr.bf16.mxu0 0
      %1083 = vmatpush1.bf16.msra.mxu0 0
      %1084 = vmatprep.subr.bf16.mxu0 0
      %1085 = vmatpush1.bf16.msra.mxu0 0
      %1086 = vmatprep.subr.bf16.mxu0 %v943
      %1087 = vmatpush1.bf16.msra.mxu0 %v940
      %1088 = vmatprep.subr.bf16.mxu0 %v904
      %1089 = vmatpush1.bf16.msra.mxu0 %v903
      %1090 = vmatprep.subr.bf16.mxu0 0
      %1091 = vmatpush2.bf16.msra.mxu0 0
      %1092 = vmatprep.subr.bf16.mxu0 0
      %1093 = vmatpush2.bf16.msra.mxu0 0
      %1094 = vmatprep.subr.bf16.mxu0 0
      %1095 = vmatpush2.bf16.msra.mxu0 0
      %1096 = vmatprep.subr.bf16.mxu0 0
      %1097 = vmatpush2.bf16.msra.mxu0 0
      %1098 = vmatprep.subr.bf16.mxu0 0
      %1099 = vmatpush2.bf16.msra.mxu0 0
      %1100 = vmatprep.subr.bf16.mxu0 0
      %1101 = vmatpush2.bf16.msra.mxu0 0
      %1102 = vmatprep.subr.bf16.mxu0 0
      %1103 = vmatpush2.bf16.msra.mxu0 0
      %1104 = vmatprep.subr.bf16.mxu0 0
      %1105 = vmatpush2.bf16.msra.mxu0 0
      %1106 = vmatprep.mubr.bf16.mxu0 0
      %1107 = vmatmul.mubr.bf16.gmra.mxu0 %v281
      %v1108 = vpop.f32.mrf.mxu0
      %v1109 = vadd.f32 %v195, %v1108
      %v1110 = vpop.f32.mrf.mxu0
      %v1111 = vadd.f32 %v195, %v1110
      %v1112 = vpop.f32.mrf.mxu0
      %v1113 = vadd.f32 %v200, %v1112
      %v1114 = vpop.f32.mrf.mxu0
      %v1115 = vadd.f32 %v200, %v1114
      %1116 = vdwg.mxu0
      %v1117 = vmax.f32 %v980, 0.0
      %v1118 = vmax.f32 %v982, 0.0
      %v1119 = vmax.f32 %v1023, 0.0
      %v1120 = vmax.f32 %v1025, 0.0
      %v1121 = vmax.f32 %v1066, 0.0
      %v1122 = vmax.f32 %v1068, 0.0
      %v1123 = vmax.f32 %v1109, 0.0
      %v1124 = vmax.f32 %v1111, 0.0
      %v1125 = vmax.f32 %v984, 0.0
      %v1126 = vmax.f32 %v986, 0.0
      %v1127 = vmax.f32 %v1027, 0.0
      %v1128 = vmax.f32 %v1029, 0.0
      %v1129 = vmax.f32 %v1070, 0.0
      %v1130 = vmax.f32 %v1072, 0.0
      %v1131 = vmax.f32 %v1113, 0.0
      %v1132 = vmax.f32 %v1115, 0.0
      %v1133 = vadd.f32 %v816, %v1117
      %v1134 = vadd.f32 %v817, %v1118
      %v1135 = vadd.f32 %v818, %v1119
      %v1136 = vadd.f32 %v819, %v1120
      %v1137 = vadd.f32 %v820, %v1121
      %v1138 = vadd.f32 %v821, %v1122
      %v1139 = vadd.f32 %v822, %v1123
      %v1140 = vadd.f32 %v823, %v1124
      %v1141 = vadd.f32 %v824, %v1125
      %v1142 = vadd.f32 %v825, %v1126
      %v1143 = vadd.f32 %v826, %v1127
      %v1144 = vadd.f32 %v827, %v1128
      %v1145 = vadd.f32 %v828, %v1129
      %v1146 = vadd.f32 %v829, %v1130
      %v1147 = vadd.f32 %v830, %v1131
      %v1148 = vadd.f32 %v831, %v1132
      %s1149 = scalar_lea.vmem %s165, 384
      %v1150 = vld [vmem:[%s1149] sm:$0xff]
      %v1151 = vld [vmem:[%s1149 + $0x8] sm:$0xff]
      %v1152 = vld [vmem:[%s1149 + $0x10] sm:$0xff]
      %v1153 = vld [vmem:[%s1149 + $0x18] sm:$0xff]
      %v1154 = vld [vmem:[%s1149 + $0x20] sm:$0xff]
      %v1155 = vld [vmem:[%s1149 + $0x28] sm:$0xff]
      %v1156 = vld [vmem:[%s1149 + $0x30] sm:$0xff]
      %v1157 = vld [vmem:[%s1149 + $0x38] sm:$0xff]
      %v1158 = vld [vmem:[%s1149 + $0x40] sm:$0xff]
      %v1159 = vld [vmem:[%s1149 + $0x48] sm:$0xff]
      %v1160 = vld [vmem:[%s1149 + $0x50] sm:$0xff]
      %v1161 = vld [vmem:[%s1149 + $0x58] sm:$0xff]
      %v1162 = vld [vmem:[%s1149 + $0x60] sm:$0x33]
      %v1163 = vld [vmem:[%s1149 + $0x68] sm:$0x33]
      %v1164 = vld [vmem:[%s1149 + $0x70] sm:$0x33]
      %v1165 = vld [vmem:[%s1149 + $0x78] sm:$0x33]
      %v1182 = vunpack.c.l.b16 %v1150
      %v1183 = vunpack.c.h.b16 %v1150
      %v1184 = vunpack.c.l.b16 %v1151
      %v1185 = vunpack.c.h.b16 %v1151
      %v1186 = vunpack.c.l.b16 %v1152
      %v1187 = vunpack.c.h.b16 %v1152
      %v1188 = vunpack.c.l.b16 %v1153
      %v1189 = vunpack.c.h.b16 %v1153
      %v1190 = vunpack.c.l.b16 %v1154
      %v1191 = vunpack.c.h.b16 %v1154
      %v1192 = vunpack.c.l.b16 %v1155
      %v1193 = vunpack.c.h.b16 %v1155
      %v1194 = vunpack.c.l.b16 %v1156
      %v1195 = vunpack.c.h.b16 %v1156
      %v1196 = vunpack.c.l.b16 %v1157
      %v1197 = vunpack.c.h.b16 %v1157
      %v1198 = vunpack.c.l.b16 %v1158
      %v1199 = vunpack.c.h.b16 %v1158
      %v1200 = vunpack.c.l.b16 %v1159
      %v1201 = vunpack.c.h.b16 %v1159
      %v1202 = vunpack.c.l.b16 %v1160
      %v1203 = vunpack.c.h.b16 %v1160
      %v1204 = vunpack.c.l.b16 %v1161
      %v1205 = vunpack.c.h.b16 %v1161
      %v1206 = vunpack.c.l.b16 %v1162
      %v1207 = vunpack.c.h.b16 %v1162
      %v1208 = vunpack.c.l.b16 %v1163
      %v1209 = vunpack.c.h.b16 %v1163
      %v1210 = vunpack.c.l.b16 %v1164
      %v1211 = vunpack.c.h.b16 %v1164
      %v1212 = vunpack.c.l.b16 %v1165
      %v1213 = vunpack.c.h.b16 %v1165
      %v1214 = vpack.c.b16 %v1190, %v1182
      %v1215 = vpack.c.b16 %v1191, %v1183
      %v1216 = vpack.c.b16 %v1192, %v1184
      %v1217 = vpack.c.b16 %v1193, %v1185
      %v1218 = vpack.c.b16 %v1194, %v1186
      %v1219 = vpack.c.b16 %v1195, %v1187
      %v1220 = vpack.c.b16 %v1196, %v1188
      %v1221 = vpack.c.b16 %v1197, %v1189
      %v1222 = vpack.c.b16 %v1206, %v1198
      %v1223 = vpack.c.b16 %v1207, %v1199
      %v1224 = vpack.c.b16 %v1208, %v1200
      %v1225 = vpack.c.b16 %v1209, %v1201
      %v1226 = vpack.c.b16 %v1210, %v1202
      %v1227 = vpack.c.b16 %v1211, %v1203
      %v1228 = vpack.c.b16 %v1212, %v1204
      %v1229 = vpack.c.b16 %v1213, %v1205
      %v1239 = vand.u32 %v1222, %v286
      %v1242 = vand.u32 %v1223, %v286
      %v1245 = vand.u32 %v1224, %v286
      %v1248 = vand.u32 %v1225, %v286
      %v1251 = vand.u32 %v1226, %v286
      %v1254 = vand.u32 %v1227, %v286
      %v1257 = vand.u32 %v1228, %v286
      %v1260 = vand.u32 %v1229, %v286
      %1262 = vmatprep.subr.bf16.mxu0 0
      %1263 = vmatpush1.bf16.msra.mxu0 0
      %1264 = vmatprep.subr.bf16.mxu0 0
      %1265 = vmatpush1.bf16.msra.mxu0 0
      %1266 = vmatprep.subr.bf16.mxu0 0
      %1267 = vmatpush1.bf16.msra.mxu0 0
      %1268 = vmatprep.subr.bf16.mxu0 0
      %1269 = vmatpush1.bf16.msra.mxu0 0
      %1270 = vmatprep.subr.bf16.mxu0 0
      %1271 = vmatpush1.bf16.msra.mxu0 0
      %1272 = vmatprep.subr.bf16.mxu0 0
      %1273 = vmatpush1.bf16.msra.mxu0 0
      %1274 = vmatprep.subr.bf16.mxu0 %v1242
      %1275 = vmatpush1.bf16.msra.mxu0 %v1239
      %1276 = vmatprep.subr.bf16.mxu0 %v1215
      %1277 = vmatpush1.bf16.msra.mxu0 %v1214
      %1278 = vmatprep.subr.bf16.mxu0 0
      %1279 = vmatpush2.bf16.msra.mxu0 0
      %1280 = vmatprep.subr.bf16.mxu0 0
      %1281 = vmatpush2.bf16.msra.mxu0 0
      %1282 = vmatprep.subr.bf16.mxu0 0
      %1283 = vmatpush2.bf16.msra.mxu0 0
      %1284 = vmatprep.subr.bf16.mxu0 0
      %1285 = vmatpush2.bf16.msra.mxu0 0
      %1286 = vmatprep.subr.bf16.mxu0 0
      %1287 = vmatpush2.bf16.msra.mxu0 0
      %1288 = vmatprep.subr.bf16.mxu0 0
      %1289 = vmatpush2.bf16.msra.mxu0 0
      %1290 = vmatprep.subr.bf16.mxu0 0
      %1291 = vmatpush2.bf16.msra.mxu0 0
      %1292 = vmatprep.subr.bf16.mxu0 0
      %1293 = vmatpush2.bf16.msra.mxu0 0
      %1294 = vmatprep.mubr.bf16.mxu0 0
      %1295 = vmatmul.mubr.bf16.gmra.mxu0 %v281
      %v1296 = vpop.f32.mrf.mxu0
      %v1297 = vadd.f32 %v195, %v1296
      %v1298 = vpop.f32.mrf.mxu0
      %v1299 = vadd.f32 %v195, %v1298
      %v1300 = vpop.f32.mrf.mxu0
      %v1301 = vadd.f32 %v200, %v1300
      %v1302 = vpop.f32.mrf.mxu0
      %v1303 = vadd.f32 %v200, %v1302
      %1304 = vdwg.mxu0
      %1305 = vmatprep.subr.bf16.mxu0 0
      %1306 = vmatpush1.bf16.msra.mxu0 0
      %1307 = vmatprep.subr.bf16.mxu0 0
      %1308 = vmatpush1.bf16.msra.mxu0 0
      %1309 = vmatprep.subr.bf16.mxu0 0
      %1310 = vmatpush1.bf16.msra.mxu0 0
      %1311 = vmatprep.subr.bf16.mxu0 0
      %1312 = vmatpush1.bf16.msra.mxu0 0
      %1313 = vmatprep.subr.bf16.mxu0 0
      %1314 = vmatpush1.bf16.msra.mxu0 0
      %1315 = vmatprep.subr.bf16.mxu0 0
      %1316 = vmatpush1.bf16.msra.mxu0 0
      %1317 = vmatprep.subr.bf16.mxu0 %v1248
      %1318 = vmatpush1.bf16.msra.mxu0 %v1245
      %1319 = vmatprep.subr.bf16.mxu0 %v1217
      %1320 = vmatpush1.bf16.msra.mxu0 %v1216
      %1321 = vmatprep.subr.bf16.mxu0 0
      %1322 = vmatpush2.bf16.msra.mxu0 0
      %1323 = vmatprep.subr.bf16.mxu0 0
      %1324 = vmatpush2.bf16.msra.mxu0 0
      %1325 = vmatprep.subr.bf16.mxu0 0
      %1326 = vmatpush2.bf16.msra.mxu0 0
      %1327 = vmatprep.subr.bf16.mxu0 0
      %1328 = vmatpush2.bf16.msra.mxu0 0
      %1329 = vmatprep.subr.bf16.mxu0 0
      %1330 = vmatpush2.bf16.msra.mxu0 0
      %1331 = vmatprep.subr.bf16.mxu0 0
      %1332 = vmatpush2.bf16.msra.mxu0 0
      %1333 = vmatprep.subr.bf16.mxu0 0
      %1334 = vmatpush2.bf16.msra.mxu0 0
      %1335 = vmatprep.subr.bf16.mxu0 0
      %1336 = vmatpush2.bf16.msra.mxu0 0
      %1337 = vmatprep.mubr.bf16.mxu0 0
      %1338 = vmatmul.mubr.bf16.gmra.mxu0 %v281
      %v1339 = vpop.f32.mrf.mxu0
      %v1340 = vadd.f32 %v195, %v1339
      %v1341 = vpop.f32.mrf.mxu0
      %v1342 = vadd.f32 %v195, %v1341
      %v1343 = vpop.f32.mrf.mxu0
      %v1344 = vadd.f32 %v200, %v1343
      %v1345 = vpop.f32.mrf.mxu0
      %v1346 = vadd.f32 %v200, %v1345
      %1347 = vdwg.mxu0
      %1348 = vmatprep.subr.bf16.mxu0 0
      %1349 = vmatpush1.bf16.msra.mxu0 0
      %1350 = vmatprep.subr.bf16.mxu0 0
      %1351 = vmatpush1.bf16.msra.mxu0 0
      %1352 = vmatprep.subr.bf16.mxu0 0
      %1353 = vmatpush1.bf16.msra.mxu0 0
      %1354 = vmatprep.subr.bf16.mxu0 0
      %1355 = vmatpush1.bf16.msra.mxu0 0
      %1356 = vmatprep.subr.bf16.mxu0 0
      %1357 = vmatpush1.bf16.msra.mxu0 0
      %1358 = vmatprep.subr.bf16.mxu0 0
      %1359 = vmatpush1.bf16.msra.mxu0 0
      %1360 = vmatprep.subr.bf16.mxu0 %v1254
      %1361 = vmatpush1.bf16.msra.mxu0 %v1251
      %1362 = vmatprep.subr.bf16.mxu0 %v1219
      %1363 = vmatpush1.bf16.msra.mxu0 %v1218
      %1364 = vmatprep.subr.bf16.mxu0 0
      %1365 = vmatpush2.bf16.msra.mxu0 0
      %1366 = vmatprep.subr.bf16.mxu0 0
      %1367 = vmatpush2.bf16.msra.mxu0 0
      %1368 = vmatprep.subr.bf16.mxu0 0
      %1369 = vmatpush2.bf16.msra.mxu0 0
      %1370 = vmatprep.subr.bf16.mxu0 0
      %1371 = vmatpush2.bf16.msra.mxu0 0
      %1372 = vmatprep.subr.bf16.mxu0 0
      %1373 = vmatpush2.bf16.msra.mxu0 0
      %1374 = vmatprep.subr.bf16.mxu0 0
      %1375 = vmatpush2.bf16.msra.mxu0 0
      %1376 = vmatprep.subr.bf16.mxu0 0
      %1377 = vmatpush2.bf16.msra.mxu0 0
      %1378 = vmatprep.subr.bf16.mxu0 0
      %1379 = vmatpush2.bf16.msra.mxu0 0
      %1380 = vmatprep.mubr.bf16.mxu0 0
      %1381 = vmatmul.mubr.bf16.gmra.mxu0 %v281
      %v1382 = vpop.f32.mrf.mxu0
      %v1383 = vadd.f32 %v195, %v1382
      %v1384 = vpop.f32.mrf.mxu0
      %v1385 = vadd.f32 %v195, %v1384
      %v1386 = vpop.f32.mrf.mxu0
      %v1387 = vadd.f32 %v200, %v1386
      %v1388 = vpop.f32.mrf.mxu0
      %v1389 = vadd.f32 %v200, %v1388
      %1390 = vdwg.mxu0
      %1391 = vmatprep.subr.bf16.mxu0 0
      %1392 = vmatpush1.bf16.msra.mxu0 0
      %1393 = vmatprep.subr.bf16.mxu0 0
      %1394 = vmatpush1.bf16.msra.mxu0 0
      %1395 = vmatprep.subr.bf16.mxu0 0
      %1396 = vmatpush1.bf16.msra.mxu0 0
      %1397 = vmatprep.subr.bf16.mxu0 0
      %1398 = vmatpush1.bf16.msra.mxu0 0
      %1399 = vmatprep.subr.bf16.mxu0 0
      %1400 = vmatpush1.bf16.msra.mxu0 0
      %1401 = vmatprep.subr.bf16.mxu0 0
      %1402 = vmatpush1.bf16.msra.mxu0 0
      %1403 = vmatprep.subr.bf16.mxu0 %v1260
      %1404 = vmatpush1.bf16.msra.mxu0 %v1257
      %1405 = vmatprep.subr.bf16.mxu0 %v1221
      %1406 = vmatpush1.bf16.msra.mxu0 %v1220
      %1407 = vmatprep.subr.bf16.mxu0 0
      %1408 = vmatpush2.bf16.msra.mxu0 0
      %1409 = vmatprep.subr.bf16.mxu0 0
      %1410 = vmatpush2.bf16.msra.mxu0 0
      %1411 = vmatprep.subr.bf16.mxu0 0
      %1412 = vmatpush2.bf16.msra.mxu0 0
      %1413 = vmatprep.subr.bf16.mxu0 0
      %1414 = vmatpush2.bf16.msra.mxu0 0
      %1415 = vmatprep.subr.bf16.mxu0 0
      %1416 = vmatpush2.bf16.msra.mxu0 0
      %1417 = vmatprep.subr.bf16.mxu0 0
      %1418 = vmatpush2.bf16.msra.mxu0 0
      %1419 = vmatprep.subr.bf16.mxu0 0
      %1420 = vmatpush2.bf16.msra.mxu0 0
      %1421 = vmatprep.subr.bf16.mxu0 0
      %1422 = vmatpush2.bf16.msra.mxu0 0
      %1423 = vmatprep.mubr.bf16.mxu0 0
      %1424 = vmatmul.mubr.bf16.gmra.mxu0 %v281
      %v1425 = vpop.f32.mrf.mxu0
      %v1426 = vadd.f32 %v195, %v1425
      %v1427 = vpop.f32.mrf.mxu0
      %v1428 = vadd.f32 %v195, %v1427
      %v1429 = vpop.f32.mrf.mxu0
      %v1430 = vadd.f32 %v200, %v1429
      %v1431 = vpop.f32.mrf.mxu0
      %v1432 = vadd.f32 %v200, %v1431
      %1433 = vdwg.mxu0
      %v1434 = vmax.f32 %v1297, 0.0
      %v1435 = vmax.f32 %v1299, 0.0
      %v1436 = vmax.f32 %v1340, 0.0
      %v1437 = vmax.f32 %v1342, 0.0
      %v1438 = vmax.f32 %v1383, 0.0
      %v1439 = vmax.f32 %v1385, 0.0
      %v1440 = vmax.f32 %v1426, 0.0
      %v1441 = vmax.f32 %v1428, 0.0
      %v1442 = vmax.f32 %v1301, 0.0
      %v1443 = vmax.f32 %v1303, 0.0
      %v1444 = vmax.f32 %v1344, 0.0
      %v1445 = vmax.f32 %v1346, 0.0
      %v1446 = vmax.f32 %v1387, 0.0
      %v1447 = vmax.f32 %v1389, 0.0
      %v1448 = vmax.f32 %v1430, 0.0
      %v1449 = vmax.f32 %v1432, 0.0
      %v1450 = vadd.f32 %v1133, %v1434
      %v1451 = vadd.f32 %v1134, %v1435
      %v1452 = vadd.f32 %v1135, %v1436
      %v1453 = vadd.f32 %v1136, %v1437
      %v1454 = vadd.f32 %v1137, %v1438
      %v1455 = vadd.f32 %v1138, %v1439
      %v1456 = vadd.f32 %v1139, %v1440
      %v1457 = vadd.f32 %v1140, %v1441
      %v1458 = vadd.f32 %v1141, %v1442
      %v1459 = vadd.f32 %v1142, %v1443
      %v1460 = vadd.f32 %v1143, %v1444
      %v1461 = vadd.f32 %v1144, %v1445
      %v1462 = vadd.f32 %v1145, %v1446
      %v1463 = vadd.f32 %v1146, %v1447
      %v1464 = vadd.f32 %v1147, %v1448
      %v1465 = vadd.f32 %v1148, %v1449
      %v1466 = vmul.f32 %v1450, 0.25
      %v1467 = vmul.f32 %v1451, 0.25
      %v1468 = vmul.f32 %v1452, 0.25
      %v1469 = vmul.f32 %v1453, 0.25
      %v1470 = vmul.f32 %v1454, 0.25
      %v1471 = vmul.f32 %v1455, 0.25
      %v1472 = vmul.f32 %v1456, 0.25
      %v1473 = vmul.f32 %v1457, 0.25
      %v1474 = vmul.f32 %v1458, 0.25
      %v1475 = vmul.f32 %v1459, 0.25
      %v1476 = vmul.f32 %v1460, 0.25
      %v1477 = vmul.f32 %v1461, 0.25
      %v1478 = vmul.f32 %v1462, 0.25
      %v1479 = vmul.f32 %v1463, 0.25
      %v1480 = vmul.f32 %v1464, 0.25
      %v1481 = vmul.f32 %v1465, 0.25
      %v1482 = vpack.c.bf16 %v1474, %v1466
      %v1483 = vpack.c.bf16 %v1475, %v1467
      %v1484 = vpack.c.bf16 %v1476, %v1468
      %v1485 = vpack.c.bf16 %v1477, %v1469
      %v1486 = vpack.c.bf16 %v1478, %v1470
      %v1487 = vpack.c.bf16 %v1479, %v1471
      %v1488 = vpack.c.bf16 %v1480, %v1472
      %v1489 = vpack.c.bf16 %v1481, %v1473
      %v1498 = vunpack.c.l.b16 %v1482
      %v1499 = vunpack.c.l.b16 %v1483
      %v1500 = vunpack.c.l.b16 %v1484
      %v1501 = vunpack.c.l.b16 %v1485
      %v1502 = vunpack.c.l.b16 %v1486
      %v1503 = vunpack.c.l.b16 %v1487
      %v1504 = vunpack.c.l.b16 %v1488
      %v1505 = vunpack.c.l.b16 %v1489
      %v1506 = vunpack.c.h.b16 %v1482
      %v1507 = vunpack.c.h.b16 %v1483
      %v1508 = vunpack.c.h.b16 %v1484
      %v1509 = vunpack.c.h.b16 %v1485
      %v1510 = vunpack.c.h.b16 %v1486
      %v1511 = vunpack.c.h.b16 %v1487
      %v1512 = vunpack.c.h.b16 %v1488
      %v1513 = vunpack.c.h.b16 %v1489
      %v1514 = vpack.c.b16 %v1499, %v1498
      %v1515 = vpack.c.b16 %v1501, %v1500
      %v1516 = vpack.c.b16 %v1503, %v1502
      %v1517 = vpack.c.b16 %v1505, %v1504
      %v1518 = vpack.c.b16 %v1507, %v1506
      %v1519 = vpack.c.b16 %v1509, %v1508
      %v1520 = vpack.c.b16 %v1511, %v1510
      %v1521 = vpack.c.b16 %v1513, %v1512
      %1530 = vst [vmem:[%s170] sm:$0xff] %v1514
      %1531 = vst [vmem:[%s170 + $0x8] sm:$0xff] %v1515
      %1532 = vst [vmem:[%s170 + $0x10] sm:$0xff] %v1516
      %vm1533 = vcmask 1043456
      %vm1534 = vcmask 531460
      %vm1535 = vmor %vm1534, %vm1533
      %1536 = vst.msk [vmem:[%s170 + $0x18] sm:$0xff] %vm1535, %v1517
      %1537 = vst [vmem:[%s170 + $0x20] sm:$0xff] %v1518
      %1538 = vst [vmem:[%s170 + $0x28] sm:$0xff] %v1519
      %1539 = vst [vmem:[%s170 + $0x30] sm:$0xff] %v1520
      %1540 = vst.msk [vmem:[%s170 + $0x38] sm:$0xff] %vm1535, %v1521
      %p1541 = scmp.lt.s32.totalorder %s14, 1
      %s1542 = scalar_select %p1541, %s14, 1
      %s1543 = smul.addr %s1542, 16
      %s1544 = smul.addr %s1543, 4
      %s1545 = scalar_lea.vmem %s3, %s1544
      // Predicated region
      $region33: #{firenet_forward.4} parent=31 // pred_check
        %p1546 = pneg %p100
      $region34: #{firenet_forward.4} parent=31 // pred_check_branch
        %1548 = sbr.rel (%p1546) target = $region36
      $region35: #{firenet_forward.4} parent=31 // pred_region
        _
      $region36: #{firenet_forward.4} parent=31 // pred_fallthru
        _
    $region32: #{firenet_forward.4} parent=5 // pred_fallthru
      _
    %p1549 = scmp.le.s32.totalorder 2, %s9
    // Predicated region
    $region37: #{firenet_forward.4} parent=5 // pred_check
      %p1550 = pneg %p1549
    $region38: #{firenet_forward.4} parent=5 // pred_check_branch
      %1552 = sbr.rel (%p1550) target = $region40
    $region39: #{firenet_forward.4} parent=5 // pred_region
      %s1553 = ssub.s32 %s9, 2
      // Predicated region
      $region41: #{firenet_forward.4} parent=39 // pred_check
        %p1554 = pneg %p106
      $region42: #{firenet_forward.4} parent=39 // pred_check_branch
        %1556 = sbr.rel (%p1554) target = $region44
      $region43: #{firenet_forward.4} parent=39 // pred_region
        %p1557 = scmp.lt.s32.totalorder %s15, 1
        %s1558 = scalar_select %p1557, %s15, 1
        %s1559 = smul.addr %s1558, 16
        %s1560 = smul.addr %s1559, 4
        %s1561 = scalar_lea.vmem %s3, %s1560
      $region44: #{firenet_forward.4} parent=39 // pred_fallthru
        _
    $region40: #{firenet_forward.4} parent=5 // pred_fallthru
      _
  $region6: #{firenet_forward.4} parent=0 // loop_footer
    %s13 = sadd.s32 1, %s9
  $region7: #{firenet_forward.4} parent=0 // loop_footer_branch
    %8 = sbr.rel target = $region3
  $region8: #{firenet_forward.4} parent=0 // loop_exit
    _

// kernel: firenet_forward.5
$region0: #{firenet_forward.5}
  #allocation0 [shape = 'u32[]', space=smem, size = 0x4, offset = 0x4, fixed_abs, tag = 'smem constant byte address 0x4 - core index']
  #allocation1 [shape = 'u32[144,128]{1,0:T(1,128)}', space=vmem, size = 0x12000, scoped, tag = 'internal scratch']
  %s0 = inlined_call_operand.vmem [shape: bf16[2,4,144,196], index: 0, kind: input, shape index: {}]
  %s1 = inlined_call_operand.vmem [shape: bf16[32,144], index: 1, kind: input, shape index: {}]
  %s2 = inlined_call_operand.vmem [shape: f32[32,1], index: 2, kind: input, shape index: {}]
  %s3 = inlined_call_operand.vmem [shape: bf16[2,32,196], index: 3, kind: output, shape index: {}]
  %s4 = sld [smem:[#allocation0]]
  $region45: #{firenet_forward.5} parent=0
    _
  %s6 = ssub.s32 1, %s4
  %s7 = scalar_select 0, %s6, %s4
  loop: start=0, step=1, limit=4
  $region2: #{firenet_forward.5} parent=0 // loop_pre_header
    _
  $region3: #{firenet_forward.5} parent=0 // loop_header
    %s9 = sphi 0, %s13
    %p10 = scmp.ge.s32.totalorder %s9, 4
    %s19 = sphi 0, %s21
    %s22 = sphi 0, %s19
    %s23 = sphi 0, %s22
    %s39 = sphi 0, %s23
    %s43 = sphi 0, %s43
    %s45 = sphi 0, %s43
    %s46 = sphi 0, %s45
    %s60 = sphi 0, %s46
    %s64 = sphi 0, %s64
    %s66 = sphi 0, %s64
    %s67 = sphi 0, %s66
    %s81 = sphi 0, %s67
    %s87 = sphi 0, %s89
    %s90 = sphi 0, %s87
    %s91 = sphi 0, %s90
    %s107 = sphi 0, %s91
  $region4: #{firenet_forward.5} parent=0 // loop_header_branch
    %12 = sbr.rel (%p10) target = $region8
  $region5: #{firenet_forward.5} parent=0 // loop_body
    %s14 = ssub.s32 %s9, 1
    %s15 = ssub.s32 %s9, 2
    %s16 = sadd.s32 %s9, 1
    %s17 = ssub.s32 %s9, %s16
    %p18 = scmp.eq.s32.totalorder %s17, 0
    %s20 = sadd.s32 %s19, 1
    %s21 = scalar_select %p18, %s19, %s20
    %p24 = pneg %p18
    %p25 = scmp.eq.s32.totalorder %s9, 1
    %p26 = por %p24, %p25
    %p27 = scmp.ne.s32.totalorder %s19, %s22
    %p28 = scmp.eq.s32.totalorder %s9, 0
    %p29 = por %p27, %p28
    %p30 = scmp.ne.s32.totalorder %s19, %s22
    %p31 = scmp.eq.s32.totalorder %s14, 1
    %p32 = por %p30, %p31
    %p33 = scmp.ne.s32.totalorder %s22, %s23
    %p34 = scmp.eq.s32.totalorder %s14, 0
    %p35 = por %p33, %p34
    %p36 = scmp.ne.s32.totalorder %s22, %s23
    %p37 = scmp.eq.s32.totalorder %s15, 1
    %p38 = por %p36, %p37
    %p40 = scmp.ne.s32.totalorder %s23, %s39
    %p41 = scmp.eq.s32.totalorder %s15, 0
    %p42 = por %p40, %p41
    %s44 = sadd.s32 %s43, 1
    %p47 = scmp.eq.s32.totalorder %s9, 1
    %p48 = scmp.ne.s32.totalorder %s43, %s45
    %p49 = scmp.eq.s32.totalorder %s9, 0
    %p50 = por %p48, %p49
    %p51 = scmp.ne.s32.totalorder %s43, %s45
    %p52 = scmp.eq.s32.totalorder %s14, 1
    %p53 = por %p51, %p52
    %p54 = scmp.ne.s32.totalorder %s45, %s46
    %p55 = scmp.eq.s32.totalorder %s14, 0
    %p56 = por %p54, %p55
    %p57 = scmp.ne.s32.totalorder %s45, %s46
    %p58 = scmp.eq.s32.totalorder %s15, 1
    %p59 = por %p57, %p58
    %p61 = scmp.ne.s32.totalorder %s46, %s60
    %p62 = scmp.eq.s32.totalorder %s15, 0
    %p63 = por %p61, %p62
    %s65 = sadd.s32 %s64, 1
    %p68 = scmp.eq.s32.totalorder %s9, 1
    %p69 = scmp.ne.s32.totalorder %s64, %s66
    %p70 = scmp.eq.s32.totalorder %s9, 0
    %p71 = por %p69, %p70
    %p72 = scmp.ne.s32.totalorder %s64, %s66
    %p73 = scmp.eq.s32.totalorder %s14, 1
    %p74 = por %p72, %p73
    %p75 = scmp.ne.s32.totalorder %s66, %s67
    %p76 = scmp.eq.s32.totalorder %s14, 0
    %p77 = por %p75, %p76
    %p78 = scmp.ne.s32.totalorder %s66, %s67
    %p79 = scmp.eq.s32.totalorder %s15, 1
    %p80 = por %p78, %p79
    %p82 = scmp.ne.s32.totalorder %s67, %s81
    %p83 = scmp.eq.s32.totalorder %s15, 0
    %p84 = por %p82, %p83
    %s85 = ssub.s32 %s9, %s16
    %p86 = scmp.eq.s32.totalorder %s85, 0
    %s88 = sadd.s32 %s87, 1
    %s89 = scalar_select %p86, %s87, %s88
    %p92 = pneg %p86
    %p93 = scmp.eq.s32.totalorder %s9, 1
    %p94 = por %p92, %p93
    %p95 = scmp.ne.s32.totalorder %s87, %s90
    %p96 = scmp.eq.s32.totalorder %s9, 0
    %p97 = por %p95, %p96
    %p98 = scmp.ne.s32.totalorder %s87, %s90
    %p99 = scmp.eq.s32.totalorder %s14, 1
    %p100 = por %p98, %p99
    %p101 = scmp.ne.s32.totalorder %s90, %s91
    %p102 = scmp.eq.s32.totalorder %s14, 0
    %p103 = por %p101, %p102
    %p104 = scmp.ne.s32.totalorder %s90, %s91
    %p105 = scmp.eq.s32.totalorder %s15, 1
    %p106 = por %p104, %p105
    %p108 = scmp.ne.s32.totalorder %s91, %s107
    %p109 = scmp.eq.s32.totalorder %s15, 0
    %p110 = por %p108, %p109
    %p111 = scmp.le.s32.totalorder 1, %s9
    %p112 = scmp.lt.s32.totalorder %s9, 3
    %p113 = pnand %p111, %p112
    %p114 = pneg %p113
    // Predicated region
    $region9: #{firenet_forward.5} parent=5 // pred_check
      _
    $region10: #{firenet_forward.5} parent=5 // pred_check_branch
      %116 = sbr.rel (%p113) target = $region12
    $region11: #{firenet_forward.5} parent=5 // pred_region
      %s117 = ssub.s32 %s9, 1
      // Predicated region
      $region13: #{firenet_forward.5} parent=11 // pred_check
        %p118 = pneg %p56
      $region14: #{firenet_forward.5} parent=11 // pred_check_branch
        %120 = sbr.rel (%p118) target = $region16
      $region15: #{firenet_forward.5} parent=11 // pred_region
        _
      $region16: #{firenet_forward.5} parent=11 // pred_fallthru
        _
      // Predicated region
      $region17: #{firenet_forward.5} parent=11 // pred_check
        %p121 = pneg %p77
      $region18: #{firenet_forward.5} parent=11 // pred_check_branch
        %123 = sbr.rel (%p121) target = $region20
      $region19: #{firenet_forward.5} parent=11 // pred_region
        _
      $region20: #{firenet_forward.5} parent=11 // pred_fallthru
        _
    $region12: #{firenet_forward.5} parent=5 // pred_fallthru
      _
    %p124 = scmp.lt.s32.totalorder %s9, 2
    // Predicated region
    $region21: #{firenet_forward.5} parent=5 // pred_check
      %p125 = pneg %p124
    $region22: #{firenet_forward.5} parent=5 // pred_check_branch
      %127 = sbr.rel (%p125) target = $region24
    $region23: #{firenet_forward.5} parent=5 // pred_region
      // Predicated region
      $region25: #{firenet_forward.5} parent=23 // pred_check
        %p128 = pneg %p29
      $region26: #{firenet_forward.5} parent=23 // pred_check_branch
        %130 = sbr.rel (%p128) target = $region28
      $region27: #{firenet_forward.5} parent=23 // pred_region
        %p131 = scmp.lt.s32.totalorder %s9, 1
        %s132 = scalar_select %p131, %s9, 1
        %s133 = smul.addr %s132, 144
        %s134 = smul.addr %s133, 4
        %s135 = scalar_lea.vmem %s0, %s134
      $region28: #{firenet_forward.5} parent=23 // pred_fallthru
        _
    $region24: #{firenet_forward.5} parent=5 // pred_fallthru
      _
    %p136 = scmp.le.s32.totalorder 1, %s9
    %p137 = scmp.lt.s32.totalorder %s9, 3
    %p138 = pnand %p136, %p137
    %p139 = pneg %p138
    // Predicated region
    $region29: #{firenet_forward.5} parent=5 // pred_check
      _
    $region30: #{firenet_forward.5} parent=5 // pred_check_branch
      %141 = sbr.rel (%p138) target = $region32
    $region31: #{firenet_forward.5} parent=5 // pred_region
      %s142 = ssub.s32 %s9, 1
      %p143 = scmp.lt.s32.totalorder %s14, 1
      %s144 = scalar_select %p143, %s14, 1
      %s145 = smul.addr %s144, 144
      %s146 = smul.addr %s145, 4
      %s147 = scalar_lea.vmem %s0, %s146
      %p148 = pneg %p35
      %p149 = pneg %p32
      %p150 = pneg %p56
      %p151 = pneg %p53
      %p152 = pneg %p77
      %p153 = pneg %p74
      %p154 = pneg %p103
      %p155 = pneg %p100
      %p156 = scmp.lt.s32.totalorder %s14, 1
      %s157 = scalar_select %p156, %s14, 1
      %s158 = smul.addr %s157, 8
      %s159 = smul.addr %s158, 4
      %s160 = scalar_lea.vmem %s3, %s159
      %p161 = scmp.lt.s32.totalorder %s14, 1
      %s162 = scalar_select %p161, %s14, 1
      %s163 = smul.addr %s162, 144
      %s164 = smul.addr %s163, 4
      %s165 = scalar_lea.vmem %s0, %s164
      %p166 = scmp.lt.s32.totalorder %s14, 1
      %s167 = scalar_select %p166, %s14, 1
      %s168 = smul.addr %s167, 8
      %s169 = smul.addr %s168, 4
      %s170 = scalar_lea.vmem %s3, %s169
      %v172 = vld [vmem:[%s1] sm:$0xff]
      %v173 = vld [vmem:[%s1 + $0x8] sm:$0xff]
      %v174 = vld [vmem:[%s1 + $0x10] sm:$0xff]
      %v175 = vld [vmem:[%s1 + $0x18] sm:$0xff]
      %v176 = vld [vmem:[%s2] sm:$0xff]
      %v177 = vld [vmem:[%s2 + $0x8] sm:$0xff]
      %v178 = vld [vmem:[%s2 + $0x10] sm:$0xff]
      %v179 = vld [vmem:[%s2 + $0x18] sm:$0xff]
      %v180 = vld [vmem:[%s165] sm:$0xff]
      %v181 = vld [vmem:[%s165 + $0x8] sm:$0xff]
      %v182 = vld [vmem:[%s165 + $0x10] sm:$0xff]
      %v183 = vld [vmem:[%s165 + $0x18] sm:$0xff]
      %v184 = vld [vmem:[%s165 + $0x20] sm:$0xff]
      %v185 = vld [vmem:[%s165 + $0x28] sm:$0xff]
      %v186 = vld [vmem:[%s165 + $0x30] sm:$0xff]
      %v187 = vld [vmem:[%s165 + $0x38] sm:$0xff]
      %v188 = vld [vmem:[%s165 + $0x40] sm:$0xff]
      %v189 = vld [vmem:[%s165 + $0x48] sm:$0xff]
      %v190 = vld [vmem:[%s165 + $0x50] sm:$0xff]
      %v191 = vld [vmem:[%s165 + $0x58] sm:$0xff]
      %v192 = vld [vmem:[%s165 + $0x60] sm:$0xff]
      %v193 = vld [vmem:[%s165 + $0x68] sm:$0xff]
      %v194 = vld [vmem:[%s165 + $0x70] sm:$0xff]
      %v195 = vld [vmem:[%s165 + $0x78] sm:$0xff]
      %v196 = vld [vmem:[%s165 + $0x80] sm:$0xff]
      %v197 = vld [vmem:[%s165 + $0x88] sm:$0xff]
      %199 = vset.pattern.permute.xlu0 0
      %200 = vperm.xlu0 %199, %v176
      %v201 = vpop.permute.xlu0 %200
      %204 = vset.pattern.permute.xlu0 0
      %205 = vperm.xlu0 %204, %v177
      %v206 = vpop.permute.xlu0 %205
      %209 = vset.pattern.permute.xlu0 0
      %210 = vperm.xlu0 %209, %v178
      %v211 = vpop.permute.xlu0 %210
      %214 = vset.pattern.permute.xlu0 0
      %215 = vperm.xlu0 %214, %v179
      %v216 = vpop.permute.xlu0 %215
      %v222 = vunpack.c.l.b16 %v172
      %v223 = vunpack.c.h.b16 %v172
      %v224 = vunpack.c.l.b16 %v173
      %v225 = vunpack.c.h.b16 %v173
      %v226 = vunpack.c.l.b16 %v174
      %v227 = vunpack.c.h.b16 %v174
      %v228 = vunpack.c.l.b16 %v175
      %v229 = vunpack.c.h.b16 %v175
      %v230 = vpack.c.b16 %v224, %v222
      %v231 = vpack.c.b16 %v225, %v223
      %v232 = vpack.c.b16 %v228, %v226
      %v233 = vpack.c.b16 %v229, %v227
      %v254 = vunpack.c.l.b16 %v180
      %v255 = vunpack.c.h.b16 %v180
      %v256 = vunpack.c.l.b16 %v181
      %v257 = vunpack.c.h.b16 %v181
      %v258 = vunpack.c.l.b16 %v182
      %v259 = vunpack.c.h.b16 %v182
      %v260 = vunpack.c.l.b16 %v183
      %v261 = vunpack.c.h.b16 %v183
      %v262 = vunpack.c.l.b16 %v184
      %v263 = vunpack.c.h.b16 %v184
      %v264 = vunpack.c.l.b16 %v185
      %v265 = vunpack.c.h.b16 %v185
      %v266 = vunpack.c.l.b16 %v186
      %v267 = vunpack.c.h.b16 %v186
      %v268 = vunpack.c.l.b16 %v187
      %v269 = vunpack.c.h.b16 %v187
      %v270 = vunpack.c.l.b16 %v188
      %v271 = vunpack.c.h.b16 %v188
      %v272 = vunpack.c.l.b16 %v189
      %v273 = vunpack.c.h.b16 %v189
      %v274 = vunpack.c.l.b16 %v190
      %v275 = vunpack.c.h.b16 %v190
      %v276 = vunpack.c.l.b16 %v191
      %v277 = vunpack.c.h.b16 %v191
      %v278 = vunpack.c.l.b16 %v192
      %v279 = vunpack.c.h.b16 %v192
      %v280 = vunpack.c.l.b16 %v193
      %v281 = vunpack.c.h.b16 %v193
      %v282 = vunpack.c.l.b16 %v194
      %v283 = vunpack.c.h.b16 %v194
      %v284 = vunpack.c.l.b16 %v195
      %v285 = vunpack.c.h.b16 %v195
      %v286 = vunpack.c.l.b16 %v196
      %v287 = vunpack.c.h.b16 %v196
      %v288 = vunpack.c.l.b16 %v197
      %v289 = vunpack.c.h.b16 %v197
      %v290 = vpack.c.b16 %v256, %v254
      %v291 = vpack.c.b16 %v257, %v255
      %v292 = vpack.c.b16 %v260, %v258
      %v293 = vpack.c.b16 %v261, %v259
      %v294 = vpack.c.b16 %v264, %v262
      %v295 = vpack.c.b16 %v265, %v263
      %v296 = vpack.c.b16 %v268, %v266
      %v297 = vpack.c.b16 %v269, %v267
      %v298 = vpack.c.b16 %v272, %v270
      %v299 = vpack.c.b16 %v273, %v271
      %v300 = vpack.c.b16 %v276, %v274
      %v301 = vpack.c.b16 %v277, %v275
      %v302 = vpack.c.b16 %v280, %v278
      %v303 = vpack.c.b16 %v281, %v279
      %v304 = vpack.c.b16 %v284, %v282
      %v305 = vpack.c.b16 %v285, %v283
      %v306 = vpack.c.b16 %v288, %v286
      %v307 = vpack.c.b16 %v289, %v287
      %vm326 = vcmask 130048
      %v328 = vsel %vm326, %v231, 0
      %v331 = vsel %vm326, %v233, 0
      %333 = vmatprep.subr.bf16.mxu0 %v305
      %334 = vmatpush1.bf16.msra.mxu0 %v304
      %335 = vmatprep.subr.bf16.mxu0 %v303
      %336 = vmatpush1.bf16.msra.mxu0 %v302
      %337 = vmatprep.subr.bf16.mxu0 %v301
      %338 = vmatpush1.bf16.msra.mxu0 %v300
      %339 = vmatprep.subr.bf16.mxu0 %v299
      %340 = vmatpush1.bf16.msra.mxu0 %v298
      %341 = vmatprep.subr.bf16.mxu0 %v297
      %342 = vmatpush1.bf16.msra.mxu0 %v296
      %343 = vmatprep.subr.bf16.mxu0 %v295
      %344 = vmatpush1.bf16.msra.mxu0 %v294
      %345 = vmatprep.subr.bf16.mxu0 %v293
      %346 = vmatpush1.bf16.msra.mxu0 %v292
      %347 = vmatprep.subr.bf16.mxu0 %v291
      %348 = vmatpush1.bf16.msra.mxu0 %v290
      %349 = vmatprep.subr.bf16.mxu0 0
      %350 = vmatpush2.bf16.msra.mxu0 0
      %351 = vmatprep.subr.bf16.mxu0 0
      %352 = vmatpush2.bf16.msra.mxu0 0
      %353 = vmatprep.subr.bf16.mxu0 0
      %354 = vmatpush2.bf16.msra.mxu0 0
      %355 = vmatprep.subr.bf16.mxu0 0
      %356 = vmatpush2.bf16.msra.mxu0 0
      %357 = vmatprep.subr.bf16.mxu0 0
      %358 = vmatpush2.bf16.msra.mxu0 0
      %359 = vmatprep.subr.bf16.mxu0 0
      %360 = vmatpush2.bf16.msra.mxu0 0
      %361 = vmatprep.subr.bf16.mxu0 0
      %362 = vmatpush2.bf16.msra.mxu0 0
      %363 = vmatprep.subr.bf16.mxu0 %v307
      %364 = vmatpush2.bf16.msra.mxu0 %v306
      %365 = vmatprep.mubr.bf16.mxu0 %v328
      %366 = vmatmul.mubr.bf16.gmra.mxu0 %v230
      %v367 = vpop.f32.mrf.mxu0
      %v368 = vadd.f32 %v201, %v367
      %v369 = vpop.f32.mrf.mxu0
      %v370 = vadd.f32 %v201, %v369
      %v371 = vpop.f32.mrf.mxu0
      %v372 = vadd.f32 %v206, %v371
      %v373 = vpop.f32.mrf.mxu0
      %v374 = vadd.f32 %v206, %v373
      %375 = vmatprep.mubr.bf16.mxu0 %v331
      %376 = vmatmul.mubr.bf16.gmra.mxu0 %v232
      %v377 = vpop.f32.mrf.mxu0
      %v378 = vadd.f32 %v211, %v377
      %v379 = vpop.f32.mrf.mxu0
      %v380 = vadd.f32 %v211, %v379
      %v381 = vpop.f32.mrf.mxu0
      %v382 = vadd.f32 %v216, %v381
      %v383 = vpop.f32.mrf.mxu0
      %v384 = vadd.f32 %v216, %v383
      %385 = vdwg.mxu0
      %v386 = vmax.f32 %v368, 0.0
      %v387 = vmax.f32 %v370, 0.0
      %v388 = vmax.f32 %v372, 0.0
      %v389 = vmax.f32 %v374, 0.0
      %v390 = vmax.f32 %v378, 0.0
      %v391 = vmax.f32 %v380, 0.0
      %v392 = vmax.f32 %v382, 0.0
      %v393 = vmax.f32 %v384, 0.0
      %v394 = vadd.f32 %v386, 0.0
      %v395 = vadd.f32 %v387, 0.0
      %v396 = vadd.f32 %v388, 0.0
      %v397 = vadd.f32 %v389, 0.0
      %v398 = vadd.f32 %v390, 0.0
      %v399 = vadd.f32 %v391, 0.0
      %v400 = vadd.f32 %v392, 0.0
      %v401 = vadd.f32 %v393, 0.0
      %s402 = scalar_lea.vmem %s165, 144
      %v403 = vld [vmem:[%s402] sm:$0xff]
      %v404 = vld [vmem:[%s402 + $0x8] sm:$0xff]
      %v405 = vld [vmem:[%s402 + $0x10] sm:$0xff]
      %v406 = vld [vmem:[%s402 + $0x18] sm:$0xff]
      %v407 = vld [vmem:[%s402 + $0x20] sm:$0xff]
      %v408 = vld [vmem:[%s402 + $0x28] sm:$0xff]
      %v409 = vld [vmem:[%s402 + $0x30] sm:$0xff]
      %v410 = vld [vmem:[%s402 + $0x38] sm:$0xff]
      %v411 = vld [vmem:[%s402 + $0x40] sm:$0xff]
      %v412 = vld [vmem:[%s402 + $0x48] sm:$0xff]
      %v413 = vld [vmem:[%s402 + $0x50] sm:$0xff]
      %v414 = vld [vmem:[%s402 + $0x58] sm:$0xff]
      %v415 = vld [vmem:[%s402 + $0x60] sm:$0xff]
      %v416 = vld [vmem:[%s402 + $0x68] sm:$0xff]
      %v417 = vld [vmem:[%s402 + $0x70] sm:$0xff]
      %v418 = vld [vmem:[%s402 + $0x78] sm:$0xff]
      %v419 = vld [vmem:[%s402 + $0x80] sm:$0xff]
      %v420 = vld [vmem:[%s402 + $0x88] sm:$0xff]
      %v439 = vunpack.c.l.b16 %v403
      %v440 = vunpack.c.h.b16 %v403
      %v441 = vunpack.c.l.b16 %v404
      %v442 = vunpack.c.h.b16 %v404
      %v443 = vunpack.c.l.b16 %v405
      %v444 = vunpack.c.h.b16 %v405
      %v445 = vunpack.c.l.b16 %v406
      %v446 = vunpack.c.h.b16 %v406
      %v447 = vunpack.c.l.b16 %v407
      %v448 = vunpack.c.h.b16 %v407
      %v449 = vunpack.c.l.b16 %v408
      %v450 = vunpack.c.h.b16 %v408
      %v451 = vunpack.c.l.b16 %v409
      %v452 = vunpack.c.h.b16 %v409
      %v453 = vunpack.c.l.b16 %v410
      %v454 = vunpack.c.h.b16 %v410
      %v455 = vunpack.c.l.b16 %v411
      %v456 = vunpack.c.h.b16 %v411
      %v457 = vunpack.c.l.b16 %v412
      %v458 = vunpack.c.h.b16 %v412
      %v459 = vunpack.c.l.b16 %v413
      %v460 = vunpack.c.h.b16 %v413
      %v461 = vunpack.c.l.b16 %v414
      %v462 = vunpack.c.h.b16 %v414
      %v463 = vunpack.c.l.b16 %v415
      %v464 = vunpack.c.h.b16 %v415
      %v465 = vunpack.c.l.b16 %v416
      %v466 = vunpack.c.h.b16 %v416
      %v467 = vunpack.c.l.b16 %v417
      %v468 = vunpack.c.h.b16 %v417
      %v469 = vunpack.c.l.b16 %v418
      %v470 = vunpack.c.h.b16 %v418
      %v471 = vunpack.c.l.b16 %v419
      %v472 = vunpack.c.h.b16 %v419
      %v473 = vunpack.c.l.b16 %v420
      %v474 = vunpack.c.h.b16 %v420
      %v475 = vpack.c.b16 %v441, %v439
      %v476 = vpack.c.b16 %v442, %v440
      %v477 = vpack.c.b16 %v445, %v443
      %v478 = vpack.c.b16 %v446, %v444
      %v479 = vpack.c.b16 %v449, %v447
      %v480 = vpack.c.b16 %v450, %v448
      %v481 = vpack.c.b16 %v453, %v451
      %v482 = vpack.c.b16 %v454, %v452
      %v483 = vpack.c.b16 %v457, %v455
      %v484 = vpack.c.b16 %v458, %v456
      %v485 = vpack.c.b16 %v461, %v459
      %v486 = vpack.c.b16 %v462, %v460
      %v487 = vpack.c.b16 %v465, %v463
      %v488 = vpack.c.b16 %v466, %v464
      %v489 = vpack.c.b16 %v469, %v467
      %v490 = vpack.c.b16 %v470, %v468
      %v491 = vpack.c.b16 %v473, %v471
      %v492 = vpack.c.b16 %v474, %v472
      %511 = vmatprep.subr.bf16.mxu0 %v490
      %512 = vmatpush1.bf16.msra.mxu0 %v489
      %513 = vmatprep.subr.bf16.mxu0 %v488
      %514 = vmatpush1.bf16.msra.mxu0 %v487
      %515 = vmatprep.subr.bf16.mxu0 %v486
      %516 = vmatpush1.bf16.msra.mxu0 %v485
      %517 = vmatprep.subr.bf16.mxu0 %v484
      %518 = vmatpush1.bf16.msra.mxu0 %v483
      %519 = vmatprep.subr.bf16.mxu0 %v482
      %520 = vmatpush1.bf16.msra.mxu0 %v481
      %521 = vmatprep.subr.bf16.mxu0 %v480
      %522 = vmatpush1.bf16.msra.mxu0 %v479
      %523 = vmatprep.subr.bf16.mxu0 %v478
      %524 = vmatpush1.bf16.msra.mxu0 %v477
      %525 = vmatprep.subr.bf16.mxu0 %v476
      %526 = vmatpush1.bf16.msra.mxu0 %v475
      %527 = vmatprep.subr.bf16.mxu0 0
      %528 = vmatpush2.bf16.msra.mxu0 0
      %529 = vmatprep.subr.bf16.mxu0 0
      %530 = vmatpush2.bf16.msra.mxu0 0
      %531 = vmatprep.subr.bf16.mxu0 0
      %532 = vmatpush2.bf16.msra.mxu0 0
      %533 = vmatprep.subr.bf16.mxu0 0
      %534 = vmatpush2.bf16.msra.mxu0 0
      %535 = vmatprep.subr.bf16.mxu0 0
      %536 = vmatpush2.bf16.msra.mxu0 0
      %537 = vmatprep.subr.bf16.mxu0 0
      %538 = vmatpush2.bf16.msra.mxu0 0
      %539 = vmatprep.subr.bf16.mxu0 0
      %540 = vmatpush2.bf16.msra.mxu0 0
      %541 = vmatprep.subr.bf16.mxu0 %v492
      %542 = vmatpush2.bf16.msra.mxu0 %v491
      %543 = vmatprep.mubr.bf16.mxu0 %v328
      %544 = vmatmul.mubr.bf16.gmra.mxu0 %v230
      %v545 = vpop.f32.mrf.mxu0
      %v546 = vadd.f32 %v201, %v545
      %v547 = vpop.f32.mrf.mxu0
      %v548 = vadd.f32 %v201, %v547
      %v549 = vpop.f32.mrf.mxu0
      %v550 = vadd.f32 %v206, %v549
      %v551 = vpop.f32.mrf.mxu0
      %v552 = vadd.f32 %v206, %v551
      %553 = vmatprep.mubr.bf16.mxu0 %v331
      %554 = vmatmul.mubr.bf16.gmra.mxu0 %v232
      %v555 = vpop.f32.mrf.mxu0
      %v556 = vadd.f32 %v211, %v555
      %v557 = vpop.f32.mrf.mxu0
      %v558 = vadd.f32 %v211, %v557
      %v559 = vpop.f32.mrf.mxu0
      %v560 = vadd.f32 %v216, %v559
      %v561 = vpop.f32.mrf.mxu0
      %v562 = vadd.f32 %v216, %v561
      %563 = vdwg.mxu0
      %v564 = vmax.f32 %v546, 0.0
      %v565 = vmax.f32 %v548, 0.0
      %v566 = vmax.f32 %v550, 0.0
      %v567 = vmax.f32 %v552, 0.0
      %v568 = vmax.f32 %v556, 0.0
      %v569 = vmax.f32 %v558, 0.0
      %v570 = vmax.f32 %v560, 0.0
      %v571 = vmax.f32 %v562, 0.0
      %v572 = vadd.f32 %v394, %v564
      %v573 = vadd.f32 %v395, %v565
      %v574 = vadd.f32 %v396, %v566
      %v575 = vadd.f32 %v397, %v567
      %v576 = vadd.f32 %v398, %v568
      %v577 = vadd.f32 %v399, %v569
      %v578 = vadd.f32 %v400, %v570
      %v579 = vadd.f32 %v401, %v571
      %s580 = scalar_lea.vmem %s165, 288
      %v581 = vld [vmem:[%s580] sm:$0xff]
      %v582 = vld [vmem:[%s580 + $0x8] sm:$0xff]
      %v583 = vld [vmem:[%s580 + $0x10] sm:$0xff]
      %v584 = vld [vmem:[%s580 + $0x18] sm:$0xff]
      %v585 = vld [vmem:[%s580 + $0x20] sm:$0xff]
      %v586 = vld [vmem:[%s580 + $0x28] sm:$0xff]
      %v587 = vld [vmem:[%s580 + $0x30] sm:$0xff]
      %v588 = vld [vmem:[%s580 + $0x38] sm:$0xff]
      %v589 = vld [vmem:[%s580 + $0x40] sm:$0xff]
      %v590 = vld [vmem:[%s580 + $0x48] sm:$0xff]
      %v591 = vld [vmem:[%s580 + $0x50] sm:$0xff]
      %v592 = vld [vmem:[%s580 + $0x58] sm:$0xff]
      %v593 = vld [vmem:[%s580 + $0x60] sm:$0xff]
      %v594 = vld [vmem:[%s580 + $0x68] sm:$0xff]
      %v595 = vld [vmem:[%s580 + $0x70] sm:$0xff]
      %v596 = vld [vmem:[%s580 + $0x78] sm:$0xff]
      %v597 = vld [vmem:[%s580 + $0x80] sm:$0xff]
      %v598 = vld [vmem:[%s580 + $0x88] sm:$0xff]
      %v617 = vunpack.c.l.b16 %v581
      %v618 = vunpack.c.h.b16 %v581
      %v619 = vunpack.c.l.b16 %v582
      %v620 = vunpack.c.h.b16 %v582
      %v621 = vunpack.c.l.b16 %v583
      %v622 = vunpack.c.h.b16 %v583
      %v623 = vunpack.c.l.b16 %v584
      %v624 = vunpack.c.h.b16 %v584
      %v625 = vunpack.c.l.b16 %v585
      %v626 = vunpack.c.h.b16 %v585
      %v627 = vunpack.c.l.b16 %v586
      %v628 = vunpack.c.h.b16 %v586
      %v629 = vunpack.c.l.b16 %v587
      %v630 = vunpack.c.h.b16 %v587
      %v631 = vunpack.c.l.b16 %v588
      %v632 = vunpack.c.h.b16 %v588
      %v633 = vunpack.c.l.b16 %v589
      %v634 = vunpack.c.h.b16 %v589
      %v635 = vunpack.c.l.b16 %v590
      %v636 = vunpack.c.h.b16 %v590
      %v637 = vunpack.c.l.b16 %v591
      %v638 = vunpack.c.h.b16 %v591
      %v639 = vunpack.c.l.b16 %v592
      %v640 = vunpack.c.h.b16 %v592
      %v641 = vunpack.c.l.b16 %v593
      %v642 = vunpack.c.h.b16 %v593
      %v643 = vunpack.c.l.b16 %v594
      %v644 = vunpack.c.h.b16 %v594
      %v645 = vunpack.c.l.b16 %v595
      %v646 = vunpack.c.h.b16 %v595
      %v647 = vunpack.c.l.b16 %v596
      %v648 = vunpack.c.h.b16 %v596
      %v649 = vunpack.c.l.b16 %v597
      %v650 = vunpack.c.h.b16 %v597
      %v651 = vunpack.c.l.b16 %v598
      %v652 = vunpack.c.h.b16 %v598
      %v653 = vpack.c.b16 %v619, %v617
      %v654 = vpack.c.b16 %v620, %v618
      %v655 = vpack.c.b16 %v623, %v621
      %v656 = vpack.c.b16 %v624, %v622
      %v657 = vpack.c.b16 %v627, %v625
      %v658 = vpack.c.b16 %v628, %v626
      %v659 = vpack.c.b16 %v631, %v629
      %v660 = vpack.c.b16 %v632, %v630
      %v661 = vpack.c.b16 %v635, %v633
      %v662 = vpack.c.b16 %v636, %v634
      %v663 = vpack.c.b16 %v639, %v637
      %v664 = vpack.c.b16 %v640, %v638
      %v665 = vpack.c.b16 %v643, %v641
      %v666 = vpack.c.b16 %v644, %v642
      %v667 = vpack.c.b16 %v647, %v645
      %v668 = vpack.c.b16 %v648, %v646
      %v669 = vpack.c.b16 %v651, %v649
      %v670 = vpack.c.b16 %v652, %v650
      %689 = vmatprep.subr.bf16.mxu0 %v668
      %690 = vmatpush1.bf16.msra.mxu0 %v667
      %691 = vmatprep.subr.bf16.mxu0 %v666
      %692 = vmatpush1.bf16.msra.mxu0 %v665
      %693 = vmatprep.subr.bf16.mxu0 %v664
      %694 = vmatpush1.bf16.msra.mxu0 %v663
      %695 = vmatprep.subr.bf16.mxu0 %v662
      %696 = vmatpush1.bf16.msra.mxu0 %v661
      %697 = vmatprep.subr.bf16.mxu0 %v660
      %698 = vmatpush1.bf16.msra.mxu0 %v659
      %699 = vmatprep.subr.bf16.mxu0 %v658
      %700 = vmatpush1.bf16.msra.mxu0 %v657
      %701 = vmatprep.subr.bf16.mxu0 %v656
      %702 = vmatpush1.bf16.msra.mxu0 %v655
      %703 = vmatprep.subr.bf16.mxu0 %v654
      %704 = vmatpush1.bf16.msra.mxu0 %v653
      %705 = vmatprep.subr.bf16.mxu0 0
      %706 = vmatpush2.bf16.msra.mxu0 0
      %707 = vmatprep.subr.bf16.mxu0 0
      %708 = vmatpush2.bf16.msra.mxu0 0
      %709 = vmatprep.subr.bf16.mxu0 0
      %710 = vmatpush2.bf16.msra.mxu0 0
      %711 = vmatprep.subr.bf16.mxu0 0
      %712 = vmatpush2.bf16.msra.mxu0 0
      %713 = vmatprep.subr.bf16.mxu0 0
      %714 = vmatpush2.bf16.msra.mxu0 0
      %715 = vmatprep.subr.bf16.mxu0 0
      %716 = vmatpush2.bf16.msra.mxu0 0
      %717 = vmatprep.subr.bf16.mxu0 0
      %718 = vmatpush2.bf16.msra.mxu0 0
      %719 = vmatprep.subr.bf16.mxu0 %v670
      %720 = vmatpush2.bf16.msra.mxu0 %v669
      %721 = vmatprep.mubr.bf16.mxu0 %v328
      %722 = vmatmul.mubr.bf16.gmra.mxu0 %v230
      %v723 = vpop.f32.mrf.mxu0
      %v724 = vadd.f32 %v201, %v723
      %v725 = vpop.f32.mrf.mxu0
      %v726 = vadd.f32 %v201, %v725
      %v727 = vpop.f32.mrf.mxu0
      %v728 = vadd.f32 %v206, %v727
      %v729 = vpop.f32.mrf.mxu0
      %v730 = vadd.f32 %v206, %v729
      %731 = vmatprep.mubr.bf16.mxu0 %v331
      %732 = vmatmul.mubr.bf16.gmra.mxu0 %v232
      %v733 = vpop.f32.mrf.mxu0
      %v734 = vadd.f32 %v211, %v733
      %v735 = vpop.f32.mrf.mxu0
      %v736 = vadd.f32 %v211, %v735
      %v737 = vpop.f32.mrf.mxu0
      %v738 = vadd.f32 %v216, %v737
      %v739 = vpop.f32.mrf.mxu0
      %v740 = vadd.f32 %v216, %v739
      %741 = vdwg.mxu0
      %v742 = vmax.f32 %v724, 0.0
      %v743 = vmax.f32 %v726, 0.0
      %v744 = vmax.f32 %v728, 0.0
      %v745 = vmax.f32 %v730, 0.0
      %v746 = vmax.f32 %v734, 0.0
      %v747 = vmax.f32 %v736, 0.0
      %v748 = vmax.f32 %v738, 0.0
      %v749 = vmax.f32 %v740, 0.0
      %v750 = vadd.f32 %v572, %v742
      %v751 = vadd.f32 %v573, %v743
      %v752 = vadd.f32 %v574, %v744
      %v753 = vadd.f32 %v575, %v745
      %v754 = vadd.f32 %v576, %v746
      %v755 = vadd.f32 %v577, %v747
      %v756 = vadd.f32 %v578, %v748
      %v757 = vadd.f32 %v579, %v749
      %s758 = scalar_lea.vmem %s165, 432
      %v759 = vld [vmem:[%s758] sm:$0xff]
      %v760 = vld [vmem:[%s758 + $0x8] sm:$0xff]
      %v761 = vld [vmem:[%s758 + $0x10] sm:$0xff]
      %v762 = vld [vmem:[%s758 + $0x18] sm:$0xff]
      %v763 = vld [vmem:[%s758 + $0x20] sm:$0xff]
      %v764 = vld [vmem:[%s758 + $0x28] sm:$0xff]
      %v765 = vld [vmem:[%s758 + $0x30] sm:$0xff]
      %v766 = vld [vmem:[%s758 + $0x38] sm:$0xff]
      %v767 = vld [vmem:[%s758 + $0x40] sm:$0xff]
      %v768 = vld [vmem:[%s758 + $0x48] sm:$0xff]
      %v769 = vld [vmem:[%s758 + $0x50] sm:$0xff]
      %v770 = vld [vmem:[%s758 + $0x58] sm:$0xff]
      %v771 = vld [vmem:[%s758 + $0x60] sm:$0xff]
      %v772 = vld [vmem:[%s758 + $0x68] sm:$0xff]
      %v773 = vld [vmem:[%s758 + $0x70] sm:$0xff]
      %v774 = vld [vmem:[%s758 + $0x78] sm:$0xff]
      %v775 = vld [vmem:[%s758 + $0x80] sm:$0xff]
      %v776 = vld [vmem:[%s758 + $0x88] sm:$0xff]
      %v795 = vunpack.c.l.b16 %v759
      %v796 = vunpack.c.h.b16 %v759
      %v797 = vunpack.c.l.b16 %v760
      %v798 = vunpack.c.h.b16 %v760
      %v799 = vunpack.c.l.b16 %v761
      %v800 = vunpack.c.h.b16 %v761
      %v801 = vunpack.c.l.b16 %v762
      %v802 = vunpack.c.h.b16 %v762
      %v803 = vunpack.c.l.b16 %v763
      %v804 = vunpack.c.h.b16 %v763
      %v805 = vunpack.c.l.b16 %v764
      %v806 = vunpack.c.h.b16 %v764
      %v807 = vunpack.c.l.b16 %v765
      %v808 = vunpack.c.h.b16 %v765
      %v809 = vunpack.c.l.b16 %v766
      %v810 = vunpack.c.h.b16 %v766
      %v811 = vunpack.c.l.b16 %v767
      %v812 = vunpack.c.h.b16 %v767
      %v813 = vunpack.c.l.b16 %v768
      %v814 = vunpack.c.h.b16 %v768
      %v815 = vunpack.c.l.b16 %v769
      %v816 = vunpack.c.h.b16 %v769
      %v817 = vunpack.c.l.b16 %v770
      %v818 = vunpack.c.h.b16 %v770
      %v819 = vunpack.c.l.b16 %v771
      %v820 = vunpack.c.h.b16 %v771
      %v821 = vunpack.c.l.b16 %v772
      %v822 = vunpack.c.h.b16 %v772
      %v823 = vunpack.c.l.b16 %v773
      %v824 = vunpack.c.h.b16 %v773
      %v825 = vunpack.c.l.b16 %v774
      %v826 = vunpack.c.h.b16 %v774
      %v827 = vunpack.c.l.b16 %v775
      %v828 = vunpack.c.h.b16 %v775
      %v829 = vunpack.c.l.b16 %v776
      %v830 = vunpack.c.h.b16 %v776
      %v831 = vpack.c.b16 %v797, %v795
      %v832 = vpack.c.b16 %v798, %v796
      %v833 = vpack.c.b16 %v801, %v799
      %v834 = vpack.c.b16 %v802, %v800
      %v835 = vpack.c.b16 %v805, %v803
      %v836 = vpack.c.b16 %v806, %v804
      %v837 = vpack.c.b16 %v809, %v807
      %v838 = vpack.c.b16 %v810, %v808
      %v839 = vpack.c.b16 %v813, %v811
      %v840 = vpack.c.b16 %v814, %v812
      %v841 = vpack.c.b16 %v817, %v815
      %v842 = vpack.c.b16 %v818, %v816
      %v843 = vpack.c.b16 %v821, %v819
      %v844 = vpack.c.b16 %v822, %v820
      %v845 = vpack.c.b16 %v825, %v823
      %v846 = vpack.c.b16 %v826, %v824
      %v847 = vpack.c.b16 %v829, %v827
      %v848 = vpack.c.b16 %v830, %v828
      %867 = vmatprep.subr.bf16.mxu0 %v846
      %868 = vmatpush1.bf16.msra.mxu0 %v845
      %869 = vmatprep.subr.bf16.mxu0 %v844
      %870 = vmatpush1.bf16.msra.mxu0 %v843
      %871 = vmatprep.subr.bf16.mxu0 %v842
      %872 = vmatpush1.bf16.msra.mxu0 %v841
      %873 = vmatprep.subr.bf16.mxu0 %v840
      %874 = vmatpush1.bf16.msra.mxu0 %v839
      %875 = vmatprep.subr.bf16.mxu0 %v838
      %876 = vmatpush1.bf16.msra.mxu0 %v837
      %877 = vmatprep.subr.bf16.mxu0 %v836
      %878 = vmatpush1.bf16.msra.mxu0 %v835
      %879 = vmatprep.subr.bf16.mxu0 %v834
      %880 = vmatpush1.bf16.msra.mxu0 %v833
      %881 = vmatprep.subr.bf16.mxu0 %v832
      %882 = vmatpush1.bf16.msra.mxu0 %v831
      %883 = vmatprep.subr.bf16.mxu0 0
      %884 = vmatpush2.bf16.msra.mxu0 0
      %885 = vmatprep.subr.bf16.mxu0 0
      %886 = vmatpush2.bf16.msra.mxu0 0
      %887 = vmatprep.subr.bf16.mxu0 0
      %888 = vmatpush2.bf16.msra.mxu0 0
      %889 = vmatprep.subr.bf16.mxu0 0
      %890 = vmatpush2.bf16.msra.mxu0 0
      %891 = vmatprep.subr.bf16.mxu0 0
      %892 = vmatpush2.bf16.msra.mxu0 0
      %893 = vmatprep.subr.bf16.mxu0 0
      %894 = vmatpush2.bf16.msra.mxu0 0
      %895 = vmatprep.subr.bf16.mxu0 0
      %896 = vmatpush2.bf16.msra.mxu0 0
      %897 = vmatprep.subr.bf16.mxu0 %v848
      %898 = vmatpush2.bf16.msra.mxu0 %v847
      %899 = vmatprep.mubr.bf16.mxu0 %v328
      %900 = vmatmul.mubr.bf16.gmra.mxu0 %v230
      %v901 = vpop.f32.mrf.mxu0
      %v902 = vadd.f32 %v201, %v901
      %v903 = vpop.f32.mrf.mxu0
      %v904 = vadd.f32 %v201, %v903
      %v905 = vpop.f32.mrf.mxu0
      %v906 = vadd.f32 %v206, %v905
      %v907 = vpop.f32.mrf.mxu0
      %v908 = vadd.f32 %v206, %v907
      %909 = vmatprep.mubr.bf16.mxu0 %v331
      %910 = vmatmul.mubr.bf16.gmra.mxu0 %v232
      %v911 = vpop.f32.mrf.mxu0
      %v912 = vadd.f32 %v211, %v911
      %v913 = vpop.f32.mrf.mxu0
      %v914 = vadd.f32 %v211, %v913
      %v915 = vpop.f32.mrf.mxu0
      %v916 = vadd.f32 %v216, %v915
      %v917 = vpop.f32.mrf.mxu0
      %v918 = vadd.f32 %v216, %v917
      %919 = vdwg.mxu0
      %v920 = vmax.f32 %v902, 0.0
      %v921 = vmax.f32 %v904, 0.0
      %v922 = vmax.f32 %v906, 0.0
      %v923 = vmax.f32 %v908, 0.0
      %v924 = vmax.f32 %v912, 0.0
      %v925 = vmax.f32 %v914, 0.0
      %v926 = vmax.f32 %v916, 0.0
      %v927 = vmax.f32 %v918, 0.0
      %v928 = vadd.f32 %v750, %v920
      %v929 = vadd.f32 %v751, %v921
      %v930 = vadd.f32 %v752, %v922
      %v931 = vadd.f32 %v753, %v923
      %v932 = vadd.f32 %v754, %v924
      %v933 = vadd.f32 %v755, %v925
      %v934 = vadd.f32 %v756, %v926
      %v935 = vadd.f32 %v757, %v927
      %v936 = vmul.f32 %v928, 0.25
      %v937 = vmul.f32 %v929, 0.25
      %v938 = vmul.f32 %v930, 0.25
      %v939 = vmul.f32 %v931, 0.25
      %v940 = vmul.f32 %v932, 0.25
      %v941 = vmul.f32 %v933, 0.25
      %v942 = vmul.f32 %v934, 0.25
      %v943 = vmul.f32 %v935, 0.25
      %v944 = vpack.c.bf16 %v938, %v936
      %v945 = vpack.c.bf16 %v939, %v937
      %v946 = vpack.c.bf16 %v942, %v940
      %v947 = vpack.c.bf16 %v943, %v941
      %v952 = vunpack.c.l.b16 %v944
      %v953 = vunpack.c.l.b16 %v945
      %v954 = vunpack.c.h.b16 %v944
      %v955 = vunpack.c.h.b16 %v945
      %v956 = vunpack.c.l.b16 %v946
      %v957 = vunpack.c.l.b16 %v947
      %v958 = vunpack.c.h.b16 %v946
      %v959 = vunpack.c.h.b16 %v947
      %v960 = vpack.c.b16 %v953, %v952
      %v961 = vpack.c.b16 %v955, %v954
      %v962 = vpack.c.b16 %v957, %v956
      %v963 = vpack.c.b16 %v959, %v958
      %vm968 = vcmask 1043456
      %vm969 = vcmask 556036
      %vm970 = vmor %vm969, %vm968
      %971 = vst.msk [vmem:[%s170] sm:$0xff] %vm970, %v960
      %972 = vst.msk [vmem:[%s170 + $0x8] sm:$0xff] %vm970, %v961
      %973 = vst.msk [vmem:[%s170 + $0x10] sm:$0xff] %vm970, %v962
      %974 = vst.msk [vmem:[%s170 + $0x18] sm:$0xff] %vm970, %v963
      %p975 = scmp.lt.s32.totalorder %s14, 1
      %s976 = scalar_select %p975, %s14, 1
      %s977 = smul.addr %s976, 8
      %s978 = smul.addr %s977, 4
      %s979 = scalar_lea.vmem %s3, %s978
      // Predicated region
      $region33: #{firenet_forward.5} parent=31 // pred_check
        %p980 = pneg %p100
      $region34: #{firenet_forward.5} parent=31 // pred_check_branch
        %982 = sbr.rel (%p980) target = $region36
      $region35: #{firenet_forward.5} parent=31 // pred_region
        _
      $region36: #{firenet_forward.5} parent=31 // pred_fallthru
        _
    $region32: #{firenet_forward.5} parent=5 // pred_fallthru
      _
    %p983 = scmp.le.s32.totalorder 2, %s9
    // Predicated region
    $region37: #{firenet_forward.5} parent=5 // pred_check
      %p984 = pneg %p983
    $region38: #{firenet_forward.5} parent=5 // pred_check_branch
      %986 = sbr.rel (%p984) target = $region40
    $region39: #{firenet_forward.5} parent=5 // pred_region
      %s987 = ssub.s32 %s9, 2
      // Predicated region
      $region41: #{firenet_forward.5} parent=39 // pred_check
        %p988 = pneg %p106
      $region42: #{firenet_forward.5} parent=39 // pred_check_branch
        %990 = sbr.rel (%p988) target = $region44
      $region43: #{firenet_forward.5} parent=39 // pred_region
        %p991 = scmp.lt.s32.totalorder %s15, 1
        %s992 = scalar_select %p991, %s15, 1
        %s993 = smul.addr %s992, 8
        %s994 = smul.addr %s993, 4
        %s995 = scalar_lea.vmem %s3, %s994
      $region44: #{firenet_forward.5} parent=39 // pred_fallthru
        _
    $region40: #{firenet_forward.5} parent=5 // pred_fallthru
      _
  $region6: #{firenet_forward.5} parent=0 // loop_footer
    %s13 = sadd.s32 1, %s9
  $region7: #{firenet_forward.5} parent=0 // loop_footer_branch
    %8 = sbr.rel target = $region3
  $region8: #{firenet_forward.5} parent=0 // loop_exit
    _

// kernel: firenet_forward.6
$region0: #{firenet_forward.6}
  #allocation0 [shape = 'u32[]', space=smem, size = 0x4, offset = 0x4, fixed_abs, tag = 'smem constant byte address 0x4 - core index']
  #allocation1 [shape = 'u32[144,128]{1,0:T(1,128)}', space=vmem, size = 0x12000, scoped, tag = 'internal scratch']
  %s0 = inlined_call_operand.vmem [shape: bf16[2,4,288,36], index: 0, kind: input, shape index: {}]
  %s1 = inlined_call_operand.vmem [shape: bf16[64,288], index: 1, kind: input, shape index: {}]
  %s2 = inlined_call_operand.vmem [shape: f32[64,1], index: 2, kind: input, shape index: {}]
  %s3 = inlined_call_operand.vmem [shape: bf16[2,64,36], index: 3, kind: output, shape index: {}]
  %s4 = sld [smem:[#allocation0]]
  $region45: #{firenet_forward.6} parent=0
    _
  %s6 = ssub.s32 1, %s4
  %s7 = scalar_select 0, %s6, %s4
  loop: start=0, step=1, limit=4
  $region2: #{firenet_forward.6} parent=0 // loop_pre_header
    _
  $region3: #{firenet_forward.6} parent=0 // loop_header
    %s9 = sphi 0, %s13
    %p10 = scmp.ge.s32.totalorder %s9, 4
    %s19 = sphi 0, %s21
    %s22 = sphi 0, %s19
    %s23 = sphi 0, %s22
    %s39 = sphi 0, %s23
    %s43 = sphi 0, %s43
    %s45 = sphi 0, %s43
    %s46 = sphi 0, %s45
    %s60 = sphi 0, %s46
    %s64 = sphi 0, %s64
    %s66 = sphi 0, %s64
    %s67 = sphi 0, %s66
    %s81 = sphi 0, %s67
    %s87 = sphi 0, %s89
    %s90 = sphi 0, %s87
    %s91 = sphi 0, %s90
    %s107 = sphi 0, %s91
  $region4: #{firenet_forward.6} parent=0 // loop_header_branch
    %12 = sbr.rel (%p10) target = $region8
  $region5: #{firenet_forward.6} parent=0 // loop_body
    %s14 = ssub.s32 %s9, 1
    %s15 = ssub.s32 %s9, 2
    %s16 = sadd.s32 %s9, 1
    %s17 = ssub.s32 %s9, %s16
    %p18 = scmp.eq.s32.totalorder %s17, 0
    %s20 = sadd.s32 %s19, 1
    %s21 = scalar_select %p18, %s19, %s20
    %p24 = pneg %p18
    %p25 = scmp.eq.s32.totalorder %s9, 1
    %p26 = por %p24, %p25
    %p27 = scmp.ne.s32.totalorder %s19, %s22
    %p28 = scmp.eq.s32.totalorder %s9, 0
    %p29 = por %p27, %p28
    %p30 = scmp.ne.s32.totalorder %s19, %s22
    %p31 = scmp.eq.s32.totalorder %s14, 1
    %p32 = por %p30, %p31
    %p33 = scmp.ne.s32.totalorder %s22, %s23
    %p34 = scmp.eq.s32.totalorder %s14, 0
    %p35 = por %p33, %p34
    %p36 = scmp.ne.s32.totalorder %s22, %s23
    %p37 = scmp.eq.s32.totalorder %s15, 1
    %p38 = por %p36, %p37
    %p40 = scmp.ne.s32.totalorder %s23, %s39
    %p41 = scmp.eq.s32.totalorder %s15, 0
    %p42 = por %p40, %p41
    %s44 = sadd.s32 %s43, 1
    %p47 = scmp.eq.s32.totalorder %s9, 1
    %p48 = scmp.ne.s32.totalorder %s43, %s45
    %p49 = scmp.eq.s32.totalorder %s9, 0
    %p50 = por %p48, %p49
    %p51 = scmp.ne.s32.totalorder %s43, %s45
    %p52 = scmp.eq.s32.totalorder %s14, 1
    %p53 = por %p51, %p52
    %p54 = scmp.ne.s32.totalorder %s45, %s46
    %p55 = scmp.eq.s32.totalorder %s14, 0
    %p56 = por %p54, %p55
    %p57 = scmp.ne.s32.totalorder %s45, %s46
    %p58 = scmp.eq.s32.totalorder %s15, 1
    %p59 = por %p57, %p58
    %p61 = scmp.ne.s32.totalorder %s46, %s60
    %p62 = scmp.eq.s32.totalorder %s15, 0
    %p63 = por %p61, %p62
    %s65 = sadd.s32 %s64, 1
    %p68 = scmp.eq.s32.totalorder %s9, 1
    %p69 = scmp.ne.s32.totalorder %s64, %s66
    %p70 = scmp.eq.s32.totalorder %s9, 0
    %p71 = por %p69, %p70
    %p72 = scmp.ne.s32.totalorder %s64, %s66
    %p73 = scmp.eq.s32.totalorder %s14, 1
    %p74 = por %p72, %p73
    %p75 = scmp.ne.s32.totalorder %s66, %s67
    %p76 = scmp.eq.s32.totalorder %s14, 0
    %p77 = por %p75, %p76
    %p78 = scmp.ne.s32.totalorder %s66, %s67
    %p79 = scmp.eq.s32.totalorder %s15, 1
    %p80 = por %p78, %p79
    %p82 = scmp.ne.s32.totalorder %s67, %s81
    %p83 = scmp.eq.s32.totalorder %s15, 0
    %p84 = por %p82, %p83
    %s85 = ssub.s32 %s9, %s16
    %p86 = scmp.eq.s32.totalorder %s85, 0
    %s88 = sadd.s32 %s87, 1
    %s89 = scalar_select %p86, %s87, %s88
    %p92 = pneg %p86
    %p93 = scmp.eq.s32.totalorder %s9, 1
    %p94 = por %p92, %p93
    %p95 = scmp.ne.s32.totalorder %s87, %s90
    %p96 = scmp.eq.s32.totalorder %s9, 0
    %p97 = por %p95, %p96
    %p98 = scmp.ne.s32.totalorder %s87, %s90
    %p99 = scmp.eq.s32.totalorder %s14, 1
    %p100 = por %p98, %p99
    %p101 = scmp.ne.s32.totalorder %s90, %s91
    %p102 = scmp.eq.s32.totalorder %s14, 0
    %p103 = por %p101, %p102
    %p104 = scmp.ne.s32.totalorder %s90, %s91
    %p105 = scmp.eq.s32.totalorder %s15, 1
    %p106 = por %p104, %p105
    %p108 = scmp.ne.s32.totalorder %s91, %s107
    %p109 = scmp.eq.s32.totalorder %s15, 0
    %p110 = por %p108, %p109
    %p111 = scmp.le.s32.totalorder 1, %s9
    %p112 = scmp.lt.s32.totalorder %s9, 3
    %p113 = pnand %p111, %p112
    %p114 = pneg %p113
    // Predicated region
    $region9: #{firenet_forward.6} parent=5 // pred_check
      _
    $region10: #{firenet_forward.6} parent=5 // pred_check_branch
      %116 = sbr.rel (%p113) target = $region12
    $region11: #{firenet_forward.6} parent=5 // pred_region
      %s117 = ssub.s32 %s9, 1
      // Predicated region
      $region13: #{firenet_forward.6} parent=11 // pred_check
        %p118 = pneg %p56
      $region14: #{firenet_forward.6} parent=11 // pred_check_branch
        %120 = sbr.rel (%p118) target = $region16
      $region15: #{firenet_forward.6} parent=11 // pred_region
        _
      $region16: #{firenet_forward.6} parent=11 // pred_fallthru
        _
      // Predicated region
      $region17: #{firenet_forward.6} parent=11 // pred_check
        %p121 = pneg %p77
      $region18: #{firenet_forward.6} parent=11 // pred_check_branch
        %123 = sbr.rel (%p121) target = $region20
      $region19: #{firenet_forward.6} parent=11 // pred_region
        _
      $region20: #{firenet_forward.6} parent=11 // pred_fallthru
        _
    $region12: #{firenet_forward.6} parent=5 // pred_fallthru
      _
    %p124 = scmp.lt.s32.totalorder %s9, 2
    // Predicated region
    $region21: #{firenet_forward.6} parent=5 // pred_check
      %p125 = pneg %p124
    $region22: #{firenet_forward.6} parent=5 // pred_check_branch
      %127 = sbr.rel (%p125) target = $region24
    $region23: #{firenet_forward.6} parent=5 // pred_region
      // Predicated region
      $region25: #{firenet_forward.6} parent=23 // pred_check
        %p128 = pneg %p29
      $region26: #{firenet_forward.6} parent=23 // pred_check_branch
        %130 = sbr.rel (%p128) target = $region28
      $region27: #{firenet_forward.6} parent=23 // pred_region
        %p131 = scmp.lt.s32.totalorder %s9, 1
        %s132 = scalar_select %p131, %s9, 1
        %s133 = smul.addr %s132, 144
        %s134 = smul.addr %s133, 4
        %s135 = scalar_lea.vmem %s0, %s134
      $region28: #{firenet_forward.6} parent=23 // pred_fallthru
        _
    $region24: #{firenet_forward.6} parent=5 // pred_fallthru
      _
    %p136 = scmp.le.s32.totalorder 1, %s9
    %p137 = scmp.lt.s32.totalorder %s9, 3
    %p138 = pnand %p136, %p137
    %p139 = pneg %p138
    // Predicated region
    $region29: #{firenet_forward.6} parent=5 // pred_check
      _
    $region30: #{firenet_forward.6} parent=5 // pred_check_branch
      %141 = sbr.rel (%p138) target = $region32
    $region31: #{firenet_forward.6} parent=5 // pred_region
      %s142 = ssub.s32 %s9, 1
      %p143 = scmp.lt.s32.totalorder %s14, 1
      %s144 = scalar_select %p143, %s14, 1
      %s145 = smul.addr %s144, 144
      %s146 = smul.addr %s145, 4
      %s147 = scalar_lea.vmem %s0, %s146
      %p148 = pneg %p35
      %p149 = pneg %p32
      %p150 = pneg %p56
      %p151 = pneg %p53
      %p152 = pneg %p77
      %p153 = pneg %p74
      %p154 = pneg %p103
      %p155 = pneg %p100
      %p156 = scmp.lt.s32.totalorder %s14, 1
      %s157 = scalar_select %p156, %s14, 1
      %s158 = smul.addr %s157, 8
      %s159 = smul.addr %s158, 4
      %s160 = scalar_lea.vmem %s3, %s159
      %p161 = scmp.lt.s32.totalorder %s14, 1
      %s162 = scalar_select %p161, %s14, 1
      %s163 = smul.addr %s162, 144
      %s164 = smul.addr %s163, 4
      %s165 = scalar_lea.vmem %s0, %s164
      %p166 = scmp.lt.s32.totalorder %s14, 1
      %s167 = scalar_select %p166, %s14, 1
      %s168 = smul.addr %s167, 8
      %s169 = smul.addr %s168, 4
      %s170 = scalar_lea.vmem %s3, %s169
      %v172 = vld [vmem:[%s1] sm:$0xff]
      %v173 = vld [vmem:[%s1 + $0x8] sm:$0xf]
      %v174 = vld [vmem:[%s1 + $0xc] sm:$0xff]
      %v175 = vld [vmem:[%s1 + $0x14] sm:$0xf]
      %v176 = vld [vmem:[%s1 + $0x18] sm:$0xff]
      %v177 = vld [vmem:[%s1 + $0x20] sm:$0xf]
      %v178 = vld [vmem:[%s1 + $0x24] sm:$0xff]
      %v179 = vld [vmem:[%s1 + $0x2c] sm:$0xf]
      %v180 = vld [vmem:[%s1 + $0x30] sm:$0xff]
      %v181 = vld [vmem:[%s1 + $0x38] sm:$0xf]
      %v182 = vld [vmem:[%s1 + $0x3c] sm:$0xff]
      %v183 = vld [vmem:[%s1 + $0x44] sm:$0xf]
      %v184 = vld [vmem:[%s1 + $0x48] sm:$0xff]
      %v185 = vld [vmem:[%s1 + $0x50] sm:$0xf]
      %v186 = vld [vmem:[%s1 + $0x54] sm:$0xff]
      %v187 = vld [vmem:[%s1 + $0x5c] sm:$0xf]
      %v188 = vld [vmem:[%s2] sm:$0xff]
      %v189 = vld [vmem:[%s2 + $0x8] sm:$0xff]
      %v190 = vld [vmem:[%s2 + $0x10] sm:$0xff]
      %v191 = vld [vmem:[%s2 + $0x18] sm:$0xff]
      %v192 = vld [vmem:[%s2 + $0x20] sm:$0xff]
      %v193 = vld [vmem:[%s2 + $0x28] sm:$0xff]
      %v194 = vld [vmem:[%s2 + $0x30] sm:$0xff]
      %v195 = vld [vmem:[%s2 + $0x38] sm:$0xff]
      %v196 = vld [vmem:[%s165] sm:$0xf]
      %v197 = vld [vmem:[%s165 + $0x4] sm:$0xf]
      %v198 = vld [vmem:[%s165 + $0x8] sm:$0xf]
      %v199 = vld [vmem:[%s165 + $0xc] sm:$0xf]
      %v200 = vld [vmem:[%s165 + $0x10] sm:$0xf]
      %v201 = vld [vmem:[%s165 + $0x14] sm:$0xf]
      %v202 = vld [vmem:[%s165 + $0x18] sm:$0xf]
      %v203 = vld [vmem:[%s165 + $0x1c] sm:$0xf]
      %v204 = vld [vmem:[%s165 + $0x20] sm:$0xf]
      %v205 = vld [vmem:[%s165 + $0x24] sm:$0xf]
      %v206 = vld [vmem:[%s165 + $0x28] sm:$0xf]
      %v207 = vld [vmem:[%s165 + $0x2c] sm:$0xf]
      %v208 = vld [vmem:[%s165 + $0x30] sm:$0xf]
      %v209 = vld [vmem:[%s165 + $0x34] sm:$0xf]
      %v210 = vld [vmem:[%s165 + $0x38] sm:$0xf]
      %v211 = vld [vmem:[%s165 + $0x3c] sm:$0xf]
      %v212 = vld [vmem:[%s165 + $0x40] sm:$0xf]
      %v213 = vld [vmem:[%s165 + $0x44] sm:$0xf]
      %v214 = vld [vmem:[%s165 + $0x48] sm:$0xf]
      %v215 = vld [vmem:[%s165 + $0x4c] sm:$0xf]
      %v216 = vld [vmem:[%s165 + $0x50] sm:$0xf]
      %v217 = vld [vmem:[%s165 + $0x54] sm:$0xf]
      %v218 = vld [vmem:[%s165 + $0x58] sm:$0xf]
      %v219 = vld [vmem:[%s165 + $0x5c] sm:$0xf]
      %v220 = vld [vmem:[%s165 + $0x60] sm:$0xf]
      %v221 = vld [vmem:[%s165 + $0x64] sm:$0xf]
      %v222 = vld [vmem:[%s165 + $0x68] sm:$0xf]
      %v223 = vld [vmem:[%s165 + $0x6c] sm:$0xf]
      %v224 = vld [vmem:[%s165 + $0x70] sm:$0xf]
      %v225 = vld [vmem:[%s165 + $0x74] sm:$0xf]
      %v226 = vld [vmem:[%s165 + $0x78] sm:$0xf]
      %v227 = vld [vmem:[%s165 + $0x7c] sm:$0xf]
      %v228 = vld [vmem:[%s165 + $0x80] sm:$0xf]
      %v229 = vld [vmem:[%s165 + $0x84] sm:$0xf]
      %v230 = vld [vmem:[%s165 + $0x88] sm:$0xf]
      %v231 = vld [vmem:[%s165 + $0x8c] sm:$0xf]
      %233 = vset.pattern.permute.xlu0 0
      %234 = vperm.xlu0 %233, %v188
      %v235 = vpop.permute.xlu0 %234
      %238 = vset.pattern.permute.xlu0 0
      %239 = vperm.xlu0 %238, %v189
      %v240 = vpop.permute.xlu0 %239
      %243 = vset.pattern.permute.xlu0 0
      %244 = vperm.xlu0 %243, %v190
      %v245 = vpop.permute.xlu0 %244
      %248 = vset.pattern.permute.xlu0 0
      %249 = vperm.xlu0 %248, %v191
      %v250 = vpop.permute.xlu0 %249
      %253 = vset.pattern.permute.xlu0 0
      %254 = vperm.xlu0 %253, %v192
      %v255 = vpop.permute.xlu0 %254
      %258 = vset.pattern.permute.xlu0 0
      %259 = vperm.xlu0 %258, %v193
      %v260 = vpop.permute.xlu0 %259
      %263 = vset.pattern.permute.xlu0 0
      %264 = vperm.xlu0 %263, %v194
      %v265 = vpop.permute.xlu0 %264
      %268 = vset.pattern.permute.xlu0 0
      %269 = vperm.xlu0 %268, %v195
      %v270 = vpop.permute.xlu0 %269
      %v288 = vunpack.c.l.b16 %v172
      %v289 = vunpack.c.h.b16 %v172
      %v290 = vunpack.c.l.b16 %v173
      %v291 = vunpack.c.l.b16 %v174
      %v292 = vunpack.c.h.b16 %v174
      %v293 = vunpack.c.l.b16 %v175
      %v294 = vunpack.c.l.b16 %v176
      %v295 = vunpack.c.h.b16 %v176
      %v296 = vunpack.c.l.b16 %v177
      %v297 = vunpack.c.l.b16 %v178
      %v298 = vunpack.c.h.b16 %v178
      %v299 = vunpack.c.l.b16 %v179
      %v300 = vunpack.c.l.b16 %v180
      %v301 = vunpack.c.h.b16 %v180
      %v302 = vunpack.c.l.b16 %v181
      %v303 = vunpack.c.l.b16 %v182
      %v304 = vunpack.c.h.b16 %v182
      %v305 = vunpack.c.l.b16 %v183
      %v306 = vunpack.c.l.b16 %v184
      %v307 = vunpack.c.h.b16 %v184
      %v308 = vunpack.c.l.b16 %v185
      %v309 = vunpack.c.l.b16 %v186
      %v310 = vunpack.c.h.b16 %v186
      %v311 = vunpack.c.l.b16 %v187
      %v312 = vpack.c.b16 %v291, %v288
      %v313 = vpack.c.b16 %v292, %v289
      %v314 = vpack.c.b16 %v293, %v290
      %v315 = vpack.c.b16 %v297, %v294
      %v316 = vpack.c.b16 %v298, %v295
      %v317 = vpack.c.b16 %v299, %v296
      %v318 = vpack.c.b16 %v303, %v300
      %v319 = vpack.c.b16 %v304, %v301
      %v320 = vpack.c.b16 %v305, %v302
      %v321 = vpack.c.b16 %v309, %v306
      %v322 = vpack.c.b16 %v310, %v307
      %v323 = vpack.c.b16 %v311, %v308
      %v368 = vunpack.c.l.b16 %v196
      %v369 = vunpack.c.l.b16 %v197
      %v370 = vunpack.c.l.b16 %v198
      %v371 = vunpack.c.l.b16 %v199
      %v372 = vunpack.c.l.b16 %v200
      %v373 = vunpack.c.l.b16 %v201
      %v374 = vunpack.c.l.b16 %v202
      %v375 = vunpack.c.l.b16 %v203
      %v376 = vunpack.c.l.b16 %v204
      %v377 = vunpack.c.l.b16 %v205
      %v378 = vunpack.c.l.b16 %v206
      %v379 = vunpack.c.l.b16 %v207
      %v380 = vunpack.c.l.b16 %v208
      %v381 = vunpack.c.l.b16 %v209
      %v382 = vunpack.c.l.b16 %v210
      %v383 = vunpack.c.l.b16 %v211
      %v384 = vunpack.c.l.b16 %v212
      %v385 = vunpack.c.l.b16 %v213
      %v386 = vunpack.c.l.b16 %v214
      %v387 = vunpack.c.l.b16 %v215
      %v388 = vunpack.c.l.b16 %v216
      %v389 = vunpack.c.l.b16 %v217
      %v390 = vunpack.c.l.b16 %v218
      %v391 = vunpack.c.l.b16 %v219
      %v392 = vunpack.c.l.b16 %v220
      %v393 = vunpack.c.l.b16 %v221
      %v394 = vunpack.c.l.b16 %v222
      %v395 = vunpack.c.l.b16 %v223
      %v396 = vunpack.c.l.b16 %v224
      %v397 = vunpack.c.l.b16 %v225
      %v398 = vunpack.c.l.b16 %v226
      %v399 = vunpack.c.l.b16 %v227
      %v400 = vunpack.c.l.b16 %v228
      %v401 = vunpack.c.l.b16 %v229
      %v402 = vunpack.c.l.b16 %v230
      %v403 = vunpack.c.l.b16 %v231
      %v404 = vpack.c.b16 %v369, %v368
      %v405 = vpack.c.b16 %v371, %v370
      %v406 = vpack.c.b16 %v373, %v372
      %v407 = vpack.c.b16 %v375, %v374
      %v408 = vpack.c.b16 %v377, %v376
      %v409 = vpack.c.b16 %v379, %v378
      %v410 = vpack.c.b16 %v381, %v380
      %v411 = vpack.c.b16 %v383, %v382
      %v412 = vpack.c.b16 %v385, %v384
      %v413 = vpack.c.b16 %v387, %v386
      %v414 = vpack.c.b16 %v389, %v388
      %v415 = vpack.c.b16 %v391, %v390
      %v416 = vpack.c.b16 %v393, %v392
      %v417 = vpack.c.b16 %v395, %v394
      %v418 = vpack.c.b16 %v397, %v396
      %v419 = vpack.c.b16 %v399, %v398
      %v420 = vpack.c.b16 %v401, %v400
      %v421 = vpack.c.b16 %v403, %v402
      %vm440 = vcmask 261120
      %v442 = vsel %vm440, %v314, 0
      %v445 = vsel %vm440, %v317, 0
      %v448 = vsel %vm440, %v320, 0
      %v451 = vsel %vm440, %v323, 0
      %453 = vmatprep.subr.bf16.mxu0 0
      %454 = vmatpush1.bf16.msra.mxu0 %v411
      %455 = vmatprep.subr.bf16.mxu0 0
      %456 = vmatpush1.bf16.msra.mxu0 %v410
      %457 = vmatprep.subr.bf16.mxu0 0
      %458 = vmatpush1.bf16.msra.mxu0 %v409
      %459 = vmatprep.subr.bf16.mxu0 0
      %460 = vmatpush1.bf16.msra.mxu0 %v408
      %461 = vmatprep.subr.bf16.mxu0 0
      %462 = vmatpush1.bf16.msra.mxu0 %v407
      %463 = vmatprep.subr.bf16.mxu0 0
      %464 = vmatpush1.bf16.msra.mxu0 %v406
      %465 = vmatprep.subr.bf16.mxu0 0
      %466 = vmatpush1.bf16.msra.mxu0 %v405
      %467 = vmatprep.subr.bf16.mxu0 0
      %468 = vmatpush1.bf16.msra.mxu0 %v404
      %469 = vmatprep.subr.bf16.mxu0 0
      %470 = vmatpush2.bf16.msra.mxu0 %v419
      %471 = vmatprep.subr.bf16.mxu0 0
      %472 = vmatpush2.bf16.msra.mxu0 %v418
      %473 = vmatprep.subr.bf16.mxu0 0
      %474 = vmatpush2.bf16.msra.mxu0 %v417
      %475 = vmatprep.subr.bf16.mxu0 0
      %476 = vmatpush2.bf16.msra.mxu0 %v416
      %477 = vmatprep.subr.bf16.mxu0 0
      %478 = vmatpush2.bf16.msra.mxu0 %v415
      %479 = vmatprep.subr.bf16.mxu0 0
      %480 = vmatpush2.bf16.msra.mxu0 %v414
      %481 = vmatprep.subr.bf16.mxu0 0
      %482 = vmatpush2.bf16.msra.mxu0 %v413
      %483 = vmatprep.subr.bf16.mxu0 0
      %484 = vmatpush2.bf16.msra.mxu0 %v412
      %485 = vmatprep.mubr.bf16.mxu0 %v313
      %486 = vmatmul.mubr.bf16.gmra.mxu0 %v312
      %v487 = vpop.f32.mrf.mxu0
      %v488 = vadd.f32 %v235, %v487
      %v489 = vpop.f32.mrf.mxu0
      %v490 = vpop.f32.mrf.mxu0
      %v491 = vadd.f32 %v240, %v490
      %v492 = vpop.f32.mrf.mxu0
      %493 = vmatprep.mubr.bf16.mxu0 %v316
      %494 = vmatmul.mubr.bf16.gmra.mxu0 %v315
      %v495 = vpop.f32.mrf.mxu0
      %v496 = vadd.f32 %v245, %v495
      %v497 = vpop.f32.mrf.mxu0
      %v498 = vpop.f32.mrf.mxu0
      %v499 = vadd.f32 %v250, %v498
      %v500 = vpop.f32.mrf.mxu0
      %501 = vmatprep.mubr.bf16.mxu0 %v319
      %502 = vmatmul.mubr.bf16.gmra.mxu0 %v318
      %v503 = vpop.f32.mrf.mxu0
      %v504 = vadd.f32 %v255, %v503
      %v505 = vpop.f32.mrf.mxu0
      %v506 = vpop.f32.mrf.mxu0
      %v507 = vadd.f32 %v260, %v506
      %v508 = vpop.f32.mrf.mxu0
      %509 = vmatprep.mubr.bf16.mxu0 %v322
      %510 = vmatmul.mubr.bf16.gmra.mxu0 %v321
      %v511 = vpop.f32.mrf.mxu0
      %v512 = vadd.f32 %v265, %v511
      %v513 = vpop.f32.mrf.mxu0
      %v514 = vpop.f32.mrf.mxu0
      %v515 = vadd.f32 %v270, %v514
      %v516 = vpop.f32.mrf.mxu0
      %517 = vdwg.mxu0
      %518 = vmatprep.subr.bf16.mxu0 0
      %519 = vmatpush1.bf16.msra.mxu0 0
      %520 = vmatprep.subr.bf16.mxu0 0
      %521 = vmatpush1.bf16.msra.mxu0 0
      %522 = vmatprep.subr.bf16.mxu0 0
      %523 = vmatpush1.bf16.msra.mxu0 0
      %524 = vmatprep.subr.bf16.mxu0 0
      %525 = vmatpush1.bf16.msra.mxu0 0
      %526 = vmatprep.subr.bf16.mxu0 0
      %527 = vmatpush1.bf16.msra.mxu0 0
      %528 = vmatprep.subr.bf16.mxu0 0
      %529 = vmatpush1.bf16.msra.mxu0 0
      %530 = vmatprep.subr.bf16.mxu0 0
      %531 = vmatpush1.bf16.msra.mxu0 %v421
      %532 = vmatprep.subr.bf16.mxu0 0
      %533 = vmatpush1.bf16.msra.mxu0 %v420
      %534 = vmatprep.subr.bf16.mxu0 0
      %535 = vmatpush2.bf16.msra.mxu0 0
      %536 = vmatprep.subr.bf16.mxu0 0
      %537 = vmatpush2.bf16.msra.mxu0 0
      %538 = vmatprep.subr.bf16.mxu0 0
      %539 = vmatpush2.bf16.msra.mxu0 0
      %540 = vmatprep.subr.bf16.mxu0 0
      %541 = vmatpush2.bf16.msra.mxu0 0
      %542 = vmatprep.subr.bf16.mxu0 0
      %543 = vmatpush2.bf16.msra.mxu0 0
      %544 = vmatprep.subr.bf16.mxu0 0
      %545 = vmatpush2.bf16.msra.mxu0 0
      %546 = vmatprep.subr.bf16.mxu0 0
      %547 = vmatpush2.bf16.msra.mxu0 0
      %548 = vmatprep.subr.bf16.mxu0 0
      %549 = vmatpush2.bf16.msra.mxu0 0
      %550 = vmatprep.mubr.bf16.mxu0 0
      %551 = vmatmul.mubr.bf16.gmra.mxu0 %v442
      %v552 = vpop.f32.mrf.mxu0
      %v553 = vadd.f32 %v488, %v552
      %v554 = vpop.f32.mrf.mxu0
      %v555 = vpop.f32.mrf.mxu0
      %v556 = vadd.f32 %v491, %v555
      %v557 = vpop.f32.mrf.mxu0
      %558 = vmatprep.mubr.bf16.mxu0 0
      %559 = vmatmul.mubr.bf16.gmra.mxu0 %v445
      %v560 = vpop.f32.mrf.mxu0
      %v561 = vadd.f32 %v496, %v560
      %v562 = vpop.f32.mrf.mxu0
      %v563 = vpop.f32.mrf.mxu0
      %v564 = vadd.f32 %v499, %v563
      %v565 = vpop.f32.mrf.mxu0
      %566 = vmatprep.mubr.bf16.mxu0 0
      %567 = vmatmul.mubr.bf16.gmra.mxu0 %v448
      %v568 = vpop.f32.mrf.mxu0
      %v569 = vadd.f32 %v504, %v568
      %v570 = vpop.f32.mrf.mxu0
      %v571 = vpop.f32.mrf.mxu0
      %v572 = vadd.f32 %v507, %v571
      %v573 = vpop.f32.mrf.mxu0
      %574 = vmatprep.mubr.bf16.mxu0 0
      %575 = vmatmul.mubr.bf16.gmra.mxu0 %v451
      %v576 = vpop.f32.mrf.mxu0
      %v577 = vadd.f32 %v512, %v576
      %v578 = vpop.f32.mrf.mxu0
      %v579 = vpop.f32.mrf.mxu0
      %v580 = vadd.f32 %v515, %v579
      %v581 = vpop.f32.mrf.mxu0
      %582 = vdwg.mxu0
      %v583 = vmax.f32 %v553, 0.0
      %v584 = vmax.f32 %v556, 0.0
      %v585 = vmax.f32 %v561, 0.0
      %v586 = vmax.f32 %v564, 0.0
      %v587 = vmax.f32 %v569, 0.0
      %v588 = vmax.f32 %v572, 0.0
      %v589 = vmax.f32 %v577, 0.0
      %v590 = vmax.f32 %v580, 0.0
      %v591 = vadd.f32 %v583, 0.0
      %v592 = vadd.f32 %v584, 0.0
      %v593 = vadd.f32 %v585, 0.0
      %v594 = vadd.f32 %v586, 0.0
      %v595 = vadd.f32 %v587, 0.0
      %v596 = vadd.f32 %v588, 0.0
      %v597 = vadd.f32 %v589, 0.0
      %v598 = vadd.f32 %v590, 0.0
      %s599 = scalar_lea.vmem %s165, 144
      %v600 = vld [vmem:[%s599] sm:$0xf]
      %v601 = vld [vmem:[%s599 + $0x4] sm:$0xf]
      %v602 = vld [vmem:[%s599 + $0x8] sm:$0xf]
      %v603 = vld [vmem:[%s599 + $0xc] sm:$0xf]
      %v604 = vld [vmem:[%s599 + $0x10] sm:$0xf]
      %v605 = vld [vmem:[%s599 + $0x14] sm:$0xf]
      %v606 = vld [vmem:[%s599 + $0x18] sm:$0xf]
      %v607 = vld [vmem:[%s599 + $0x1c] sm:$0xf]
      %v608 = vld [vmem:[%s599 + $0x20] sm:$0xf]
      %v609 = vld [vmem:[%s599 + $0x24] sm:$0xf]
      %v610 = vld [vmem:[%s599 + $0x28] sm:$0xf]
      %v611 = vld [vmem:[%s599 + $0x2c] sm:$0xf]
      %v612 = vld [vmem:[%s599 + $0x30] sm:$0xf]
      %v613 = vld [vmem:[%s599 + $0x34] sm:$0xf]
      %v614 = vld [vmem:[%s599 + $0x38] sm:$0xf]
      %v615 = vld [vmem:[%s599 + $0x3c] sm:$0xf]
      %v616 = vld [vmem:[%s599 + $0x40] sm:$0xf]
      %v617 = vld [vmem:[%s599 + $0x44] sm:$0xf]
      %v618 = vld [vmem:[%s599 + $0x48] sm:$0xf]
      %v619 = vld [vmem:[%s599 + $0x4c] sm:$0xf]
      %v620 = vld [vmem:[%s599 + $0x50] sm:$0xf]
      %v621 = vld [vmem:[%s599 + $0x54] sm:$0xf]
      %v622 = vld [vmem:[%s599 + $0x58] sm:$0xf]
      %v623 = vld [vmem:[%s599 + $0x5c] sm:$0xf]
      %v624 = vld [vmem:[%s599 + $0x60] sm:$0xf]
      %v625 = vld [vmem:[%s599 + $0x64] sm:$0xf]
      %v626 = vld [vmem:[%s599 + $0x68] sm:$0xf]
      %v627 = vld [vmem:[%s599 + $0x6c] sm:$0xf]
      %v628 = vld [vmem:[%s599 + $0x70] sm:$0xf]
      %v629 = vld [vmem:[%s599 + $0x74] sm:$0xf]
      %v630 = vld [vmem:[%s599 + $0x78] sm:$0xf]
      %v631 = vld [vmem:[%s599 + $0x7c] sm:$0xf]
      %v632 = vld [vmem:[%s599 + $0x80] sm:$0xf]
      %v633 = vld [vmem:[%s599 + $0x84] sm:$0xf]
      %v634 = vld [vmem:[%s599 + $0x88] sm:$0xf]
      %v635 = vld [vmem:[%s599 + $0x8c] sm:$0xf]
      %v672 = vunpack.c.l.b16 %v600
      %v673 = vunpack.c.l.b16 %v601
      %v674 = vunpack.c.l.b16 %v602
      %v675 = vunpack.c.l.b16 %v603
      %v676 = vunpack.c.l.b16 %v604
      %v677 = vunpack.c.l.b16 %v605
      %v678 = vunpack.c.l.b16 %v606
      %v679 = vunpack.c.l.b16 %v607
      %v680 = vunpack.c.l.b16 %v608
      %v681 = vunpack.c.l.b16 %v609
      %v682 = vunpack.c.l.b16 %v610
      %v683 = vunpack.c.l.b16 %v611
      %v684 = vunpack.c.l.b16 %v612
      %v685 = vunpack.c.l.b16 %v613
      %v686 = vunpack.c.l.b16 %v614
      %v687 = vunpack.c.l.b16 %v615
      %v688 = vunpack.c.l.b16 %v616
      %v689 = vunpack.c.l.b16 %v617
      %v690 = vunpack.c.l.b16 %v618
      %v691 = vunpack.c.l.b16 %v619
      %v692 = vunpack.c.l.b16 %v620
      %v693 = vunpack.c.l.b16 %v621
      %v694 = vunpack.c.l.b16 %v622
      %v695 = vunpack.c.l.b16 %v623
      %v696 = vunpack.c.l.b16 %v624
      %v697 = vunpack.c.l.b16 %v625
      %v698 = vunpack.c.l.b16 %v626
      %v699 = vunpack.c.l.b16 %v627
      %v700 = vunpack.c.l.b16 %v628
      %v701 = vunpack.c.l.b16 %v629
      %v702 = vunpack.c.l.b16 %v630
      %v703 = vunpack.c.l.b16 %v631
      %v704 = vunpack.c.l.b16 %v632
      %v705 = vunpack.c.l.b16 %v633
      %v706 = vunpack.c.l.b16 %v634
      %v707 = vunpack.c.l.b16 %v635
      %v708 = vpack.c.b16 %v673, %v672
      %v709 = vpack.c.b16 %v675, %v674
      %v710 = vpack.c.b16 %v677, %v676
      %v711 = vpack.c.b16 %v679, %v678
      %v712 = vpack.c.b16 %v681, %v680
      %v713 = vpack.c.b16 %v683, %v682
      %v714 = vpack.c.b16 %v685, %v684
      %v715 = vpack.c.b16 %v687, %v686
      %v716 = vpack.c.b16 %v689, %v688
      %v717 = vpack.c.b16 %v691, %v690
      %v718 = vpack.c.b16 %v693, %v692
      %v719 = vpack.c.b16 %v695, %v694
      %v720 = vpack.c.b16 %v697, %v696
      %v721 = vpack.c.b16 %v699, %v698
      %v722 = vpack.c.b16 %v701, %v700
      %v723 = vpack.c.b16 %v703, %v702
      %v724 = vpack.c.b16 %v705, %v704
      %v725 = vpack.c.b16 %v707, %v706
      %744 = vmatprep.subr.bf16.mxu0 0
      %745 = vmatpush1.bf16.msra.mxu0 %v715
      %746 = vmatprep.subr.bf16.mxu0 0
      %747 = vmatpush1.bf16.msra.mxu0 %v714
      %748 = vmatprep.subr.bf16.mxu0 0
      %749 = vmatpush1.bf16.msra.mxu0 %v713
      %750 = vmatprep.subr.bf16.mxu0 0
      %751 = vmatpush1.bf16.msra.mxu0 %v712
      %752 = vmatprep.subr.bf16.mxu0 0
      %753 = vmatpush1.bf16.msra.mxu0 %v711
      %754 = vmatprep.subr.bf16.mxu0 0
      %755 = vmatpush1.bf16.msra.mxu0 %v710
      %756 = vmatprep.subr.bf16.mxu0 0
      %757 = vmatpush1.bf16.msra.mxu0 %v709
      %758 = vmatprep.subr.bf16.mxu0 0
      %759 = vmatpush1.bf16.msra.mxu0 %v708
      %760 = vmatprep.subr.bf16.mxu0 0
      %761 = vmatpush2.bf16.msra.mxu0 %v723
      %762 = vmatprep.subr.bf16.mxu0 0
      %763 = vmatpush2.bf16.msra.mxu0 %v722
      %764 = vmatprep.subr.bf16.mxu0 0
      %765 = vmatpush2.bf16.msra.mxu0 %v721
      %766 = vmatprep.subr.bf16.mxu0 0
      %767 = vmatpush2.bf16.msra.mxu0 %v720
      %768 = vmatprep.subr.bf16.mxu0 0
      %769 = vmatpush2.bf16.msra.mxu0 %v719
      %770 = vmatprep.subr.bf16.mxu0 0
      %771 = vmatpush2.bf16.msra.mxu0 %v718
      %772 = vmatprep.subr.bf16.mxu0 0
      %773 = vmatpush2.bf16.msra.mxu0 %v717
      %774 = vmatprep.subr.bf16.mxu0 0
      %775 = vmatpush2.bf16.msra.mxu0 %v716
      %776 = vmatprep.mubr.bf16.mxu0 %v313
      %777 = vmatmul.mubr.bf16.gmra.mxu0 %v312
      %v778 = vpop.f32.mrf.mxu0
      %v779 = vadd.f32 %v235, %v778
      %v780 = vpop.f32.mrf.mxu0
      %v781 = vpop.f32.mrf.mxu0
      %v782 = vadd.f32 %v240, %v781
      %v783 = vpop.f32.mrf.mxu0
      %784 = vmatprep.mubr.bf16.mxu0 %v316
      %785 = vmatmul.mubr.bf16.gmra.mxu0 %v315
      %v786 = vpop.f32.mrf.mxu0
      %v787 = vadd.f32 %v245, %v786
      %v788 = vpop.f32.mrf.mxu0
      %v789 = vpop.f32.mrf.mxu0
      %v790 = vadd.f32 %v250, %v789
      %v791 = vpop.f32.mrf.mxu0
      %792 = vmatprep.mubr.bf16.mxu0 %v319
      %793 = vmatmul.mubr.bf16.gmra.mxu0 %v318
      %v794 = vpop.f32.mrf.mxu0
      %v795 = vadd.f32 %v255, %v794
      %v796 = vpop.f32.mrf.mxu0
      %v797 = vpop.f32.mrf.mxu0
      %v798 = vadd.f32 %v260, %v797
      %v799 = vpop.f32.mrf.mxu0
      %800 = vmatprep.mubr.bf16.mxu0 %v322
      %801 = vmatmul.mubr.bf16.gmra.mxu0 %v321
      %v802 = vpop.f32.mrf.mxu0
      %v803 = vadd.f32 %v265, %v802
      %v804 = vpop.f32.mrf.mxu0
      %v805 = vpop.f32.mrf.mxu0
      %v806 = vadd.f32 %v270, %v805
      %v807 = vpop.f32.mrf.mxu0
      %808 = vdwg.mxu0
      %809 = vmatprep.subr.bf16.mxu0 0
      %810 = vmatpush1.bf16.msra.mxu0 0
      %811 = vmatprep.subr.bf16.mxu0 0
      %812 = vmatpush1.bf16.msra.mxu0 0
      %813 = vmatprep.subr.bf16.mxu0 0
      %814 = vmatpush1.bf16.msra.mxu0 0
      %815 = vmatprep.subr.bf16.mxu0 0
      %816 = vmatpush1.bf16.msra.mxu0 0
      %817 = vmatprep.subr.bf16.mxu0 0
      %818 = vmatpush1.bf16.msra.mxu0 0
      %819 = vmatprep.subr.bf16.mxu0 0
      %820 = vmatpush1.bf16.msra.mxu0 0
      %821 = vmatprep.subr.bf16.mxu0 0
      %822 = vmatpush1.bf16.msra.mxu0 %v725
      %823 = vmatprep.subr.bf16.mxu0 0
      %824 = vmatpush1.bf16.msra.mxu0 %v724
      %825 = vmatprep.subr.bf16.mxu0 0
      %826 = vmatpush2.bf16.msra.mxu0 0
      %827 = vmatprep.subr.bf16.mxu0 0
      %828 = vmatpush2.bf16.msra.mxu0 0
      %829 = vmatprep.subr.bf16.mxu0 0
      %830 = vmatpush2.bf16.msra.mxu0 0
      %831 = vmatprep.subr.bf16.mxu0 0
      %832 = vmatpush2.bf16.msra.mxu0 0
      %833 = vmatprep.subr.bf16.mxu0 0
      %834 = vmatpush2.bf16.msra.mxu0 0
      %835 = vmatprep.subr.bf16.mxu0 0
      %836 = vmatpush2.bf16.msra.mxu0 0
      %837 = vmatprep.subr.bf16.mxu0 0
      %838 = vmatpush2.bf16.msra.mxu0 0
      %839 = vmatprep.subr.bf16.mxu0 0
      %840 = vmatpush2.bf16.msra.mxu0 0
      %841 = vmatprep.mubr.bf16.mxu0 0
      %842 = vmatmul.mubr.bf16.gmra.mxu0 %v442
      %v843 = vpop.f32.mrf.mxu0
      %v844 = vadd.f32 %v779, %v843
      %v845 = vpop.f32.mrf.mxu0
      %v846 = vpop.f32.mrf.mxu0
      %v847 = vadd.f32 %v782, %v846
      %v848 = vpop.f32.mrf.mxu0
      %849 = vmatprep.mubr.bf16.mxu0 0
      %850 = vmatmul.mubr.bf16.gmra.mxu0 %v445
      %v851 = vpop.f32.mrf.mxu0
      %v852 = vadd.f32 %v787, %v851
      %v853 = vpop.f32.mrf.mxu0
      %v854 = vpop.f32.mrf.mxu0
      %v855 = vadd.f32 %v790, %v854
      %v856 = vpop.f32.mrf.mxu0
      %857 = vmatprep.mubr.bf16.mxu0 0
      %858 = vmatmul.mubr.bf16.gmra.mxu0 %v448
      %v859 = vpop.f32.mrf.mxu0
      %v860 = vadd.f32 %v795, %v859
      %v861 = vpop.f32.mrf.mxu0
      %v862 = vpop.f32.mrf.mxu0
      %v863 = vadd.f32 %v798, %v862
      %v864 = vpop.f32.mrf.mxu0
      %865 = vmatprep.mubr.bf16.mxu0 0
      %866 = vmatmul.mubr.bf16.gmra.mxu0 %v451
      %v867 = vpop.f32.mrf.mxu0
      %v868 = vadd.f32 %v803, %v867
      %v869 = vpop.f32.mrf.mxu0
      %v870 = vpop.f32.mrf.mxu0
      %v871 = vadd.f32 %v806, %v870
      %v872 = vpop.f32.mrf.mxu0
      %873 = vdwg.mxu0
      %v874 = vmax.f32 %v844, 0.0
      %v875 = vmax.f32 %v847, 0.0
      %v876 = vmax.f32 %v852, 0.0
      %v877 = vmax.f32 %v855, 0.0
      %v878 = vmax.f32 %v860, 0.0
      %v879 = vmax.f32 %v863, 0.0
      %v880 = vmax.f32 %v868, 0.0
      %v881 = vmax.f32 %v871, 0.0
      %v882 = vadd.f32 %v591, %v874
      %v883 = vadd.f32 %v592, %v875
      %v884 = vadd.f32 %v593, %v876
      %v885 = vadd.f32 %v594, %v877
      %v886 = vadd.f32 %v595, %v878
      %v887 = vadd.f32 %v596, %v879
      %v888 = vadd.f32 %v597, %v880
      %v889 = vadd.f32 %v598, %v881
      %s890 = scalar_lea.vmem %s165, 288
      %v891 = vld [vmem:[%s890] sm:$0xf]
      %v892 = vld [vmem:[%s890 + $0x4] sm:$0xf]
      %v893 = vld [vmem:[%s890 + $0x8] sm:$0xf]
      %v894 = vld [vmem:[%s890 + $0xc] sm:$0xf]
      %v895 = vld [vmem:[%s890 + $0x10] sm:$0xf]
      %v896 = vld [vmem:[%s890 + $0x14] sm:$0xf]
      %v897 = vld [vmem:[%s890 + $0x18] sm:$0xf]
      %v898 = vld [vmem:[%s890 + $0x1c] sm:$0xf]
      %v899 = vld [vmem:[%s890 + $0x20] sm:$0xf]
      %v900 = vld [vmem:[%s890 + $0x24] sm:$0xf]
      %v901 = vld [vmem:[%s890 + $0x28] sm:$0xf]
      %v902 = vld [vmem:[%s890 + $0x2c] sm:$0xf]
      %v903 = vld [vmem:[%s890 + $0x30] sm:$0xf]
      %v904 = vld [vmem:[%s890 + $0x34] sm:$0xf]
      %v905 = vld [vmem:[%s890 + $0x38] sm:$0xf]
      %v906 = vld [vmem:[%s890 + $0x3c] sm:$0xf]
      %v907 = vld [vmem:[%s890 + $0x40] sm:$0xf]
      %v908 = vld [vmem:[%s890 + $0x44] sm:$0xf]
      %v909 = vld [vmem:[%s890 + $0x48] sm:$0xf]
      %v910 = vld [vmem:[%s890 + $0x4c] sm:$0xf]
      %v911 = vld [vmem:[%s890 + $0x50] sm:$0xf]
      %v912 = vld [vmem:[%s890 + $0x54] sm:$0xf]
      %v913 = vld [vmem:[%s890 + $0x58] sm:$0xf]
      %v914 = vld [vmem:[%s890 + $0x5c] sm:$0xf]
      %v915 = vld [vmem:[%s890 + $0x60] sm:$0xf]
      %v916 = vld [vmem:[%s890 + $0x64] sm:$0xf]
      %v917 = vld [vmem:[%s890 + $0x68] sm:$0xf]
      %v918 = vld [vmem:[%s890 + $0x6c] sm:$0xf]
      %v919 = vld [vmem:[%s890 + $0x70] sm:$0xf]
      %v920 = vld [vmem:[%s890 + $0x74] sm:$0xf]
      %v921 = vld [vmem:[%s890 + $0x78] sm:$0xf]
      %v922 = vld [vmem:[%s890 + $0x7c] sm:$0xf]
      %v923 = vld [vmem:[%s890 + $0x80] sm:$0xf]
      %v924 = vld [vmem:[%s890 + $0x84] sm:$0xf]
      %v925 = vld [vmem:[%s890 + $0x88] sm:$0xf]
      %v926 = vld [vmem:[%s890 + $0x8c] sm:$0xf]
      %v963 = vunpack.c.l.b16 %v891
      %v964 = vunpack.c.l.b16 %v892
      %v965 = vunpack.c.l.b16 %v893
      %v966 = vunpack.c.l.b16 %v894
      %v967 = vunpack.c.l.b16 %v895
      %v968 = vunpack.c.l.b16 %v896
      %v969 = vunpack.c.l.b16 %v897
      %v970 = vunpack.c.l.b16 %v898
      %v971 = vunpack.c.l.b16 %v899
      %v972 = vunpack.c.l.b16 %v900
      %v973 = vunpack.c.l.b16 %v901
      %v974 = vunpack.c.l.b16 %v902
      %v975 = vunpack.c.l.b16 %v903
      %v976 = vunpack.c.l.b16 %v904
      %v977 = vunpack.c.l.b16 %v905
      %v978 = vunpack.c.l.b16 %v906
      %v979 = vunpack.c.l.b16 %v907
      %v980 = vunpack.c.l.b16 %v908
      %v981 = vunpack.c.l.b16 %v909
      %v982 = vunpack.c.l.b16 %v910
      %v983 = vunpack.c.l.b16 %v911
      %v984 = vunpack.c.l.b16 %v912
      %v985 = vunpack.c.l.b16 %v913
      %v986 = vunpack.c.l.b16 %v914
      %v987 = vunpack.c.l.b16 %v915
      %v988 = vunpack.c.l.b16 %v916
      %v989 = vunpack.c.l.b16 %v917
      %v990 = vunpack.c.l.b16 %v918
      %v991 = vunpack.c.l.b16 %v919
      %v992 = vunpack.c.l.b16 %v920
      %v993 = vunpack.c.l.b16 %v921
      %v994 = vunpack.c.l.b16 %v922
      %v995 = vunpack.c.l.b16 %v923
      %v996 = vunpack.c.l.b16 %v924
      %v997 = vunpack.c.l.b16 %v925
      %v998 = vunpack.c.l.b16 %v926
      %v999 = vpack.c.b16 %v964, %v963
      %v1000 = vpack.c.b16 %v966, %v965
      %v1001 = vpack.c.b16 %v968, %v967
      %v1002 = vpack.c.b16 %v970, %v969
      %v1003 = vpack.c.b16 %v972, %v971
      %v1004 = vpack.c.b16 %v974, %v973
      %v1005 = vpack.c.b16 %v976, %v975
      %v1006 = vpack.c.b16 %v978, %v977
      %v1007 = vpack.c.b16 %v980, %v979
      %v1008 = vpack.c.b16 %v982, %v981
      %v1009 = vpack.c.b16 %v984, %v983
      %v1010 = vpack.c.b16 %v986, %v985
      %v1011 = vpack.c.b16 %v988, %v987
      %v1012 = vpack.c.b16 %v990, %v989
      %v1013 = vpack.c.b16 %v992, %v991
      %v1014 = vpack.c.b16 %v994, %v993
      %v1015 = vpack.c.b16 %v996, %v995
      %v1016 = vpack.c.b16 %v998, %v997
      %1035 = vmatprep.subr.bf16.mxu0 0
      %1036 = vmatpush1.bf16.msra.mxu0 %v1006
      %1037 = vmatprep.subr.bf16.mxu0 0
      %1038 = vmatpush1.bf16.msra.mxu0 %v1005
      %1039 = vmatprep.subr.bf16.mxu0 0
      %1040 = vmatpush1.bf16.msra.mxu0 %v1004
      %1041 = vmatprep.subr.bf16.mxu0 0
      %1042 = vmatpush1.bf16.msra.mxu0 %v1003
      %1043 = vmatprep.subr.bf16.mxu0 0
      %1044 = vmatpush1.bf16.msra.mxu0 %v1002
      %1045 = vmatprep.subr.bf16.mxu0 0
      %1046 = vmatpush1.bf16.msra.mxu0 %v1001
      %1047 = vmatprep.subr.bf16.mxu0 0
      %1048 = vmatpush1.bf16.msra.mxu0 %v1000
      %1049 = vmatprep.subr.bf16.mxu0 0
      %1050 = vmatpush1.bf16.msra.mxu0 %v999
      %1051 = vmatprep.subr.bf16.mxu0 0
      %1052 = vmatpush2.bf16.msra.mxu0 %v1014
      %1053 = vmatprep.subr.bf16.mxu0 0
      %1054 = vmatpush2.bf16.msra.mxu0 %v1013
      %1055 = vmatprep.subr.bf16.mxu0 0
      %1056 = vmatpush2.bf16.msra.mxu0 %v1012
      %1057 = vmatprep.subr.bf16.mxu0 0
      %1058 = vmatpush2.bf16.msra.mxu0 %v1011
      %1059 = vmatprep.subr.bf16.mxu0 0
      %1060 = vmatpush2.bf16.msra.mxu0 %v1010
      %1061 = vmatprep.subr.bf16.mxu0 0
      %1062 = vmatpush2.bf16.msra.mxu0 %v1009
      %1063 = vmatprep.subr.bf16.mxu0 0
      %1064 = vmatpush2.bf16.msra.mxu0 %v1008
      %1065 = vmatprep.subr.bf16.mxu0 0
      %1066 = vmatpush2.bf16.msra.mxu0 %v1007
      %1067 = vmatprep.mubr.bf16.mxu0 %v313
      %1068 = vmatmul.mubr.bf16.gmra.mxu0 %v312
      %v1069 = vpop.f32.mrf.mxu0
      %v1070 = vadd.f32 %v235, %v1069
      %v1071 = vpop.f32.mrf.mxu0
      %v1072 = vpop.f32.mrf.mxu0
      %v1073 = vadd.f32 %v240, %v1072
      %v1074 = vpop.f32.mrf.mxu0
      %1075 = vmatprep.mubr.bf16.mxu0 %v316
      %1076 = vmatmul.mubr.bf16.gmra.mxu0 %v315
      %v1077 = vpop.f32.mrf.mxu0
      %v1078 = vadd.f32 %v245, %v1077
      %v1079 = vpop.f32.mrf.mxu0
      %v1080 = vpop.f32.mrf.mxu0
      %v1081 = vadd.f32 %v250, %v1080
      %v1082 = vpop.f32.mrf.mxu0
      %1083 = vmatprep.mubr.bf16.mxu0 %v319
      %1084 = vmatmul.mubr.bf16.gmra.mxu0 %v318
      %v1085 = vpop.f32.mrf.mxu0
      %v1086 = vadd.f32 %v255, %v1085
      %v1087 = vpop.f32.mrf.mxu0
      %v1088 = vpop.f32.mrf.mxu0
      %v1089 = vadd.f32 %v260, %v1088
      %v1090 = vpop.f32.mrf.mxu0
      %1091 = vmatprep.mubr.bf16.mxu0 %v322
      %1092 = vmatmul.mubr.bf16.gmra.mxu0 %v321
      %v1093 = vpop.f32.mrf.mxu0
      %v1094 = vadd.f32 %v265, %v1093
      %v1095 = vpop.f32.mrf.mxu0
      %v1096 = vpop.f32.mrf.mxu0
      %v1097 = vadd.f32 %v270, %v1096
      %v1098 = vpop.f32.mrf.mxu0
      %1099 = vdwg.mxu0
      %1100 = vmatprep.subr.bf16.mxu0 0
      %1101 = vmatpush1.bf16.msra.mxu0 0
      %1102 = vmatprep.subr.bf16.mxu0 0
      %1103 = vmatpush1.bf16.msra.mxu0 0
      %1104 = vmatprep.subr.bf16.mxu0 0
      %1105 = vmatpush1.bf16.msra.mxu0 0
      %1106 = vmatprep.subr.bf16.mxu0 0
      %1107 = vmatpush1.bf16.msra.mxu0 0
      %1108 = vmatprep.subr.bf16.mxu0 0
      %1109 = vmatpush1.bf16.msra.mxu0 0
      %1110 = vmatprep.subr.bf16.mxu0 0
      %1111 = vmatpush1.bf16.msra.mxu0 0
      %1112 = vmatprep.subr.bf16.mxu0 0
      %1113 = vmatpush1.bf16.msra.mxu0 %v1016
      %1114 = vmatprep.subr.bf16.mxu0 0
      %1115 = vmatpush1.bf16.msra.mxu0 %v1015
      %1116 = vmatprep.subr.bf16.mxu0 0
      %1117 = vmatpush2.bf16.msra.mxu0 0
      %1118 = vmatprep.subr.bf16.mxu0 0
      %1119 = vmatpush2.bf16.msra.mxu0 0
      %1120 = vmatprep.subr.bf16.mxu0 0
      %1121 = vmatpush2.bf16.msra.mxu0 0
      %1122 = vmatprep.subr.bf16.mxu0 0
      %1123 = vmatpush2.bf16.msra.mxu0 0
      %1124 = vmatprep.subr.bf16.mxu0 0
      %1125 = vmatpush2.bf16.msra.mxu0 0
      %1126 = vmatprep.subr.bf16.mxu0 0
      %1127 = vmatpush2.bf16.msra.mxu0 0
      %1128 = vmatprep.subr.bf16.mxu0 0
      %1129 = vmatpush2.bf16.msra.mxu0 0
      %1130 = vmatprep.subr.bf16.mxu0 0
      %1131 = vmatpush2.bf16.msra.mxu0 0
      %1132 = vmatprep.mubr.bf16.mxu0 0
      %1133 = vmatmul.mubr.bf16.gmra.mxu0 %v442
      %v1134 = vpop.f32.mrf.mxu0
      %v1135 = vadd.f32 %v1070, %v1134
      %v1136 = vpop.f32.mrf.mxu0
      %v1137 = vpop.f32.mrf.mxu0
      %v1138 = vadd.f32 %v1073, %v1137
      %v1139 = vpop.f32.mrf.mxu0
      %1140 = vmatprep.mubr.bf16.mxu0 0
      %1141 = vmatmul.mubr.bf16.gmra.mxu0 %v445
      %v1142 = vpop.f32.mrf.mxu0
      %v1143 = vadd.f32 %v1078, %v1142
      %v1144 = vpop.f32.mrf.mxu0
      %v1145 = vpop.f32.mrf.mxu0
      %v1146 = vadd.f32 %v1081, %v1145
      %v1147 = vpop.f32.mrf.mxu0
      %1148 = vmatprep.mubr.bf16.mxu0 0
      %1149 = vmatmul.mubr.bf16.gmra.mxu0 %v448
      %v1150 = vpop.f32.mrf.mxu0
      %v1151 = vadd.f32 %v1086, %v1150
      %v1152 = vpop.f32.mrf.mxu0
      %v1153 = vpop.f32.mrf.mxu0
      %v1154 = vadd.f32 %v1089, %v1153
      %v1155 = vpop.f32.mrf.mxu0
      %1156 = vmatprep.mubr.bf16.mxu0 0
      %1157 = vmatmul.mubr.bf16.gmra.mxu0 %v451
      %v1158 = vpop.f32.mrf.mxu0
      %v1159 = vadd.f32 %v1094, %v1158
      %v1160 = vpop.f32.mrf.mxu0
      %v1161 = vpop.f32.mrf.mxu0
      %v1162 = vadd.f32 %v1097, %v1161
      %v1163 = vpop.f32.mrf.mxu0
      %1164 = vdwg.mxu0
      %v1165 = vmax.f32 %v1135, 0.0
      %v1166 = vmax.f32 %v1138, 0.0
      %v1167 = vmax.f32 %v1143, 0.0
      %v1168 = vmax.f32 %v1146, 0.0
      %v1169 = vmax.f32 %v1151, 0.0
      %v1170 = vmax.f32 %v1154, 0.0
      %v1171 = vmax.f32 %v1159, 0.0
      %v1172 = vmax.f32 %v1162, 0.0
      %v1173 = vadd.f32 %v882, %v1165
      %v1174 = vadd.f32 %v883, %v1166
      %v1175 = vadd.f32 %v884, %v1167
      %v1176 = vadd.f32 %v885, %v1168
      %v1177 = vadd.f32 %v886, %v1169
      %v1178 = vadd.f32 %v887, %v1170
      %v1179 = vadd.f32 %v888, %v1171
      %v1180 = vadd.f32 %v889, %v1172
      %s1181 = scalar_lea.vmem %s165, 432
      %v1182 = vld [vmem:[%s1181] sm:$0xf]
      %v1183 = vld [vmem:[%s1181 + $0x4] sm:$0xf]
      %v1184 = vld [vmem:[%s1181 + $0x8] sm:$0xf]
      %v1185 = vld [vmem:[%s1181 + $0xc] sm:$0xf]
      %v1186 = vld [vmem:[%s1181 + $0x10] sm:$0xf]
      %v1187 = vld [vmem:[%s1181 + $0x14] sm:$0xf]
      %v1188 = vld [vmem:[%s1181 + $0x18] sm:$0xf]
      %v1189 = vld [vmem:[%s1181 + $0x1c] sm:$0xf]
      %v1190 = vld [vmem:[%s1181 + $0x20] sm:$0xf]
      %v1191 = vld [vmem:[%s1181 + $0x24] sm:$0xf]
      %v1192 = vld [vmem:[%s1181 + $0x28] sm:$0xf]
      %v1193 = vld [vmem:[%s1181 + $0x2c] sm:$0xf]
      %v1194 = vld [vmem:[%s1181 + $0x30] sm:$0xf]
      %v1195 = vld [vmem:[%s1181 + $0x34] sm:$0xf]
      %v1196 = vld [vmem:[%s1181 + $0x38] sm:$0xf]
      %v1197 = vld [vmem:[%s1181 + $0x3c] sm:$0xf]
      %v1198 = vld [vmem:[%s1181 + $0x40] sm:$0xf]
      %v1199 = vld [vmem:[%s1181 + $0x44] sm:$0xf]
      %v1200 = vld [vmem:[%s1181 + $0x48] sm:$0xf]
      %v1201 = vld [vmem:[%s1181 + $0x4c] sm:$0xf]
      %v1202 = vld [vmem:[%s1181 + $0x50] sm:$0xf]
      %v1203 = vld [vmem:[%s1181 + $0x54] sm:$0xf]
      %v1204 = vld [vmem:[%s1181 + $0x58] sm:$0xf]
      %v1205 = vld [vmem:[%s1181 + $0x5c] sm:$0xf]
      %v1206 = vld [vmem:[%s1181 + $0x60] sm:$0xf]
      %v1207 = vld [vmem:[%s1181 + $0x64] sm:$0xf]
      %v1208 = vld [vmem:[%s1181 + $0x68] sm:$0xf]
      %v1209 = vld [vmem:[%s1181 + $0x6c] sm:$0xf]
      %v1210 = vld [vmem:[%s1181 + $0x70] sm:$0xf]
      %v1211 = vld [vmem:[%s1181 + $0x74] sm:$0xf]
      %v1212 = vld [vmem:[%s1181 + $0x78] sm:$0xf]
      %v1213 = vld [vmem:[%s1181 + $0x7c] sm:$0xf]
      %v1214 = vld [vmem:[%s1181 + $0x80] sm:$0xf]
      %v1215 = vld [vmem:[%s1181 + $0x84] sm:$0xf]
      %v1216 = vld [vmem:[%s1181 + $0x88] sm:$0xf]
      %v1217 = vld [vmem:[%s1181 + $0x8c] sm:$0xf]
      %v1254 = vunpack.c.l.b16 %v1182
      %v1255 = vunpack.c.l.b16 %v1183
      %v1256 = vunpack.c.l.b16 %v1184
      %v1257 = vunpack.c.l.b16 %v1185
      %v1258 = vunpack.c.l.b16 %v1186
      %v1259 = vunpack.c.l.b16 %v1187
      %v1260 = vunpack.c.l.b16 %v1188
      %v1261 = vunpack.c.l.b16 %v1189
      %v1262 = vunpack.c.l.b16 %v1190
      %v1263 = vunpack.c.l.b16 %v1191
      %v1264 = vunpack.c.l.b16 %v1192
      %v1265 = vunpack.c.l.b16 %v1193
      %v1266 = vunpack.c.l.b16 %v1194
      %v1267 = vunpack.c.l.b16 %v1195
      %v1268 = vunpack.c.l.b16 %v1196
      %v1269 = vunpack.c.l.b16 %v1197
      %v1270 = vunpack.c.l.b16 %v1198
      %v1271 = vunpack.c.l.b16 %v1199
      %v1272 = vunpack.c.l.b16 %v1200
      %v1273 = vunpack.c.l.b16 %v1201
      %v1274 = vunpack.c.l.b16 %v1202
      %v1275 = vunpack.c.l.b16 %v1203
      %v1276 = vunpack.c.l.b16 %v1204
      %v1277 = vunpack.c.l.b16 %v1205
      %v1278 = vunpack.c.l.b16 %v1206
      %v1279 = vunpack.c.l.b16 %v1207
      %v1280 = vunpack.c.l.b16 %v1208
      %v1281 = vunpack.c.l.b16 %v1209
      %v1282 = vunpack.c.l.b16 %v1210
      %v1283 = vunpack.c.l.b16 %v1211
      %v1284 = vunpack.c.l.b16 %v1212
      %v1285 = vunpack.c.l.b16 %v1213
      %v1286 = vunpack.c.l.b16 %v1214
      %v1287 = vunpack.c.l.b16 %v1215
      %v1288 = vunpack.c.l.b16 %v1216
      %v1289 = vunpack.c.l.b16 %v1217
      %v1290 = vpack.c.b16 %v1255, %v1254
      %v1291 = vpack.c.b16 %v1257, %v1256
      %v1292 = vpack.c.b16 %v1259, %v1258
      %v1293 = vpack.c.b16 %v1261, %v1260
      %v1294 = vpack.c.b16 %v1263, %v1262
      %v1295 = vpack.c.b16 %v1265, %v1264
      %v1296 = vpack.c.b16 %v1267, %v1266
      %v1297 = vpack.c.b16 %v1269, %v1268
      %v1298 = vpack.c.b16 %v1271, %v1270
      %v1299 = vpack.c.b16 %v1273, %v1272
      %v1300 = vpack.c.b16 %v1275, %v1274
      %v1301 = vpack.c.b16 %v1277, %v1276
      %v1302 = vpack.c.b16 %v1279, %v1278
      %v1303 = vpack.c.b16 %v1281, %v1280
      %v1304 = vpack.c.b16 %v1283, %v1282
      %v1305 = vpack.c.b16 %v1285, %v1284
      %v1306 = vpack.c.b16 %v1287, %v1286
      %v1307 = vpack.c.b16 %v1289, %v1288
      %1326 = vmatprep.subr.bf16.mxu0 0
      %1327 = vmatpush1.bf16.msra.mxu0 %v1297
      %1328 = vmatprep.subr.bf16.mxu0 0
      %1329 = vmatpush1.bf16.msra.mxu0 %v1296
      %1330 = vmatprep.subr.bf16.mxu0 0
      %1331 = vmatpush1.bf16.msra.mxu0 %v1295
      %1332 = vmatprep.subr.bf16.mxu0 0
      %1333 = vmatpush1.bf16.msra.mxu0 %v1294
      %1334 = vmatprep.subr.bf16.mxu0 0
      %1335 = vmatpush1.bf16.msra.mxu0 %v1293
      %1336 = vmatprep.subr.bf16.mxu0 0
      %1337 = vmatpush1.bf16.msra.mxu0 %v1292
      %1338 = vmatprep.subr.bf16.mxu0 0
      %1339 = vmatpush1.bf16.msra.mxu0 %v1291
      %1340 = vmatprep.subr.bf16.mxu0 0
      %1341 = vmatpush1.bf16.msra.mxu0 %v1290
      %1342 = vmatprep.subr.bf16.mxu0 0
      %1343 = vmatpush2.bf16.msra.mxu0 %v1305
      %1344 = vmatprep.subr.bf16.mxu0 0
      %1345 = vmatpush2.bf16.msra.mxu0 %v1304
      %1346 = vmatprep.subr.bf16.mxu0 0
      %1347 = vmatpush2.bf16.msra.mxu0 %v1303
      %1348 = vmatprep.subr.bf16.mxu0 0
      %1349 = vmatpush2.bf16.msra.mxu0 %v1302
      %1350 = vmatprep.subr.bf16.mxu0 0
      %1351 = vmatpush2.bf16.msra.mxu0 %v1301
      %1352 = vmatprep.subr.bf16.mxu0 0
      %1353 = vmatpush2.bf16.msra.mxu0 %v1300
      %1354 = vmatprep.subr.bf16.mxu0 0
      %1355 = vmatpush2.bf16.msra.mxu0 %v1299
      %1356 = vmatprep.subr.bf16.mxu0 0
      %1357 = vmatpush2.bf16.msra.mxu0 %v1298
      %1358 = vmatprep.mubr.bf16.mxu0 %v313
      %1359 = vmatmul.mubr.bf16.gmra.mxu0 %v312
      %v1360 = vpop.f32.mrf.mxu0
      %v1361 = vadd.f32 %v235, %v1360
      %v1362 = vpop.f32.mrf.mxu0
      %v1363 = vpop.f32.mrf.mxu0
      %v1364 = vadd.f32 %v240, %v1363
      %v1365 = vpop.f32.mrf.mxu0
      %1366 = vmatprep.mubr.bf16.mxu0 %v316
      %1367 = vmatmul.mubr.bf16.gmra.mxu0 %v315
      %v1368 = vpop.f32.mrf.mxu0
      %v1369 = vadd.f32 %v245, %v1368
      %v1370 = vpop.f32.mrf.mxu0
      %v1371 = vpop.f32.mrf.mxu0
      %v1372 = vadd.f32 %v250, %v1371
      %v1373 = vpop.f32.mrf.mxu0
      %1374 = vmatprep.mubr.bf16.mxu0 %v319
      %1375 = vmatmul.mubr.bf16.gmra.mxu0 %v318
      %v1376 = vpop.f32.mrf.mxu0
      %v1377 = vadd.f32 %v255, %v1376
      %v1378 = vpop.f32.mrf.mxu0
      %v1379 = vpop.f32.mrf.mxu0
      %v1380 = vadd.f32 %v260, %v1379
      %v1381 = vpop.f32.mrf.mxu0
      %1382 = vmatprep.mubr.bf16.mxu0 %v322
      %1383 = vmatmul.mubr.bf16.gmra.mxu0 %v321
      %v1384 = vpop.f32.mrf.mxu0
      %v1385 = vadd.f32 %v265, %v1384
      %v1386 = vpop.f32.mrf.mxu0
      %v1387 = vpop.f32.mrf.mxu0
      %v1388 = vadd.f32 %v270, %v1387
      %v1389 = vpop.f32.mrf.mxu0
      %1390 = vdwg.mxu0
      %1391 = vmatprep.subr.bf16.mxu0 0
      %1392 = vmatpush1.bf16.msra.mxu0 0
      %1393 = vmatprep.subr.bf16.mxu0 0
      %1394 = vmatpush1.bf16.msra.mxu0 0
      %1395 = vmatprep.subr.bf16.mxu0 0
      %1396 = vmatpush1.bf16.msra.mxu0 0
      %1397 = vmatprep.subr.bf16.mxu0 0
      %1398 = vmatpush1.bf16.msra.mxu0 0
      %1399 = vmatprep.subr.bf16.mxu0 0
      %1400 = vmatpush1.bf16.msra.mxu0 0
      %1401 = vmatprep.subr.bf16.mxu0 0
      %1402 = vmatpush1.bf16.msra.mxu0 0
      %1403 = vmatprep.subr.bf16.mxu0 0
      %1404 = vmatpush1.bf16.msra.mxu0 %v1307
      %1405 = vmatprep.subr.bf16.mxu0 0
      %1406 = vmatpush1.bf16.msra.mxu0 %v1306
      %1407 = vmatprep.subr.bf16.mxu0 0
      %1408 = vmatpush2.bf16.msra.mxu0 0
      %1409 = vmatprep.subr.bf16.mxu0 0
      %1410 = vmatpush2.bf16.msra.mxu0 0
      %1411 = vmatprep.subr.bf16.mxu0 0
      %1412 = vmatpush2.bf16.msra.mxu0 0
      %1413 = vmatprep.subr.bf16.mxu0 0
      %1414 = vmatpush2.bf16.msra.mxu0 0
      %1415 = vmatprep.subr.bf16.mxu0 0
      %1416 = vmatpush2.bf16.msra.mxu0 0
      %1417 = vmatprep.subr.bf16.mxu0 0
      %1418 = vmatpush2.bf16.msra.mxu0 0
      %1419 = vmatprep.subr.bf16.mxu0 0
      %1420 = vmatpush2.bf16.msra.mxu0 0
      %1421 = vmatprep.subr.bf16.mxu0 0
      %1422 = vmatpush2.bf16.msra.mxu0 0
      %1423 = vmatprep.mubr.bf16.mxu0 0
      %1424 = vmatmul.mubr.bf16.gmra.mxu0 %v442
      %v1425 = vpop.f32.mrf.mxu0
      %v1426 = vadd.f32 %v1361, %v1425
      %v1427 = vpop.f32.mrf.mxu0
      %v1428 = vpop.f32.mrf.mxu0
      %v1429 = vadd.f32 %v1364, %v1428
      %v1430 = vpop.f32.mrf.mxu0
      %1431 = vmatprep.mubr.bf16.mxu0 0
      %1432 = vmatmul.mubr.bf16.gmra.mxu0 %v445
      %v1433 = vpop.f32.mrf.mxu0
      %v1434 = vadd.f32 %v1369, %v1433
      %v1435 = vpop.f32.mrf.mxu0
      %v1436 = vpop.f32.mrf.mxu0
      %v1437 = vadd.f32 %v1372, %v1436
      %v1438 = vpop.f32.mrf.mxu0
      %1439 = vmatprep.mubr.bf16.mxu0 0
      %1440 = vmatmul.mubr.bf16.gmra.mxu0 %v448
      %v1441 = vpop.f32.mrf.mxu0
      %v1442 = vadd.f32 %v1377, %v1441
      %v1443 = vpop.f32.mrf.mxu0
      %v1444 = vpop.f32.mrf.mxu0
      %v1445 = vadd.f32 %v1380, %v1444
      %v1446 = vpop.f32.mrf.mxu0
      %1447 = vmatprep.mubr.bf16.mxu0 0
      %1448 = vmatmul.mubr.bf16.gmra.mxu0 %v451
      %v1449 = vpop.f32.mrf.mxu0
      %v1450 = vadd.f32 %v1385, %v1449
      %v1451 = vpop.f32.mrf.mxu0
      %v1452 = vpop.f32.mrf.mxu0
      %v1453 = vadd.f32 %v1388, %v1452
      %v1454 = vpop.f32.mrf.mxu0
      %1455 = vdwg.mxu0
      %v1456 = vmax.f32 %v1426, 0.0
      %v1457 = vmax.f32 %v1429, 0.0
      %v1458 = vmax.f32 %v1434, 0.0
      %v1459 = vmax.f32 %v1437, 0.0
      %v1460 = vmax.f32 %v1442, 0.0
      %v1461 = vmax.f32 %v1445, 0.0
      %v1462 = vmax.f32 %v1450, 0.0
      %v1463 = vmax.f32 %v1453, 0.0
      %v1464 = vadd.f32 %v1173, %v1456
      %v1465 = vadd.f32 %v1174, %v1457
      %v1466 = vadd.f32 %v1175, %v1458
      %v1467 = vadd.f32 %v1176, %v1459
      %v1468 = vadd.f32 %v1177, %v1460
      %v1469 = vadd.f32 %v1178, %v1461
      %v1470 = vadd.f32 %v1179, %v1462
      %v1471 = vadd.f32 %v1180, %v1463
      %v1472 = vmul.f32 %v1464, 0.25
      %v1473 = vmul.f32 %v1465, 0.25
      %v1474 = vmul.f32 %v1466, 0.25
      %v1475 = vmul.f32 %v1467, 0.25
      %v1476 = vmul.f32 %v1468, 0.25
      %v1477 = vmul.f32 %v1469, 0.25
      %v1478 = vmul.f32 %v1470, 0.25
      %v1479 = vmul.f32 %v1471, 0.25
      %v1480 = vpack.c.bf16 %v1473, %v1472
      %v1481 = vpack.c.bf16 %v1475, %v1474
      %v1482 = vpack.c.bf16 %v1477, %v1476
      %v1483 = vpack.c.bf16 %v1479, %v1478
      %v1488 = vunpack.c.l.b16 %v1480
      %v1489 = vunpack.c.h.b16 %v1480
      %v1490 = vunpack.c.l.b16 %v1481
      %v1491 = vunpack.c.h.b16 %v1481
      %v1492 = vunpack.c.l.b16 %v1482
      %v1493 = vunpack.c.h.b16 %v1482
      %v1494 = vunpack.c.l.b16 %v1483
      %v1495 = vunpack.c.h.b16 %v1483
      %v1496 = vpack.c.b16 %v1488, %v1488
      %v1497 = vpack.c.b16 %v1489, %v1489
      %v1498 = vpack.c.b16 %v1490, %v1490
      %v1499 = vpack.c.b16 %v1491, %v1491
      %v1500 = vpack.c.b16 %v1492, %v1492
      %v1501 = vpack.c.b16 %v1493, %v1493
      %v1502 = vpack.c.b16 %v1494, %v1494
      %v1503 = vpack.c.b16 %v1495, %v1495
      %vm1512 = vcmask 289792
      %1513 = vst.msk [vmem:[%s170] sm:$0xf] %vm1512, %v1496
      %1514 = vst.msk [vmem:[%s170 + $0x4] sm:$0xf] %vm1512, %v1497
      %1515 = vst.msk [vmem:[%s170 + $0x8] sm:$0xf] %vm1512, %v1498
      %1516 = vst.msk [vmem:[%s170 + $0xc] sm:$0xf] %vm1512, %v1499
      %1517 = vst.msk [vmem:[%s170 + $0x10] sm:$0xf] %vm1512, %v1500
      %1518 = vst.msk [vmem:[%s170 + $0x14] sm:$0xf] %vm1512, %v1501
      %1519 = vst.msk [vmem:[%s170 + $0x18] sm:$0xf] %vm1512, %v1502
      %1520 = vst.msk [vmem:[%s170 + $0x1c] sm:$0xf] %vm1512, %v1503
      %p1521 = scmp.lt.s32.totalorder %s14, 1
      %s1522 = scalar_select %p1521, %s14, 1
      %s1523 = smul.addr %s1522, 8
      %s1524 = smul.addr %s1523, 4
      %s1525 = scalar_lea.vmem %s3, %s1524
      // Predicated region
      $region33: #{firenet_forward.6} parent=31 // pred_check
        %p1526 = pneg %p100
      $region34: #{firenet_forward.6} parent=31 // pred_check_branch
        %1528 = sbr.rel (%p1526) target = $region36
      $region35: #{firenet_forward.6} parent=31 // pred_region
        _
      $region36: #{firenet_forward.6} parent=31 // pred_fallthru
        _
    $region32: #{firenet_forward.6} parent=5 // pred_fallthru
      _
    %p1529 = scmp.le.s32.totalorder 2, %s9
    // Predicated region
    $region37: #{firenet_forward.6} parent=5 // pred_check
      %p1530 = pneg %p1529
    $region38: #{firenet_forward.6} parent=5 // pred_check_branch
      %1532 = sbr.rel (%p1530) target = $region40
    $region39: #{firenet_forward.6} parent=5 // pred_region
      %s1533 = ssub.s32 %s9, 2
      // Predicated region
      $region41: #{firenet_forward.6} parent=39 // pred_check
        %p1534 = pneg %p106
      $region42: #{firenet_forward.6} parent=39 // pred_check_branch
        %1536 = sbr.rel (%p1534) target = $region44
      $region43: #{firenet_forward.6} parent=39 // pred_region
        %p1537 = scmp.lt.s32.totalorder %s15, 1
        %s1538 = scalar_select %p1537, %s15, 1
        %s1539 = smul.addr %s1538, 8
        %s1540 = smul.addr %s1539, 4
        %s1541 = scalar_lea.vmem %s3, %s1540
      $region44: #{firenet_forward.6} parent=39 // pred_fallthru
        _
    $region40: #{firenet_forward.6} parent=5 // pred_fallthru
      _
  $region6: #{firenet_forward.6} parent=0 // loop_footer
    %s13 = sadd.s32 1, %s9
  $region7: #{firenet_forward.6} parent=0 // loop_footer_branch
    %8 = sbr.rel target = $region3
  $region8: #{firenet_forward.6} parent=0 // loop_exit
    _

// kernel: firenet_forward.7
$region0: #{firenet_forward.7}
  #allocation0 [shape = 'u32[]', space=smem, size = 0x4, offset = 0x4, fixed_abs, tag = 'smem constant byte address 0x4 - core index']
  #allocation1 [shape = 'u32[144,128]{1,0:T(1,128)}', space=vmem, size = 0x12000, scoped, tag = 'internal scratch']
  %s0 = inlined_call_operand.vmem [shape: bf16[2,2304], index: 0, kind: input, shape index: {}]
  %s1 = inlined_call_operand.vmem [shape: bf16[2304,256], index: 1, kind: input, shape index: {}]
  %s2 = inlined_call_operand.vmem [shape: f32[1,256], index: 2, kind: input, shape index: {}]
  %s3 = inlined_call_operand.vmem [shape: bf16[256,128], index: 3, kind: input, shape index: {}]
  %s4 = inlined_call_operand.vmem [shape: f32[1,128], index: 4, kind: input, shape index: {}]
  %s5 = inlined_call_operand.vmem [shape: bf16[128,10], index: 5, kind: input, shape index: {}]
  %s6 = inlined_call_operand.vmem [shape: f32[1,10], index: 6, kind: input, shape index: {}]
  %s7 = inlined_call_operand.hbm [shape: f32[2,10], index: 7, kind: output, shape index: {}]
  %s8 = sld [smem:[#allocation0]]
  $region38: #{firenet_forward.7} parent=0
    _
  %s10 = ssub.s32 1, %s8
  %s11 = scalar_select 0, %s10, %s8
  $region1: #{firenet_forward.7} parent=0
    #allocation2 [shape = 'u8[1024]{0}', space=vmem, size = 0x400, scoped, tag = 'output window, operand 0, single buffered']
    #allocation3 [shape = 's32[1]{0}', space=sflag, size = 0x4, scoped, tag = 'scoped memory for firenet_forward.7']
    %12 = vsyncpa [#allocation3], 0
    // Predicated region
    $region2: #{firenet_forward.7} parent=1 // pred_check
      _
    $region3: #{firenet_forward.7} parent=1 // pred_check_branch
      %14 = sbr.rel (0) target = $region5
    $region4: #{firenet_forward.7} parent=1 // pred_region
      _
    $region5: #{firenet_forward.7} parent=1 // pred_fallthru
      _
    // Predicated region
    $region6: #{firenet_forward.7} parent=1 // pred_check
      _
    $region7: #{firenet_forward.7} parent=1 // pred_check_branch
      %16 = sbr.rel (0) target = $region9
    $region8: #{firenet_forward.7} parent=1 // pred_region
      _
    $region9: #{firenet_forward.7} parent=1 // pred_fallthru
      _
    // Predicated region
    $region10: #{firenet_forward.7} parent=1 // pred_check
      _
    $region11: #{firenet_forward.7} parent=1 // pred_check_branch
      %18 = sbr.rel (0) target = $region13
    $region12: #{firenet_forward.7} parent=1 // pred_region
      _
    $region13: #{firenet_forward.7} parent=1 // pred_fallthru
      _
    // Predicated region
    $region14: #{firenet_forward.7} parent=1 // pred_check
      _
    $region15: #{firenet_forward.7} parent=1 // pred_check_branch
      %20 = sbr.rel (0) target = $region17
    $region16: #{firenet_forward.7} parent=1 // pred_region
      _
    $region17: #{firenet_forward.7} parent=1 // pred_fallthru
      _
    // Predicated region
    $region18: #{firenet_forward.7} parent=1 // pred_check
      _
    $region19: #{firenet_forward.7} parent=1 // pred_check_branch
      %22 = sbr.rel (0) target = $region21
    $region20: #{firenet_forward.7} parent=1 // pred_region
      _
    $region21: #{firenet_forward.7} parent=1 // pred_fallthru
      _
    // Predicated region
    $region22: #{firenet_forward.7} parent=1 // pred_check
      _
    $region23: #{firenet_forward.7} parent=1 // pred_check_branch
      %24 = sbr.rel (0) target = $region25
    $region24: #{firenet_forward.7} parent=1 // pred_region
      _
    $region25: #{firenet_forward.7} parent=1 // pred_fallthru
      _
    // Predicated region
    $region26: #{firenet_forward.7} parent=1 // pred_check
      _
    $region27: #{firenet_forward.7} parent=1 // pred_check_branch
      %26 = sbr.rel (0) target = $region29
    $region28: #{firenet_forward.7} parent=1 // pred_region
      _
    $region29: #{firenet_forward.7} parent=1 // pred_fallthru
      _
    %v28 = vld [vmem:[%s0] sm:$0xff]
    %v29 = vld [vmem:[%s0 + $0x8] sm:$0xff]
    %v30 = vld [vmem:[%s0 + $0x10] sm:$0x3]
    %v31 = vld [vmem:[%s1] sm:$0xff]
    %v32 = vld [vmem:[%s1 + $0x8] sm:$0xff]
    %v33 = vld [vmem:[%s1 + $0x10] sm:$0xff]
    %v34 = vld [vmem:[%s1 + $0x18] sm:$0xff]
    %v35 = vld [vmem:[%s1 + $0x20] sm:$0xff]
    %v36 = vld [vmem:[%s1 + $0x28] sm:$0xff]
    %v37 = vld [vmem:[%s1 + $0x30] sm:$0xff]
    %v38 = vld [vmem:[%s1 + $0x38] sm:$0xff]
    %v39 = vld [vmem:[%s1 + $0x40] sm:$0xff]
    %v40 = vld [vmem:[%s1 + $0x48] sm:$0xff]
    %v41 = vld [vmem:[%s1 + $0x50] sm:$0xff]
    %v42 = vld [vmem:[%s1 + $0x58] sm:$0xff]
    %v43 = vld [vmem:[%s1 + $0x60] sm:$0xff]
    %v44 = vld [vmem:[%s1 + $0x68] sm:$0xff]
    %v45 = vld [vmem:[%s1 + $0x70] sm:$0xff]
    %v46 = vld [vmem:[%s1 + $0x78] sm:$0xff]
    %v47 = vld [vmem:[%s1 + $0x80] sm:$0xff]
    %v48 = vld [vmem:[%s1 + $0x88] sm:$0xff]
    %v49 = vld [vmem:[%s1 + $0x90] sm:$0xff]
    %v50 = vld [vmem:[%s1 + $0x98] sm:$0xff]
    %v51 = vld [vmem:[%s1 + $0xa0] sm:$0xff]
    %v52 = vld [vmem:[%s1 + $0xa8] sm:$0xff]
    %v53 = vld [vmem:[%s1 + $0xb0] sm:$0xff]
    %v54 = vld [vmem:[%s1 + $0xb8] sm:$0xff]
    %v55 = vld [vmem:[%s1 + $0xc0] sm:$0xff]
    %v56 = vld [vmem:[%s1 + $0xc8] sm:$0xff]
    %v57 = vld [vmem:[%s1 + $0xd0] sm:$0xff]
    %v58 = vld [vmem:[%s1 + $0xd8] sm:$0xff]
    %v59 = vld [vmem:[%s1 + $0xe0] sm:$0xff]
    %v60 = vld [vmem:[%s1 + $0xe8] sm:$0xff]
    %v61 = vld [vmem:[%s1 + $0xf0] sm:$0xff]
    %v62 = vld [vmem:[%s1 + $0xf8] sm:$0xff]
    %v63 = vld [vmem:[%s1 + $0x100] sm:$0xff]
    %v64 = vld [vmem:[%s1 + $0x108] sm:$0xff]
    %v65 = vld [vmem:[%s1 + $0x110] sm:$0xff]
    %v66 = vld [vmem:[%s1 + $0x118] sm:$0xff]
    %v67 = vld [vmem:[%s1 + $0x120] sm:$0xff]
    %v68 = vld [vmem:[%s1 + $0x128] sm:$0xff]
    %v69 = vld [vmem:[%s1 + $0x130] sm:$0xff]
    %v70 = vld [vmem:[%s1 + $0x138] sm:$0xff]
    %v71 = vld [vmem:[%s1 + $0x140] sm:$0xff]
    %v72 = vld [vmem:[%s1 + $0x148] sm:$0xff]
    %v73 = vld [vmem:[%s1 + $0x150] sm:$0xff]
    %v74 = vld [vmem:[%s1 + $0x158] sm:$0xff]
    %v75 = vld [vmem:[%s1 + $0x160] sm:$0xff]
    %v76 = vld [vmem:[%s1 + $0x168] sm:$0xff]
    %v77 = vld [vmem:[%s1 + $0x170] sm:$0xff]
    %v78 = vld [vmem:[%s1 + $0x178] sm:$0xff]
    %v79 = vld [vmem:[%s1 + $0x180] sm:$0xff]
    %v80 = vld [vmem:[%s1 + $0x188] sm:$0xff]
    %v81 = vld [vmem:[%s1 + $0x190] sm:$0xff]
    %v82 = vld [vmem:[%s1 + $0x198] sm:$0xff]
    %v83 = vld [vmem:[%s1 + $0x1a0] sm:$0xff]
    %v84 = vld [vmem:[%s1 + $0x1a8] sm:$0xff]
    %v85 = vld [vmem:[%s1 + $0x1b0] sm:$0xff]
    %v86 = vld [vmem:[%s1 + $0x1b8] sm:$0xff]
    %v87 = vld [vmem:[%s1 + $0x1c0] sm:$0xff]
    %v88 = vld [vmem:[%s1 + $0x1c8] sm:$0xff]
    %v89 = vld [vmem:[%s1 + $0x1d0] sm:$0xff]
    %v90 = vld [vmem:[%s1 + $0x1d8] sm:$0xff]
    %v91 = vld [vmem:[%s1 + $0x1e0] sm:$0xff]
    %v92 = vld [vmem:[%s1 + $0x1e8] sm:$0xff]
    %v93 = vld [vmem:[%s1 + $0x1f0] sm:$0xff]
    %v94 = vld [vmem:[%s1 + $0x1f8] sm:$0xff]
    %v95 = vld [vmem:[%s1 + $0x200] sm:$0xff]
    %v96 = vld [vmem:[%s1 + $0x208] sm:$0xff]
    %v97 = vld [vmem:[%s1 + $0x210] sm:$0xff]
    %v98 = vld [vmem:[%s1 + $0x218] sm:$0xff]
    %v99 = vld [vmem:[%s1 + $0x220] sm:$0xff]
    %v100 = vld [vmem:[%s1 + $0x228] sm:$0xff]
    %v101 = vld [vmem:[%s1 + $0x230] sm:$0xff]
    %v102 = vld [vmem:[%s1 + $0x238] sm:$0xff]
    %v103 = vld [vmem:[%s1 + $0x240] sm:$0xff]
    %v104 = vld [vmem:[%s1 + $0x248] sm:$0xff]
    %v105 = vld [vmem:[%s1 + $0x250] sm:$0xff]
    %v106 = vld [vmem:[%s1 + $0x258] sm:$0xff]
    %v107 = vld [vmem:[%s1 + $0x260] sm:$0xff]
    %v108 = vld [vmem:[%s1 + $0x268] sm:$0xff]
    %v109 = vld [vmem:[%s1 + $0x270] sm:$0xff]
    %v110 = vld [vmem:[%s1 + $0x278] sm:$0xff]
    %v111 = vld [vmem:[%s1 + $0x280] sm:$0xff]
    %v112 = vld [vmem:[%s1 + $0x288] sm:$0xff]
    %v113 = vld [vmem:[%s1 + $0x290] sm:$0xff]
    %v114 = vld [vmem:[%s1 + $0x298] sm:$0xff]
    %v115 = vld [vmem:[%s1 + $0x2a0] sm:$0xff]
    %v116 = vld [vmem:[%s1 + $0x2a8] sm:$0xff]
    %v117 = vld [vmem:[%s1 + $0x2b0] sm:$0xff]
    %v118 = vld [vmem:[%s1 + $0x2b8] sm:$0xff]
    %v119 = vld [vmem:[%s1 + $0x2c0] sm:$0xff]
    %v120 = vld [vmem:[%s1 + $0x2c8] sm:$0xff]
    %v121 = vld [vmem:[%s1 + $0x2d0] sm:$0xff]
    %v122 = vld [vmem:[%s1 + $0x2d8] sm:$0xff]
    %v123 = vld [vmem:[%s1 + $0x2e0] sm:$0xff]
    %v124 = vld [vmem:[%s1 + $0x2e8] sm:$0xff]
    %v125 = vld [vmem:[%s1 + $0x2f0] sm:$0xff]
    %v126 = vld [vmem:[%s1 + $0x2f8] sm:$0xff]
    %v127 = vld [vmem:[%s1 + $0x300] sm:$0xff]
    %v128 = vld [vmem:[%s1 + $0x308] sm:$0xff]
    %v129 = vld [vmem:[%s1 + $0x310] sm:$0xff]
    %v130 = vld [vmem:[%s1 + $0x318] sm:$0xff]
    %v131 = vld [vmem:[%s1 + $0x320] sm:$0xff]
    %v132 = vld [vmem:[%s1 + $0x328] sm:$0xff]
    %v133 = vld [vmem:[%s1 + $0x330] sm:$0xff]
    %v134 = vld [vmem:[%s1 + $0x338] sm:$0xff]
    %v135 = vld [vmem:[%s1 + $0x340] sm:$0xff]
    %v136 = vld [vmem:[%s1 + $0x348] sm:$0xff]
    %v137 = vld [vmem:[%s1 + $0x350] sm:$0xff]
    %v138 = vld [vmem:[%s1 + $0x358] sm:$0xff]
    %v139 = vld [vmem:[%s1 + $0x360] sm:$0xff]
    %v140 = vld [vmem:[%s1 + $0x368] sm:$0xff]
    %v141 = vld [vmem:[%s1 + $0x370] sm:$0xff]
    %v142 = vld [vmem:[%s1 + $0x378] sm:$0xff]
    %v143 = vld [vmem:[%s1 + $0x380] sm:$0xff]
    %v144 = vld [vmem:[%s1 + $0x388] sm:$0xff]
    %v145 = vld [vmem:[%s1 + $0x390] sm:$0xff]
    %v146 = vld [vmem:[%s1 + $0x398] sm:$0xff]
    %v147 = vld [vmem:[%s1 + $0x3a0] sm:$0xff]
    %v148 = vld [vmem:[%s1 + $0x3a8] sm:$0xff]
    %v149 = vld [vmem:[%s1 + $0x3b0] sm:$0xff]
    %v150 = vld [vmem:[%s1 + $0x3b8] sm:$0xff]
    %v151 = vld [vmem:[%s1 + $0x3c0] sm:$0xff]
    %v152 = vld [vmem:[%s1 + $0x3c8] sm:$0xff]
    %v153 = vld [vmem:[%s1 + $0x3d0] sm:$0xff]
    %v154 = vld [vmem:[%s1 + $0x3d8] sm:$0xff]
    %v155 = vld [vmem:[%s1 + $0x3e0] sm:$0xff]
    %v156 = vld [vmem:[%s1 + $0x3e8] sm:$0xff]
    %v157 = vld [vmem:[%s1 + $0x3f0] sm:$0xff]
    %v158 = vld [vmem:[%s1 + $0x3f8] sm:$0xff]
    %v159 = vld [vmem:[%s1 + $0x400] sm:$0xff]
    %v160 = vld [vmem:[%s1 + $0x408] sm:$0xff]
    %v161 = vld [vmem:[%s1 + $0x410] sm:$0xff]
    %v162 = vld [vmem:[%s1 + $0x418] sm:$0xff]
    %v163 = vld [vmem:[%s1 + $0x420] sm:$0xff]
    %v164 = vld [vmem:[%s1 + $0x428] sm:$0xff]
    %v165 = vld [vmem:[%s1 + $0x430] sm:$0xff]
    %v166 = vld [vmem:[%s1 + $0x438] sm:$0xff]
    %v167 = vld [vmem:[%s1 + $0x440] sm:$0xff]
    %v168 = vld [vmem:[%s1 + $0x448] sm:$0xff]
    %v169 = vld [vmem:[%s1 + $0x450] sm:$0xff]
    %v170 = vld [vmem:[%s1 + $0x458] sm:$0xff]
    %v171 = vld [vmem:[%s1 + $0x460] sm:$0xff]
    %v172 = vld [vmem:[%s1 + $0x468] sm:$0xff]
    %v173 = vld [vmem:[%s1 + $0x470] sm:$0xff]
    %v174 = vld [vmem:[%s1 + $0x478] sm:$0xff]
    %v175 = vld [vmem:[%s1 + $0x480] sm:$0xff]
    %v176 = vld [vmem:[%s1 + $0x488] sm:$0xff]
    %v177 = vld [vmem:[%s1 + $0x490] sm:$0xff]
    %v178 = vld [vmem:[%s1 + $0x498] sm:$0xff]
    %v179 = vld [vmem:[%s1 + $0x4a0] sm:$0xff]
    %v180 = vld [vmem:[%s1 + $0x4a8] sm:$0xff]
    %v181 = vld [vmem:[%s1 + $0x4b0] sm:$0xff]
    %v182 = vld [vmem:[%s1 + $0x4b8] sm:$0xff]
    %v183 = vld [vmem:[%s1 + $0x4c0] sm:$0xff]
    %v184 = vld [vmem:[%s1 + $0x4c8] sm:$0xff]
    %v185 = vld [vmem:[%s1 + $0x4d0] sm:$0xff]
    %v186 = vld [vmem:[%s1 + $0x4d8] sm:$0xff]
    %v187 = vld [vmem:[%s1 + $0x4e0] sm:$0xff]
    %v188 = vld [vmem:[%s1 + $0x4e8] sm:$0xff]
    %v189 = vld [vmem:[%s1 + $0x4f0] sm:$0xff]
    %v190 = vld [vmem:[%s1 + $0x4f8] sm:$0xff]
    %v191 = vld [vmem:[%s1 + $0x500] sm:$0xff]
    %v192 = vld [vmem:[%s1 + $0x508] sm:$0xff]
    %v193 = vld [vmem:[%s1 + $0x510] sm:$0xff]
    %v194 = vld [vmem:[%s1 + $0x518] sm:$0xff]
    %v195 = vld [vmem:[%s1 + $0x520] sm:$0xff]
    %v196 = vld [vmem:[%s1 + $0x528] sm:$0xff]
    %v197 = vld [vmem:[%s1 + $0x530] sm:$0xff]
    %v198 = vld [vmem:[%s1 + $0x538] sm:$0xff]
    %v199 = vld [vmem:[%s1 + $0x540] sm:$0xff]
    %v200 = vld [vmem:[%s1 + $0x548] sm:$0xff]
    %v201 = vld [vmem:[%s1 + $0x550] sm:$0xff]
    %v202 = vld [vmem:[%s1 + $0x558] sm:$0xff]
    %v203 = vld [vmem:[%s1 + $0x560] sm:$0xff]
    %v204 = vld [vmem:[%s1 + $0x568] sm:$0xff]
    %v205 = vld [vmem:[%s1 + $0x570] sm:$0xff]
    %v206 = vld [vmem:[%s1 + $0x578] sm:$0xff]
    %v207 = vld [vmem:[%s1 + $0x580] sm:$0xff]
    %v208 = vld [vmem:[%s1 + $0x588] sm:$0xff]
    %v209 = vld [vmem:[%s1 + $0x590] sm:$0xff]
    %v210 = vld [vmem:[%s1 + $0x598] sm:$0xff]
    %v211 = vld [vmem:[%s1 + $0x5a0] sm:$0xff]
    %v212 = vld [vmem:[%s1 + $0x5a8] sm:$0xff]
    %v213 = vld [vmem:[%s1 + $0x5b0] sm:$0xff]
    %v214 = vld [vmem:[%s1 + $0x5b8] sm:$0xff]
    %v215 = vld [vmem:[%s1 + $0x5c0] sm:$0xff]
    %v216 = vld [vmem:[%s1 + $0x5c8] sm:$0xff]
    %v217 = vld [vmem:[%s1 + $0x5d0] sm:$0xff]
    %v218 = vld [vmem:[%s1 + $0x5d8] sm:$0xff]
    %v219 = vld [vmem:[%s1 + $0x5e0] sm:$0xff]
    %v220 = vld [vmem:[%s1 + $0x5e8] sm:$0xff]
    %v221 = vld [vmem:[%s1 + $0x5f0] sm:$0xff]
    %v222 = vld [vmem:[%s1 + $0x5f8] sm:$0xff]
    %v223 = vld [vmem:[%s1 + $0x600] sm:$0xff]
    %v224 = vld [vmem:[%s1 + $0x608] sm:$0xff]
    %v225 = vld [vmem:[%s1 + $0x610] sm:$0xff]
    %v226 = vld [vmem:[%s1 + $0x618] sm:$0xff]
    %v227 = vld [vmem:[%s1 + $0x620] sm:$0xff]
    %v228 = vld [vmem:[%s1 + $0x628] sm:$0xff]
    %v229 = vld [vmem:[%s1 + $0x630] sm:$0xff]
    %v230 = vld [vmem:[%s1 + $0x638] sm:$0xff]
    %v231 = vld [vmem:[%s1 + $0x640] sm:$0xff]
    %v232 = vld [vmem:[%s1 + $0x648] sm:$0xff]
    %v233 = vld [vmem:[%s1 + $0x650] sm:$0xff]
    %v234 = vld [vmem:[%s1 + $0x658] sm:$0xff]
    %v235 = vld [vmem:[%s1 + $0x660] sm:$0xff]
    %v236 = vld [vmem:[%s1 + $0x668] sm:$0xff]
    %v237 = vld [vmem:[%s1 + $0x670] sm:$0xff]
    %v238 = vld [vmem:[%s1 + $0x678] sm:$0xff]
    %v239 = vld [vmem:[%s1 + $0x680] sm:$0xff]
    %v240 = vld [vmem:[%s1 + $0x688] sm:$0xff]
    %v241 = vld [vmem:[%s1 + $0x690] sm:$0xff]
    %v242 = vld [vmem:[%s1 + $0x698] sm:$0xff]
    %v243 = vld [vmem:[%s1 + $0x6a0] sm:$0xff]
    %v244 = vld [vmem:[%s1 + $0x6a8] sm:$0xff]
    %v245 = vld [vmem:[%s1 + $0x6b0] sm:$0xff]
    %v246 = vld [vmem:[%s1 + $0x6b8] sm:$0xff]
    %v247 = vld [vmem:[%s1 + $0x6c0] sm:$0xff]
    %v248 = vld [vmem:[%s1 + $0x6c8] sm:$0xff]
    %v249 = vld [vmem:[%s1 + $0x6d0] sm:$0xff]
    %v250 = vld [vmem:[%s1 + $0x6d8] sm:$0xff]
    %v251 = vld [vmem:[%s1 + $0x6e0] sm:$0xff]
    %v252 = vld [vmem:[%s1 + $0x6e8] sm:$0xff]
    %v253 = vld [vmem:[%s1 + $0x6f0] sm:$0xff]
    %v254 = vld [vmem:[%s1 + $0x6f8] sm:$0xff]
    %v255 = vld [vmem:[%s1 + $0x700] sm:$0xff]
    %v256 = vld [vmem:[%s1 + $0x708] sm:$0xff]
    %v257 = vld [vmem:[%s1 + $0x710] sm:$0xff]
    %v258 = vld [vmem:[%s1 + $0x718] sm:$0xff]
    %v259 = vld [vmem:[%s1 + $0x720] sm:$0xff]
    %v260 = vld [vmem:[%s1 + $0x728] sm:$0xff]
    %v261 = vld [vmem:[%s1 + $0x730] sm:$0xff]
    %v262 = vld [vmem:[%s1 + $0x738] sm:$0xff]
    %v263 = vld [vmem:[%s1 + $0x740] sm:$0xff]
    %v264 = vld [vmem:[%s1 + $0x748] sm:$0xff]
    %v265 = vld [vmem:[%s1 + $0x750] sm:$0xff]
    %v266 = vld [vmem:[%s1 + $0x758] sm:$0xff]
    %v267 = vld [vmem:[%s1 + $0x760] sm:$0xff]
    %v268 = vld [vmem:[%s1 + $0x768] sm:$0xff]
    %v269 = vld [vmem:[%s1 + $0x770] sm:$0xff]
    %v270 = vld [vmem:[%s1 + $0x778] sm:$0xff]
    %v271 = vld [vmem:[%s1 + $0x780] sm:$0xff]
    %v272 = vld [vmem:[%s1 + $0x788] sm:$0xff]
    %v273 = vld [vmem:[%s1 + $0x790] sm:$0xff]
    %v274 = vld [vmem:[%s1 + $0x798] sm:$0xff]
    %v275 = vld [vmem:[%s1 + $0x7a0] sm:$0xff]
    %v276 = vld [vmem:[%s1 + $0x7a8] sm:$0xff]
    %v277 = vld [vmem:[%s1 + $0x7b0] sm:$0xff]
    %v278 = vld [vmem:[%s1 + $0x7b8] sm:$0xff]
    %v279 = vld [vmem:[%s1 + $0x7c0] sm:$0xff]
    %v280 = vld [vmem:[%s1 + $0x7c8] sm:$0xff]
    %v281 = vld [vmem:[%s1 + $0x7d0] sm:$0xff]
    %v282 = vld [vmem:[%s1 + $0x7d8] sm:$0xff]
    %v283 = vld [vmem:[%s1 + $0x7e0] sm:$0xff]
    %v284 = vld [vmem:[%s1 + $0x7e8] sm:$0xff]
    %v285 = vld [vmem:[%s1 + $0x7f0] sm:$0xff]
    %v286 = vld [vmem:[%s1 + $0x7f8] sm:$0xff]
    %v287 = vld [vmem:[%s1 + $0x800] sm:$0xff]
    %v288 = vld [vmem:[%s1 + $0x808] sm:$0xff]
    %v289 = vld [vmem:[%s1 + $0x810] sm:$0xff]
    %v290 = vld [vmem:[%s1 + $0x818] sm:$0xff]
    %v291 = vld [vmem:[%s1 + $0x820] sm:$0xff]
    %v292 = vld [vmem:[%s1 + $0x828] sm:$0xff]
    %v293 = vld [vmem:[%s1 + $0x830] sm:$0xff]
    %v294 = vld [vmem:[%s1 + $0x838] sm:$0xff]
    %v295 = vld [vmem:[%s1 + $0x840] sm:$0xff]
    %v296 = vld [vmem:[%s1 + $0x848] sm:$0xff]
    %v297 = vld [vmem:[%s1 + $0x850] sm:$0xff]
    %v298 = vld [vmem:[%s1 + $0x858] sm:$0xff]
    %v299 = vld [vmem:[%s1 + $0x860] sm:$0xff]
    %v300 = vld [vmem:[%s1 + $0x868] sm:$0xff]
    %v301 = vld [vmem:[%s1 + $0x870] sm:$0xff]
    %v302 = vld [vmem:[%s1 + $0x878] sm:$0xff]
    %v303 = vld [vmem:[%s1 + $0x880] sm:$0xff]
    %v304 = vld [vmem:[%s1 + $0x888] sm:$0xff]
    %v305 = vld [vmem:[%s1 + $0x890] sm:$0xff]
    %v306 = vld [vmem:[%s1 + $0x898] sm:$0xff]
    %v307 = vld [vmem:[%s1 + $0x8a0] sm:$0xff]
    %v308 = vld [vmem:[%s1 + $0x8a8] sm:$0xff]
    %v309 = vld [vmem:[%s1 + $0x8b0] sm:$0xff]
    %v310 = vld [vmem:[%s1 + $0x8b8] sm:$0xff]
    %v311 = vld [vmem:[%s1 + $0x8c0] sm:$0xff]
    %v312 = vld [vmem:[%s1 + $0x8c8] sm:$0xff]
    %v313 = vld [vmem:[%s1 + $0x8d0] sm:$0xff]
    %v314 = vld [vmem:[%s1 + $0x8d8] sm:$0xff]
    %v315 = vld [vmem:[%s1 + $0x8e0] sm:$0xff]
    %v316 = vld [vmem:[%s1 + $0x8e8] sm:$0xff]
    %v317 = vld [vmem:[%s1 + $0x8f0] sm:$0xff]
    %v318 = vld [vmem:[%s1 + $0x8f8] sm:$0xff]
    %v319 = vld [vmem:[%s2] sm:$0x3]
    %v321 = vlaneseq
    %v322 = vshrl.u32 %v321, 7
    %v323 = vsub.s32 0, %v322
    %v324 = vrot.slane %v319, %v323
    %v325 = vlaneseq
    %v326 = vshrl.u32 %v325, 7
    %v327 = vsub.s32 1, %v326
    %v328 = vrot.slane %v319, %v327
    %v334 = vcombine.high %v28, %v28
    %v336 = vunpack.c.l.s4 1966171168
    %v337 = vunpack.c.0.s8 %v336
    %v338 = vlaneseq
    %v339 = vshrl.u32 %v338, 7
    %v340 = vsub.s32 %v337, %v339
    %v341 = vrot.slane %v28, %v340
    %v343 = vunpack.c.l.s4 1966171168
    %v344 = vunpack.c.0.s8 %v343
    %v345 = vlaneseq
    %v346 = vshrl.u32 %v345, 7
    %v347 = vsub.s32 %v344, %v346
    %v348 = vrot.slane %v334, %v347
    %v349 = vcombine.high %v341, %v341
    %v350 = vcombine.high %v348, %v348
    %v352 = vunpack.c.l.s4 1966171168
    %v353 = vunpack.c.0.s8 %v352
    %v354 = vlaneseq
    %v355 = vshrl.u32 %v354, 7
    %v356 = vsub.s32 %v353, %v355
    %v357 = vrot.slane %v341, %v356
    %v359 = vunpack.c.l.s4 1966171168
    %v360 = vunpack.c.0.s8 %v359
    %v361 = vlaneseq
    %v362 = vshrl.u32 %v361, 7
    %v363 = vsub.s32 %v360, %v362
    %v364 = vrot.slane %v348, %v363
    %v366 = vunpack.c.l.s4 1966171168
    %v367 = vunpack.c.0.s8 %v366
    %v368 = vlaneseq
    %v369 = vshrl.u32 %v368, 7
    %v370 = vsub.s32 %v367, %v369
    %v371 = vrot.slane %v349, %v370
    %v373 = vunpack.c.l.s4 1966171168
    %v374 = vunpack.c.0.s8 %v373
    %v375 = vlaneseq
    %v376 = vshrl.u32 %v375, 7
    %v377 = vsub.s32 %v374, %v376
    %v378 = vrot.slane %v350, %v377
    %v379 = vcombine.high %v357, %v357
    %v380 = vcombine.high %v364, %v364
    %v381 = vcombine.high %v371, %v371
    %v382 = vcombine.high %v378, %v378
    %v383 = vcombine.high %v29, %v29
    %v385 = vunpack.c.l.s4 1966171168
    %v386 = vunpack.c.0.s8 %v385
    %v387 = vlaneseq
    %v388 = vshrl.u32 %v387, 7
    %v389 = vsub.s32 %v386, %v388
    %v390 = vrot.slane %v29, %v389
    %v392 = vunpack.c.l.s4 1966171168
    %v393 = vunpack.c.0.s8 %v392
    %v394 = vlaneseq
    %v395 = vshrl.u32 %v394, 7
    %v396 = vsub.s32 %v393, %v395
    %v397 = vrot.slane %v383, %v396
    %v398 = vcombine.high %v390, %v390
    %v399 = vcombine.high %v397, %v397
    %v401 = vunpack.c.l.s4 1966171168
    %v402 = vunpack.c.0.s8 %v401
    %v403 = vlaneseq
    %v404 = vshrl.u32 %v403, 7
    %v405 = vsub.s32 %v402, %v404
    %v406 = vrot.slane %v390, %v405
    %v408 = vunpack.c.l.s4 1966171168
    %v409 = vunpack.c.0.s8 %v408
    %v410 = vlaneseq
    %v411 = vshrl.u32 %v410, 7
    %v412 = vsub.s32 %v409, %v411
    %v413 = vrot.slane %v397, %v412
    %v415 = vunpack.c.l.s4 1966171168
    %v416 = vunpack.c.0.s8 %v415
    %v417 = vlaneseq
    %v418 = vshrl.u32 %v417, 7
    %v419 = vsub.s32 %v416, %v418
    %v420 = vrot.slane %v398, %v419
    %v422 = vunpack.c.l.s4 1966171168
    %v423 = vunpack.c.0.s8 %v422
    %v424 = vlaneseq
    %v425 = vshrl.u32 %v424, 7
    %v426 = vsub.s32 %v423, %v425
    %v427 = vrot.slane %v399, %v426
    %v428 = vcombine.high %v406, %v406
    %v429 = vcombine.high %v413, %v413
    %v430 = vcombine.high %v420, %v420
    %v431 = vcombine.high %v427, %v427
    %v433 = vunpack.c.l.s4 1966171168
    %v434 = vunpack.c.0.s8 %v433
    %v435 = vlaneseq
    %v436 = vshrl.u32 %v435, 7
    %v437 = vsub.s32 %v434, %v436
    %v438 = vrot.slane %v30, %v437
    %v439 = vcombine.high %v438, %v438
    %v441 = vunpack.c.l.s4 1966171168
    %v442 = vunpack.c.0.s8 %v441
    %v443 = vlaneseq
    %v444 = vshrl.u32 %v443, 7
    %v445 = vsub.s32 %v442, %v444
    %v446 = vrot.slane %v438, %v445
    %v448 = vunpack.c.l.s4 1966171168
    %v449 = vunpack.c.0.s8 %v448
    %v450 = vlaneseq
    %v451 = vshrl.u32 %v450, 7
    %v452 = vsub.s32 %v449, %v451
    %v453 = vrot.slane %v439, %v452
    %v760 = vunpack.c.l.b16 %v31
    %v761 = vunpack.c.h.b16 %v31
    %v762 = vunpack.c.l.b16 %v32
    %v763 = vunpack.c.h.b16 %v32
    %v764 = vunpack.c.l.b16 %v33
    %v765 = vunpack.c.h.b16 %v33
    %v766 = vunpack.c.l.b16 %v34
    %v767 = vunpack.c.h.b16 %v34
    %v768 = vunpack.c.l.b16 %v35
    %v769 = vunpack.c.h.b16 %v35
    %v770 = vunpack.c.l.b16 %v36
    %v771 = vunpack.c.h.b16 %v36
    %v772 = vunpack.c.l.b16 %v37
    %v773 = vunpack.c.h.b16 %v37
    %v774 = vunpack.c.l.b16 %v38
    %v775 = vunpack.c.h.b16 %v38
    %v776 = vunpack.c.l.b16 %v39
    %v777 = vunpack.c.h.b16 %v39
    %v778 = vunpack.c.l.b16 %v40
    %v779 = vunpack.c.h.b16 %v40
    %v780 = vunpack.c.l.b16 %v41
    %v781 = vunpack.c.h.b16 %v41
    %v782 = vunpack.c.l.b16 %v42
    %v783 = vunpack.c.h.b16 %v42
    %v784 = vunpack.c.l.b16 %v43
    %v785 = vunpack.c.h.b16 %v43
    %v786 = vunpack.c.l.b16 %v44
    %v787 = vunpack.c.h.b16 %v44
    %v788 = vunpack.c.l.b16 %v45
    %v789 = vunpack.c.h.b16 %v45
    %v790 = vunpack.c.l.b16 %v46
    %v791 = vunpack.c.h.b16 %v46
    %v792 = vunpack.c.l.b16 %v47
    %v793 = vunpack.c.h.b16 %v47
    %v794 = vunpack.c.l.b16 %v48
    %v795 = vunpack.c.h.b16 %v48
    %v796 = vunpack.c.l.b16 %v49
    %v797 = vunpack.c.h.b16 %v49
    %v798 = vunpack.c.l.b16 %v50
    %v799 = vunpack.c.h.b16 %v50
    %v800 = vunpack.c.l.b16 %v51
    %v801 = vunpack.c.h.b16 %v51
    %v802 = vunpack.c.l.b16 %v52
    %v803 = vunpack.c.h.b16 %v52
    %v804 = vunpack.c.l.b16 %v53
    %v805 = vunpack.c.h.b16 %v53
    %v806 = vunpack.c.l.b16 %v54
    %v807 = vunpack.c.h.b16 %v54
    %v808 = vunpack.c.l.b16 %v55
    %v809 = vunpack.c.h.b16 %v55
    %v810 = vunpack.c.l.b16 %v56
    %v811 = vunpack.c.h.b16 %v56
    %v812 = vunpack.c.l.b16 %v57
    %v813 = vunpack.c.h.b16 %v57
    %v814 = vunpack.c.l.b16 %v58
    %v815 = vunpack.c.h.b16 %v58
    %v816 = vunpack.c.l.b16 %v59
    %v817 = vunpack.c.h.b16 %v59
    %v818 = vunpack.c.l.b16 %v60
    %v819 = vunpack.c.h.b16 %v60
    %v820 = vunpack.c.l.b16 %v61
    %v821 = vunpack.c.h.b16 %v61
    %v822 = vunpack.c.l.b16 %v62
    %v823 = vunpack.c.h.b16 %v62
    %v824 = vunpack.c.l.b16 %v63
    %v825 = vunpack.c.h.b16 %v63
    %v826 = vunpack.c.l.b16 %v64
    %v827 = vunpack.c.h.b16 %v64
    %v828 = vunpack.c.l.b16 %v65
    %v829 = vunpack.c.h.b16 %v65
    %v830 = vunpack.c.l.b16 %v66
    %v831 = vunpack.c.h.b16 %v66
    %v832 = vunpack.c.l.b16 %v67
    %v833 = vunpack.c.h.b16 %v67
    %v834 = vunpack.c.l.b16 %v68
    %v835 = vunpack.c.h.b16 %v68
    %v836 = vunpack.c.l.b16 %v69
    %v837 = vunpack.c.h.b16 %v69
    %v838 = vunpack.c.l.b16 %v70
    %v839 = vunpack.c.h.b16 %v70
    %v840 = vunpack.c.l.b16 %v71
    %v841 = vunpack.c.h.b16 %v71
    %v842 = vunpack.c.l.b16 %v72
    %v843 = vunpack.c.h.b16 %v72
    %v844 = vunpack.c.l.b16 %v73
    %v845 = vunpack.c.h.b16 %v73
    %v846 = vunpack.c.l.b16 %v74
    %v847 = vunpack.c.h.b16 %v74
    %v848 = vunpack.c.l.b16 %v75
    %v849 = vunpack.c.h.b16 %v75
    %v850 = vunpack.c.l.b16 %v76
    %v851 = vunpack.c.h.b16 %v76
    %v852 = vunpack.c.l.b16 %v77
    %v853 = vunpack.c.h.b16 %v77
    %v854 = vunpack.c.l.b16 %v78
    %v855 = vunpack.c.h.b16 %v78
    %v856 = vunpack.c.l.b16 %v79
    %v857 = vunpack.c.h.b16 %v79
    %v858 = vunpack.c.l.b16 %v80
    %v859 = vunpack.c.h.b16 %v80
    %v860 = vunpack.c.l.b16 %v81
    %v861 = vunpack.c.h.b16 %v81
    %v862 = vunpack.c.l.b16 %v82
    %v863 = vunpack.c.h.b16 %v82
    %v864 = vunpack.c.l.b16 %v83
    %v865 = vunpack.c.h.b16 %v83
    %v866 = vunpack.c.l.b16 %v84
    %v867 = vunpack.c.h.b16 %v84
    %v868 = vunpack.c.l.b16 %v85
    %v869 = vunpack.c.h.b16 %v85
    %v870 = vunpack.c.l.b16 %v86
    %v871 = vunpack.c.h.b16 %v86
    %v872 = vunpack.c.l.b16 %v87
    %v873 = vunpack.c.h.b16 %v87
    %v874 = vunpack.c.l.b16 %v88
    %v875 = vunpack.c.h.b16 %v88
    %v876 = vunpack.c.l.b16 %v89
    %v877 = vunpack.c.h.b16 %v89
    %v878 = vunpack.c.l.b16 %v90
    %v879 = vunpack.c.h.b16 %v90
    %v880 = vunpack.c.l.b16 %v91
    %v881 = vunpack.c.h.b16 %v91
    %v882 = vunpack.c.l.b16 %v92
    %v883 = vunpack.c.h.b16 %v92
    %v884 = vunpack.c.l.b16 %v93
    %v885 = vunpack.c.h.b16 %v93
    %v886 = vunpack.c.l.b16 %v94
    %v887 = vunpack.c.h.b16 %v94
    %v888 = vunpack.c.l.b16 %v95
    %v889 = vunpack.c.h.b16 %v95
    %v890 = vunpack.c.l.b16 %v96
    %v891 = vunpack.c.h.b16 %v96
    %v892 = vunpack.c.l.b16 %v97
    %v893 = vunpack.c.h.b16 %v97
    %v894 = vunpack.c.l.b16 %v98
    %v895 = vunpack.c.h.b16 %v98
    %v896 = vunpack.c.l.b16 %v99
    %v897 = vunpack.c.h.b16 %v99
    %v898 = vunpack.c.l.b16 %v100
    %v899 = vunpack.c.h.b16 %v100
    %v900 = vunpack.c.l.b16 %v101
    %v901 = vunpack.c.h.b16 %v101
    %v902 = vunpack.c.l.b16 %v102
    %v903 = vunpack.c.h.b16 %v102
    %v904 = vunpack.c.l.b16 %v103
    %v905 = vunpack.c.h.b16 %v103
    %v906 = vunpack.c.l.b16 %v104
    %v907 = vunpack.c.h.b16 %v104
    %v908 = vunpack.c.l.b16 %v105
    %v909 = vunpack.c.h.b16 %v105
    %v910 = vunpack.c.l.b16 %v106
    %v911 = vunpack.c.h.b16 %v106
    %v912 = vunpack.c.l.b16 %v107
    %v913 = vunpack.c.h.b16 %v107
    %v914 = vunpack.c.l.b16 %v108
    %v915 = vunpack.c.h.b16 %v108
    %v916 = vunpack.c.l.b16 %v109
    %v917 = vunpack.c.h.b16 %v109
    %v918 = vunpack.c.l.b16 %v110
    %v919 = vunpack.c.h.b16 %v110
    %v920 = vunpack.c.l.b16 %v111
    %v921 = vunpack.c.h.b16 %v111
    %v922 = vunpack.c.l.b16 %v112
    %v923 = vunpack.c.h.b16 %v112
    %v924 = vunpack.c.l.b16 %v113
    %v925 = vunpack.c.h.b16 %v113
    %v926 = vunpack.c.l.b16 %v114
    %v927 = vunpack.c.h.b16 %v114
    %v928 = vunpack.c.l.b16 %v115
    %v929 = vunpack.c.h.b16 %v115
    %v930 = vunpack.c.l.b16 %v116
    %v931 = vunpack.c.h.b16 %v116
    %v932 = vunpack.c.l.b16 %v117
    %v933 = vunpack.c.h.b16 %v117
    %v934 = vunpack.c.l.b16 %v118
    %v935 = vunpack.c.h.b16 %v118
    %v936 = vunpack.c.l.b16 %v119
    %v937 = vunpack.c.h.b16 %v119
    %v938 = vunpack.c.l.b16 %v120
    %v939 = vunpack.c.h.b16 %v120
    %v940 = vunpack.c.l.b16 %v121
    %v941 = vunpack.c.h.b16 %v121
    %v942 = vunpack.c.l.b16 %v122
    %v943 = vunpack.c.h.b16 %v122
    %v944 = vunpack.c.l.b16 %v123
    %v945 = vunpack.c.h.b16 %v123
    %v946 = vunpack.c.l.b16 %v124
    %v947 = vunpack.c.h.b16 %v124
    %v948 = vunpack.c.l.b16 %v125
    %v949 = vunpack.c.h.b16 %v125
    %v950 = vunpack.c.l.b16 %v126
    %v951 = vunpack.c.h.b16 %v126
    %v952 = vunpack.c.l.b16 %v127
    %v953 = vunpack.c.h.b16 %v127
    %v954 = vunpack.c.l.b16 %v128
    %v955 = vunpack.c.h.b16 %v128
    %v956 = vunpack.c.l.b16 %v129
    %v957 = vunpack.c.h.b16 %v129
    %v958 = vunpack.c.l.b16 %v130
    %v959 = vunpack.c.h.b16 %v130
    %v960 = vunpack.c.l.b16 %v131
    %v961 = vunpack.c.h.b16 %v131
    %v962 = vunpack.c.l.b16 %v132
    %v963 = vunpack.c.h.b16 %v132
    %v964 = vunpack.c.l.b16 %v133
    %v965 = vunpack.c.h.b16 %v133
    %v966 = vunpack.c.l.b16 %v134
    %v967 = vunpack.c.h.b16 %v134
    %v968 = vunpack.c.l.b16 %v135
    %v969 = vunpack.c.h.b16 %v135
    %v970 = vunpack.c.l.b16 %v136
    %v971 = vunpack.c.h.b16 %v136
    %v972 = vunpack.c.l.b16 %v137
    %v973 = vunpack.c.h.b16 %v137
    %v974 = vunpack.c.l.b16 %v138
    %v975 = vunpack.c.h.b16 %v138
    %v976 = vunpack.c.l.b16 %v139
    %v977 = vunpack.c.h.b16 %v139
    %v978 = vunpack.c.l.b16 %v140
    %v979 = vunpack.c.h.b16 %v140
    %v980 = vunpack.c.l.b16 %v141
    %v981 = vunpack.c.h.b16 %v141
    %v982 = vunpack.c.l.b16 %v142
    %v983 = vunpack.c.h.b16 %v142
    %v984 = vunpack.c.l.b16 %v143
    %v985 = vunpack.c.h.b16 %v143
    %v986 = vunpack.c.l.b16 %v144
    %v987 = vunpack.c.h.b16 %v144
    %v988 = vunpack.c.l.b16 %v145
    %v989 = vunpack.c.h.b16 %v145
    %v990 = vunpack.c.l.b16 %v146
    %v991 = vunpack.c.h.b16 %v146
    %v992 = vunpack.c.l.b16 %v147
    %v993 = vunpack.c.h.b16 %v147
    %v994 = vunpack.c.l.b16 %v148
    %v995 = vunpack.c.h.b16 %v148
    %v996 = vunpack.c.l.b16 %v149
    %v997 = vunpack.c.h.b16 %v149
    %v998 = vunpack.c.l.b16 %v150
    %v999 = vunpack.c.h.b16 %v150
    %v1000 = vunpack.c.l.b16 %v151
    %v1001 = vunpack.c.h.b16 %v151
    %v1002 = vunpack.c.l.b16 %v152
    %v1003 = vunpack.c.h.b16 %v152
    %v1004 = vunpack.c.l.b16 %v153
    %v1005 = vunpack.c.h.b16 %v153
    %v1006 = vunpack.c.l.b16 %v154
    %v1007 = vunpack.c.h.b16 %v154
    %v1008 = vunpack.c.l.b16 %v155
    %v1009 = vunpack.c.h.b16 %v155
    %v1010 = vunpack.c.l.b16 %v156
    %v1011 = vunpack.c.h.b16 %v156
    %v1012 = vunpack.c.l.b16 %v157
    %v1013 = vunpack.c.h.b16 %v157
    %v1014 = vunpack.c.l.b16 %v158
    %v1015 = vunpack.c.h.b16 %v158
    %v1016 = vunpack.c.l.b16 %v159
    %v1017 = vunpack.c.h.b16 %v159
    %v1018 = vunpack.c.l.b16 %v160
    %v1019 = vunpack.c.h.b16 %v160
    %v1020 = vunpack.c.l.b16 %v161
    %v1021 = vunpack.c.h.b16 %v161
    %v1022 = vunpack.c.l.b16 %v162
    %v1023 = vunpack.c.h.b16 %v162
    %v1024 = vunpack.c.l.b16 %v163
    %v1025 = vunpack.c.h.b16 %v163
    %v1026 = vunpack.c.l.b16 %v164
    %v1027 = vunpack.c.h.b16 %v164
    %v1028 = vunpack.c.l.b16 %v165
    %v1029 = vunpack.c.h.b16 %v165
    %v1030 = vunpack.c.l.b16 %v166
    %v1031 = vunpack.c.h.b16 %v166
    %v1032 = vunpack.c.l.b16 %v167
    %v1033 = vunpack.c.h.b16 %v167
    %v1034 = vunpack.c.l.b16 %v168
    %v1035 = vunpack.c.h.b16 %v168
    %v1036 = vunpack.c.l.b16 %v169
    %v1037 = vunpack.c.h.b16 %v169
    %v1038 = vunpack.c.l.b16 %v170
    %v1039 = vunpack.c.h.b16 %v170
    %v1040 = vunpack.c.l.b16 %v171
    %v1041 = vunpack.c.h.b16 %v171
    %v1042 = vunpack.c.l.b16 %v172
    %v1043 = vunpack.c.h.b16 %v172
    %v1044 = vunpack.c.l.b16 %v173
    %v1045 = vunpack.c.h.b16 %v173
    %v1046 = vunpack.c.l.b16 %v174
    %v1047 = vunpack.c.h.b16 %v174
    %v1048 = vunpack.c.l.b16 %v175
    %v1049 = vunpack.c.h.b16 %v175
    %v1050 = vunpack.c.l.b16 %v176
    %v1051 = vunpack.c.h.b16 %v176
    %v1052 = vunpack.c.l.b16 %v177
    %v1053 = vunpack.c.h.b16 %v177
    %v1054 = vunpack.c.l.b16 %v178
    %v1055 = vunpack.c.h.b16 %v178
    %v1056 = vunpack.c.l.b16 %v179
    %v1057 = vunpack.c.h.b16 %v179
    %v1058 = vunpack.c.l.b16 %v180
    %v1059 = vunpack.c.h.b16 %v180
    %v1060 = vunpack.c.l.b16 %v181
    %v1061 = vunpack.c.h.b16 %v181
    %v1062 = vunpack.c.l.b16 %v182
    %v1063 = vunpack.c.h.b16 %v182
    %v1064 = vunpack.c.l.b16 %v183
    %v1065 = vunpack.c.h.b16 %v183
    %v1066 = vunpack.c.l.b16 %v184
    %v1067 = vunpack.c.h.b16 %v184
    %v1068 = vunpack.c.l.b16 %v185
    %v1069 = vunpack.c.h.b16 %v185
    %v1070 = vunpack.c.l.b16 %v186
    %v1071 = vunpack.c.h.b16 %v186
    %v1072 = vunpack.c.l.b16 %v187
    %v1073 = vunpack.c.h.b16 %v187
    %v1074 = vunpack.c.l.b16 %v188
    %v1075 = vunpack.c.h.b16 %v188
    %v1076 = vunpack.c.l.b16 %v189
    %v1077 = vunpack.c.h.b16 %v189
    %v1078 = vunpack.c.l.b16 %v190
    %v1079 = vunpack.c.h.b16 %v190
    %v1080 = vunpack.c.l.b16 %v191
    %v1081 = vunpack.c.h.b16 %v191
    %v1082 = vunpack.c.l.b16 %v192
    %v1083 = vunpack.c.h.b16 %v192
    %v1084 = vunpack.c.l.b16 %v193
    %v1085 = vunpack.c.h.b16 %v193
    %v1086 = vunpack.c.l.b16 %v194
    %v1087 = vunpack.c.h.b16 %v194
    %v1088 = vunpack.c.l.b16 %v195
    %v1089 = vunpack.c.h.b16 %v195
    %v1090 = vunpack.c.l.b16 %v196
    %v1091 = vunpack.c.h.b16 %v196
    %v1092 = vunpack.c.l.b16 %v197
    %v1093 = vunpack.c.h.b16 %v197
    %v1094 = vunpack.c.l.b16 %v198
    %v1095 = vunpack.c.h.b16 %v198
    %v1096 = vunpack.c.l.b16 %v199
    %v1097 = vunpack.c.h.b16 %v199
    %v1098 = vunpack.c.l.b16 %v200
    %v1099 = vunpack.c.h.b16 %v200
    %v1100 = vunpack.c.l.b16 %v201
    %v1101 = vunpack.c.h.b16 %v201
    %v1102 = vunpack.c.l.b16 %v202
    %v1103 = vunpack.c.h.b16 %v202
    %v1104 = vunpack.c.l.b16 %v203
    %v1105 = vunpack.c.h.b16 %v203
    %v1106 = vunpack.c.l.b16 %v204
    %v1107 = vunpack.c.h.b16 %v204
    %v1108 = vunpack.c.l.b16 %v205
    %v1109 = vunpack.c.h.b16 %v205
    %v1110 = vunpack.c.l.b16 %v206
    %v1111 = vunpack.c.h.b16 %v206
    %v1112 = vunpack.c.l.b16 %v207
    %v1113 = vunpack.c.h.b16 %v207
    %v1114 = vunpack.c.l.b16 %v208
    %v1115 = vunpack.c.h.b16 %v208
    %v1116 = vunpack.c.l.b16 %v209
    %v1117 = vunpack.c.h.b16 %v209
    %v1118 = vunpack.c.l.b16 %v210
    %v1119 = vunpack.c.h.b16 %v210
    %v1120 = vunpack.c.l.b16 %v211
    %v1121 = vunpack.c.h.b16 %v211
    %v1122 = vunpack.c.l.b16 %v212
    %v1123 = vunpack.c.h.b16 %v212
    %v1124 = vunpack.c.l.b16 %v213
    %v1125 = vunpack.c.h.b16 %v213
    %v1126 = vunpack.c.l.b16 %v214
    %v1127 = vunpack.c.h.b16 %v214
    %v1128 = vunpack.c.l.b16 %v215
    %v1129 = vunpack.c.h.b16 %v215
    %v1130 = vunpack.c.l.b16 %v216
    %v1131 = vunpack.c.h.b16 %v216
    %v1132 = vunpack.c.l.b16 %v217
    %v1133 = vunpack.c.h.b16 %v217
    %v1134 = vunpack.c.l.b16 %v218
    %v1135 = vunpack.c.h.b16 %v218
    %v1136 = vunpack.c.l.b16 %v219
    %v1137 = vunpack.c.h.b16 %v219
    %v1138 = vunpack.c.l.b16 %v220
    %v1139 = vunpack.c.h.b16 %v220
    %v1140 = vunpack.c.l.b16 %v221
    %v1141 = vunpack.c.h.b16 %v221
    %v1142 = vunpack.c.l.b16 %v222
    %v1143 = vunpack.c.h.b16 %v222
    %v1144 = vunpack.c.l.b16 %v223
    %v1145 = vunpack.c.h.b16 %v223
    %v1146 = vunpack.c.l.b16 %v224
    %v1147 = vunpack.c.h.b16 %v224
    %v1148 = vunpack.c.l.b16 %v225
    %v1149 = vunpack.c.h.b16 %v225
    %v1150 = vunpack.c.l.b16 %v226
    %v1151 = vunpack.c.h.b16 %v226
    %v1152 = vunpack.c.l.b16 %v227
    %v1153 = vunpack.c.h.b16 %v227
    %v1154 = vunpack.c.l.b16 %v228
    %v1155 = vunpack.c.h.b16 %v228
    %v1156 = vunpack.c.l.b16 %v229
    %v1157 = vunpack.c.h.b16 %v229
    %v1158 = vunpack.c.l.b16 %v230
    %v1159 = vunpack.c.h.b16 %v230
    %v1160 = vunpack.c.l.b16 %v231
    %v1161 = vunpack.c.h.b16 %v231
    %v1162 = vunpack.c.l.b16 %v232
    %v1163 = vunpack.c.h.b16 %v232
    %v1164 = vunpack.c.l.b16 %v233
    %v1165 = vunpack.c.h.b16 %v233
    %v1166 = vunpack.c.l.b16 %v234
    %v1167 = vunpack.c.h.b16 %v234
    %v1168 = vunpack.c.l.b16 %v235
    %v1169 = vunpack.c.h.b16 %v235
    %v1170 = vunpack.c.l.b16 %v236
    %v1171 = vunpack.c.h.b16 %v236
    %v1172 = vunpack.c.l.b16 %v237
    %v1173 = vunpack.c.h.b16 %v237
    %v1174 = vunpack.c.l.b16 %v238
    %v1175 = vunpack.c.h.b16 %v238
    %v1176 = vunpack.c.l.b16 %v239
    %v1177 = vunpack.c.h.b16 %v239
    %v1178 = vunpack.c.l.b16 %v240
    %v1179 = vunpack.c.h.b16 %v240
    %v1180 = vunpack.c.l.b16 %v241
    %v1181 = vunpack.c.h.b16 %v241
    %v1182 = vunpack.c.l.b16 %v242
    %v1183 = vunpack.c.h.b16 %v242
    %v1184 = vunpack.c.l.b16 %v243
    %v1185 = vunpack.c.h.b16 %v243
    %v1186 = vunpack.c.l.b16 %v244
    %v1187 = vunpack.c.h.b16 %v244
    %v1188 = vunpack.c.l.b16 %v245
    %v1189 = vunpack.c.h.b16 %v245
    %v1190 = vunpack.c.l.b16 %v246
    %v1191 = vunpack.c.h.b16 %v246
    %v1192 = vunpack.c.l.b16 %v247
    %v1193 = vunpack.c.h.b16 %v247
    %v1194 = vunpack.c.l.b16 %v248
    %v1195 = vunpack.c.h.b16 %v248
    %v1196 = vunpack.c.l.b16 %v249
    %v1197 = vunpack.c.h.b16 %v249
    %v1198 = vunpack.c.l.b16 %v250
    %v1199 = vunpack.c.h.b16 %v250
    %v1200 = vunpack.c.l.b16 %v251
    %v1201 = vunpack.c.h.b16 %v251
    %v1202 = vunpack.c.l.b16 %v252
    %v1203 = vunpack.c.h.b16 %v252
    %v1204 = vunpack.c.l.b16 %v253
    %v1205 = vunpack.c.h.b16 %v253
    %v1206 = vunpack.c.l.b16 %v254
    %v1207 = vunpack.c.h.b16 %v254
    %v1208 = vunpack.c.l.b16 %v255
    %v1209 = vunpack.c.h.b16 %v255
    %v1210 = vunpack.c.l.b16 %v256
    %v1211 = vunpack.c.h.b16 %v256
    %v1212 = vunpack.c.l.b16 %v257
    %v1213 = vunpack.c.h.b16 %v257
    %v1214 = vunpack.c.l.b16 %v258
    %v1215 = vunpack.c.h.b16 %v258
    %v1216 = vunpack.c.l.b16 %v259
    %v1217 = vunpack.c.h.b16 %v259
    %v1218 = vunpack.c.l.b16 %v260
    %v1219 = vunpack.c.h.b16 %v260
    %v1220 = vunpack.c.l.b16 %v261
    %v1221 = vunpack.c.h.b16 %v261
    %v1222 = vunpack.c.l.b16 %v262
    %v1223 = vunpack.c.h.b16 %v262
    %v1224 = vunpack.c.l.b16 %v263
    %v1225 = vunpack.c.h.b16 %v263
    %v1226 = vunpack.c.l.b16 %v264
    %v1227 = vunpack.c.h.b16 %v264
    %v1228 = vunpack.c.l.b16 %v265
    %v1229 = vunpack.c.h.b16 %v265
    %v1230 = vunpack.c.l.b16 %v266
    %v1231 = vunpack.c.h.b16 %v266
    %v1232 = vunpack.c.l.b16 %v267
    %v1233 = vunpack.c.h.b16 %v267
    %v1234 = vunpack.c.l.b16 %v268
    %v1235 = vunpack.c.h.b16 %v268
    %v1236 = vunpack.c.l.b16 %v269
    %v1237 = vunpack.c.h.b16 %v269
    %v1238 = vunpack.c.l.b16 %v270
    %v1239 = vunpack.c.h.b16 %v270
    %v1240 = vunpack.c.l.b16 %v271
    %v1241 = vunpack.c.h.b16 %v271
    %v1242 = vunpack.c.l.b16 %v272
    %v1243 = vunpack.c.h.b16 %v272
    %v1244 = vunpack.c.l.b16 %v273
    %v1245 = vunpack.c.h.b16 %v273
    %v1246 = vunpack.c.l.b16 %v274
    %v1247 = vunpack.c.h.b16 %v274
    %v1248 = vunpack.c.l.b16 %v275
    %v1249 = vunpack.c.h.b16 %v275
    %v1250 = vunpack.c.l.b16 %v276
    %v1251 = vunpack.c.h.b16 %v276
    %v1252 = vunpack.c.l.b16 %v277
    %v1253 = vunpack.c.h.b16 %v277
    %v1254 = vunpack.c.l.b16 %v278
    %v1255 = vunpack.c.h.b16 %v278
    %v1256 = vunpack.c.l.b16 %v279
    %v1257 = vunpack.c.h.b16 %v279
    %v1258 = vunpack.c.l.b16 %v280
    %v1259 = vunpack.c.h.b16 %v280
    %v1260 = vunpack.c.l.b16 %v281
    %v1261 = vunpack.c.h.b16 %v281
    %v1262 = vunpack.c.l.b16 %v282
    %v1263 = vunpack.c.h.b16 %v282
    %v1264 = vunpack.c.l.b16 %v283
    %v1265 = vunpack.c.h.b16 %v283
    %v1266 = vunpack.c.l.b16 %v284
    %v1267 = vunpack.c.h.b16 %v284
    %v1268 = vunpack.c.l.b16 %v285
    %v1269 = vunpack.c.h.b16 %v285
    %v1270 = vunpack.c.l.b16 %v286
    %v1271 = vunpack.c.h.b16 %v286
    %v1272 = vunpack.c.l.b16 %v287
    %v1273 = vunpack.c.h.b16 %v287
    %v1274 = vunpack.c.l.b16 %v288
    %v1275 = vunpack.c.h.b16 %v288
    %v1276 = vunpack.c.l.b16 %v289
    %v1277 = vunpack.c.h.b16 %v289
    %v1278 = vunpack.c.l.b16 %v290
    %v1279 = vunpack.c.h.b16 %v290
    %v1280 = vunpack.c.l.b16 %v291
    %v1281 = vunpack.c.h.b16 %v291
    %v1282 = vunpack.c.l.b16 %v292
    %v1283 = vunpack.c.h.b16 %v292
    %v1284 = vunpack.c.l.b16 %v293
    %v1285 = vunpack.c.h.b16 %v293
    %v1286 = vunpack.c.l.b16 %v294
    %v1287 = vunpack.c.h.b16 %v294
    %v1288 = vunpack.c.l.b16 %v295
    %v1289 = vunpack.c.h.b16 %v295
    %v1290 = vunpack.c.l.b16 %v296
    %v1291 = vunpack.c.h.b16 %v296
    %v1292 = vunpack.c.l.b16 %v297
    %v1293 = vunpack.c.h.b16 %v297
    %v1294 = vunpack.c.l.b16 %v298
    %v1295 = vunpack.c.h.b16 %v298
    %v1296 = vunpack.c.l.b16 %v299
    %v1297 = vunpack.c.h.b16 %v299
    %v1298 = vunpack.c.l.b16 %v300
    %v1299 = vunpack.c.h.b16 %v300
    %v1300 = vunpack.c.l.b16 %v301
    %v1301 = vunpack.c.h.b16 %v301
    %v1302 = vunpack.c.l.b16 %v302
    %v1303 = vunpack.c.h.b16 %v302
    %v1304 = vunpack.c.l.b16 %v303
    %v1305 = vunpack.c.h.b16 %v303
    %v1306 = vunpack.c.l.b16 %v304
    %v1307 = vunpack.c.h.b16 %v304
    %v1308 = vunpack.c.l.b16 %v305
    %v1309 = vunpack.c.h.b16 %v305
    %v1310 = vunpack.c.l.b16 %v306
    %v1311 = vunpack.c.h.b16 %v306
    %v1312 = vunpack.c.l.b16 %v307
    %v1313 = vunpack.c.h.b16 %v307
    %v1314 = vunpack.c.l.b16 %v308
    %v1315 = vunpack.c.h.b16 %v308
    %v1316 = vunpack.c.l.b16 %v309
    %v1317 = vunpack.c.h.b16 %v309
    %v1318 = vunpack.c.l.b16 %v310
    %v1319 = vunpack.c.h.b16 %v310
    %v1320 = vunpack.c.l.b16 %v311
    %v1321 = vunpack.c.h.b16 %v311
    %v1322 = vunpack.c.l.b16 %v312
    %v1323 = vunpack.c.h.b16 %v312
    %v1324 = vunpack.c.l.b16 %v313
    %v1325 = vunpack.c.h.b16 %v313
    %v1326 = vunpack.c.l.b16 %v314
    %v1327 = vunpack.c.h.b16 %v314
    %v1328 = vunpack.c.l.b16 %v315
    %v1329 = vunpack.c.h.b16 %v315
    %v1330 = vunpack.c.l.b16 %v316
    %v1331 = vunpack.c.h.b16 %v316
    %v1332 = vunpack.c.l.b16 %v317
    %v1333 = vunpack.c.h.b16 %v317
    %v1334 = vunpack.c.l.b16 %v318
    %v1335 = vunpack.c.h.b16 %v318
    %v1336 = vpack.c.b16 %v762, %v760
    %v1337 = vpack.c.b16 %v763, %v761
    %v1338 = vpack.c.b16 %v766, %v764
    %v1339 = vpack.c.b16 %v767, %v765
    %v1340 = vpack.c.b16 %v770, %v768
    %v1341 = vpack.c.b16 %v771, %v769
    %v1342 = vpack.c.b16 %v774, %v772
    %v1343 = vpack.c.b16 %v775, %v773
    %v1344 = vpack.c.b16 %v778, %v776
    %v1345 = vpack.c.b16 %v779, %v777
    %v1346 = vpack.c.b16 %v782, %v780
    %v1347 = vpack.c.b16 %v783, %v781
    %v1348 = vpack.c.b16 %v786, %v784
    %v1349 = vpack.c.b16 %v787, %v785
    %v1350 = vpack.c.b16 %v790, %v788
    %v1351 = vpack.c.b16 %v791, %v789
    %v1352 = vpack.c.b16 %v794, %v792
    %v1353 = vpack.c.b16 %v795, %v793
    %v1354 = vpack.c.b16 %v798, %v796
    %v1355 = vpack.c.b16 %v799, %v797
    %v1356 = vpack.c.b16 %v802, %v800
    %v1357 = vpack.c.b16 %v803, %v801
    %v1358 = vpack.c.b16 %v806, %v804
    %v1359 = vpack.c.b16 %v807, %v805
    %v1360 = vpack.c.b16 %v810, %v808
    %v1361 = vpack.c.b16 %v811, %v809
    %v1362 = vpack.c.b16 %v814, %v812
    %v1363 = vpack.c.b16 %v815, %v813
    %v1364 = vpack.c.b16 %v818, %v816
    %v1365 = vpack.c.b16 %v819, %v817
    %v1366 = vpack.c.b16 %v822, %v820
    %v1367 = vpack.c.b16 %v823, %v821
    %v1368 = vpack.c.b16 %v826, %v824
    %v1369 = vpack.c.b16 %v827, %v825
    %v1370 = vpack.c.b16 %v830, %v828
    %v1371 = vpack.c.b16 %v831, %v829
    %v1372 = vpack.c.b16 %v834, %v832
    %v1373 = vpack.c.b16 %v835, %v833
    %v1374 = vpack.c.b16 %v838, %v836
    %v1375 = vpack.c.b16 %v839, %v837
    %v1376 = vpack.c.b16 %v842, %v840
    %v1377 = vpack.c.b16 %v843, %v841
    %v1378 = vpack.c.b16 %v846, %v844
    %v1379 = vpack.c.b16 %v847, %v845
    %v1380 = vpack.c.b16 %v850, %v848
    %v1381 = vpack.c.b16 %v851, %v849
    %v1382 = vpack.c.b16 %v854, %v852
    %v1383 = vpack.c.b16 %v855, %v853
    %v1384 = vpack.c.b16 %v858, %v856
    %v1385 = vpack.c.b16 %v859, %v857
    %v1386 = vpack.c.b16 %v862, %v860
    %v1387 = vpack.c.b16 %v863, %v861
    %v1388 = vpack.c.b16 %v866, %v864
    %v1389 = vpack.c.b16 %v867, %v865
    %v1390 = vpack.c.b16 %v870, %v868
    %v1391 = vpack.c.b16 %v871, %v869
    %v1392 = vpack.c.b16 %v874, %v872
    %v1393 = vpack.c.b16 %v875, %v873
    %v1394 = vpack.c.b16 %v878, %v876
    %v1395 = vpack.c.b16 %v879, %v877
    %v1396 = vpack.c.b16 %v882, %v880
    %v1397 = vpack.c.b16 %v883, %v881
    %v1398 = vpack.c.b16 %v886, %v884
    %v1399 = vpack.c.b16 %v887, %v885
    %v1400 = vpack.c.b16 %v890, %v888
    %v1401 = vpack.c.b16 %v891, %v889
    %v1402 = vpack.c.b16 %v894, %v892
    %v1403 = vpack.c.b16 %v895, %v893
    %v1404 = vpack.c.b16 %v898, %v896
    %v1405 = vpack.c.b16 %v899, %v897
    %v1406 = vpack.c.b16 %v902, %v900
    %v1407 = vpack.c.b16 %v903, %v901
    %v1408 = vpack.c.b16 %v906, %v904
    %v1409 = vpack.c.b16 %v907, %v905
    %v1410 = vpack.c.b16 %v910, %v908
    %v1411 = vpack.c.b16 %v911, %v909
    %v1412 = vpack.c.b16 %v914, %v912
    %v1413 = vpack.c.b16 %v915, %v913
    %v1414 = vpack.c.b16 %v918, %v916
    %v1415 = vpack.c.b16 %v919, %v917
    %v1416 = vpack.c.b16 %v922, %v920
    %v1417 = vpack.c.b16 %v923, %v921
    %v1418 = vpack.c.b16 %v926, %v924
    %v1419 = vpack.c.b16 %v927, %v925
    %v1420 = vpack.c.b16 %v930, %v928
    %v1421 = vpack.c.b16 %v931, %v929
    %v1422 = vpack.c.b16 %v934, %v932
    %v1423 = vpack.c.b16 %v935, %v933
    %v1424 = vpack.c.b16 %v938, %v936
    %v1425 = vpack.c.b16 %v939, %v937
    %v1426 = vpack.c.b16 %v942, %v940
    %v1427 = vpack.c.b16 %v943, %v941
    %v1428 = vpack.c.b16 %v946, %v944
    %v1429 = vpack.c.b16 %v947, %v945
    %v1430 = vpack.c.b16 %v950, %v948
    %v1431 = vpack.c.b16 %v951, %v949
    %v1432 = vpack.c.b16 %v954, %v952
    %v1433 = vpack.c.b16 %v955, %v953
    %v1434 = vpack.c.b16 %v958, %v956
    %v1435 = vpack.c.b16 %v959, %v957
    %v1436 = vpack.c.b16 %v962, %v960
    %v1437 = vpack.c.b16 %v963, %v961
    %v1438 = vpack.c.b16 %v966, %v964
    %v1439 = vpack.c.b16 %v967, %v965
    %v1440 = vpack.c.b16 %v970, %v968
    %v1441 = vpack.c.b16 %v971, %v969
    %v1442 = vpack.c.b16 %v974, %v972
    %v1443 = vpack.c.b16 %v975, %v973
    %v1444 = vpack.c.b16 %v978, %v976
    %v1445 = vpack.c.b16 %v979, %v977
    %v1446 = vpack.c.b16 %v982, %v980
    %v1447 = vpack.c.b16 %v983, %v981
    %v1448 = vpack.c.b16 %v986, %v984
    %v1449 = vpack.c.b16 %v987, %v985
    %v1450 = vpack.c.b16 %v990, %v988
    %v1451 = vpack.c.b16 %v991, %v989
    %v1452 = vpack.c.b16 %v994, %v992
    %v1453 = vpack.c.b16 %v995, %v993
    %v1454 = vpack.c.b16 %v998, %v996
    %v1455 = vpack.c.b16 %v999, %v997
    %v1456 = vpack.c.b16 %v1002, %v1000
    %v1457 = vpack.c.b16 %v1003, %v1001
    %v1458 = vpack.c.b16 %v1006, %v1004
    %v1459 = vpack.c.b16 %v1007, %v1005
    %v1460 = vpack.c.b16 %v1010, %v1008
    %v1461 = vpack.c.b16 %v1011, %v1009
    %v1462 = vpack.c.b16 %v1014, %v1012
    %v1463 = vpack.c.b16 %v1015, %v1013
    %v1464 = vpack.c.b16 %v1018, %v1016
    %v1465 = vpack.c.b16 %v1019, %v1017
    %v1466 = vpack.c.b16 %v1022, %v1020
    %v1467 = vpack.c.b16 %v1023, %v1021
    %v1468 = vpack.c.b16 %v1026, %v1024
    %v1469 = vpack.c.b16 %v1027, %v1025
    %v1470 = vpack.c.b16 %v1030, %v1028
    %v1471 = vpack.c.b16 %v1031, %v1029
    %v1472 = vpack.c.b16 %v1034, %v1032
    %v1473 = vpack.c.b16 %v1035, %v1033
    %v1474 = vpack.c.b16 %v1038, %v1036
    %v1475 = vpack.c.b16 %v1039, %v1037
    %v1476 = vpack.c.b16 %v1042, %v1040
    %v1477 = vpack.c.b16 %v1043, %v1041
    %v1478 = vpack.c.b16 %v1046, %v1044
    %v1479 = vpack.c.b16 %v1047, %v1045
    %v1480 = vpack.c.b16 %v1050, %v1048
    %v1481 = vpack.c.b16 %v1051, %v1049
    %v1482 = vpack.c.b16 %v1054, %v1052
    %v1483 = vpack.c.b16 %v1055, %v1053
    %v1484 = vpack.c.b16 %v1058, %v1056
    %v1485 = vpack.c.b16 %v1059, %v1057
    %v1486 = vpack.c.b16 %v1062, %v1060
    %v1487 = vpack.c.b16 %v1063, %v1061
    %v1488 = vpack.c.b16 %v1066, %v1064
    %v1489 = vpack.c.b16 %v1067, %v1065
    %v1490 = vpack.c.b16 %v1070, %v1068
    %v1491 = vpack.c.b16 %v1071, %v1069
    %v1492 = vpack.c.b16 %v1074, %v1072
    %v1493 = vpack.c.b16 %v1075, %v1073
    %v1494 = vpack.c.b16 %v1078, %v1076
    %v1495 = vpack.c.b16 %v1079, %v1077
    %v1496 = vpack.c.b16 %v1082, %v1080
    %v1497 = vpack.c.b16 %v1083, %v1081
    %v1498 = vpack.c.b16 %v1086, %v1084
    %v1499 = vpack.c.b16 %v1087, %v1085
    %v1500 = vpack.c.b16 %v1090, %v1088
    %v1501 = vpack.c.b16 %v1091, %v1089
    %v1502 = vpack.c.b16 %v1094, %v1092
    %v1503 = vpack.c.b16 %v1095, %v1093
    %v1504 = vpack.c.b16 %v1098, %v1096
    %v1505 = vpack.c.b16 %v1099, %v1097
    %v1506 = vpack.c.b16 %v1102, %v1100
    %v1507 = vpack.c.b16 %v1103, %v1101
    %v1508 = vpack.c.b16 %v1106, %v1104
    %v1509 = vpack.c.b16 %v1107, %v1105
    %v1510 = vpack.c.b16 %v1110, %v1108
    %v1511 = vpack.c.b16 %v1111, %v1109
    %v1512 = vpack.c.b16 %v1114, %v1112
    %v1513 = vpack.c.b16 %v1115, %v1113
    %v1514 = vpack.c.b16 %v1118, %v1116
    %v1515 = vpack.c.b16 %v1119, %v1117
    %v1516 = vpack.c.b16 %v1122, %v1120
    %v1517 = vpack.c.b16 %v1123, %v1121
    %v1518 = vpack.c.b16 %v1126, %v1124
    %v1519 = vpack.c.b16 %v1127, %v1125
    %v1520 = vpack.c.b16 %v1130, %v1128
    %v1521 = vpack.c.b16 %v1131, %v1129
    %v1522 = vpack.c.b16 %v1134, %v1132
    %v1523 = vpack.c.b16 %v1135, %v1133
    %v1524 = vpack.c.b16 %v1138, %v1136
    %v1525 = vpack.c.b16 %v1139, %v1137
    %v1526 = vpack.c.b16 %v1142, %v1140
    %v1527 = vpack.c.b16 %v1143, %v1141
    %v1528 = vpack.c.b16 %v1146, %v1144
    %v1529 = vpack.c.b16 %v1147, %v1145
    %v1530 = vpack.c.b16 %v1150, %v1148
    %v1531 = vpack.c.b16 %v1151, %v1149
    %v1532 = vpack.c.b16 %v1154, %v1152
    %v1533 = vpack.c.b16 %v1155, %v1153
    %v1534 = vpack.c.b16 %v1158, %v1156
    %v1535 = vpack.c.b16 %v1159, %v1157
    %v1536 = vpack.c.b16 %v1162, %v1160
    %v1537 = vpack.c.b16 %v1163, %v1161
    %v1538 = vpack.c.b16 %v1166, %v1164
    %v1539 = vpack.c.b16 %v1167, %v1165
    %v1540 = vpack.c.b16 %v1170, %v1168
    %v1541 = vpack.c.b16 %v1171, %v1169
    %v1542 = vpack.c.b16 %v1174, %v1172
    %v1543 = vpack.c.b16 %v1175, %v1173
    %v1544 = vpack.c.b16 %v1178, %v1176
    %v1545 = vpack.c.b16 %v1179, %v1177
    %v1546 = vpack.c.b16 %v1182, %v1180
    %v1547 = vpack.c.b16 %v1183, %v1181
    %v1548 = vpack.c.b16 %v1186, %v1184
    %v1549 = vpack.c.b16 %v1187, %v1185
    %v1550 = vpack.c.b16 %v1190, %v1188
    %v1551 = vpack.c.b16 %v1191, %v1189
    %v1552 = vpack.c.b16 %v1194, %v1192
    %v1553 = vpack.c.b16 %v1195, %v1193
    %v1554 = vpack.c.b16 %v1198, %v1196
    %v1555 = vpack.c.b16 %v1199, %v1197
    %v1556 = vpack.c.b16 %v1202, %v1200
    %v1557 = vpack.c.b16 %v1203, %v1201
    %v1558 = vpack.c.b16 %v1206, %v1204
    %v1559 = vpack.c.b16 %v1207, %v1205
    %v1560 = vpack.c.b16 %v1210, %v1208
    %v1561 = vpack.c.b16 %v1211, %v1209
    %v1562 = vpack.c.b16 %v1214, %v1212
    %v1563 = vpack.c.b16 %v1215, %v1213
    %v1564 = vpack.c.b16 %v1218, %v1216
    %v1565 = vpack.c.b16 %v1219, %v1217
    %v1566 = vpack.c.b16 %v1222, %v1220
    %v1567 = vpack.c.b16 %v1223, %v1221
    %v1568 = vpack.c.b16 %v1226, %v1224
    %v1569 = vpack.c.b16 %v1227, %v1225
    %v1570 = vpack.c.b16 %v1230, %v1228
    %v1571 = vpack.c.b16 %v1231, %v1229
    %v1572 = vpack.c.b16 %v1234, %v1232
    %v1573 = vpack.c.b16 %v1235, %v1233
    %v1574 = vpack.c.b16 %v1238, %v1236
    %v1575 = vpack.c.b16 %v1239, %v1237
    %v1576 = vpack.c.b16 %v1242, %v1240
    %v1577 = vpack.c.b16 %v1243, %v1241
    %v1578 = vpack.c.b16 %v1246, %v1244
    %v1579 = vpack.c.b16 %v1247, %v1245
    %v1580 = vpack.c.b16 %v1250, %v1248
    %v1581 = vpack.c.b16 %v1251, %v1249
    %v1582 = vpack.c.b16 %v1254, %v1252
    %v1583 = vpack.c.b16 %v1255, %v1253
    %v1584 = vpack.c.b16 %v1258, %v1256
    %v1585 = vpack.c.b16 %v1259, %v1257
    %v1586 = vpack.c.b16 %v1262, %v1260
    %v1587 = vpack.c.b16 %v1263, %v1261
    %v1588 = vpack.c.b16 %v1266, %v1264
    %v1589 = vpack.c.b16 %v1267, %v1265
    %v1590 = vpack.c.b16 %v1270, %v1268
    %v1591 = vpack.c.b16 %v1271, %v1269
    %v1592 = vpack.c.b16 %v1274, %v1272
    %v1593 = vpack.c.b16 %v1275, %v1273
    %v1594 = vpack.c.b16 %v1278, %v1276
    %v1595 = vpack.c.b16 %v1279, %v1277
    %v1596 = vpack.c.b16 %v1282, %v1280
    %v1597 = vpack.c.b16 %v1283, %v1281
    %v1598 = vpack.c.b16 %v1286, %v1284
    %v1599 = vpack.c.b16 %v1287, %v1285
    %v1600 = vpack.c.b16 %v1290, %v1288
    %v1601 = vpack.c.b16 %v1291, %v1289
    %v1602 = vpack.c.b16 %v1294, %v1292
    %v1603 = vpack.c.b16 %v1295, %v1293
    %v1604 = vpack.c.b16 %v1298, %v1296
    %v1605 = vpack.c.b16 %v1299, %v1297
    %v1606 = vpack.c.b16 %v1302, %v1300
    %v1607 = vpack.c.b16 %v1303, %v1301
    %v1608 = vpack.c.b16 %v1306, %v1304
    %v1609 = vpack.c.b16 %v1307, %v1305
    %v1610 = vpack.c.b16 %v1310, %v1308
    %v1611 = vpack.c.b16 %v1311, %v1309
    %v1612 = vpack.c.b16 %v1314, %v1312
    %v1613 = vpack.c.b16 %v1315, %v1313
    %v1614 = vpack.c.b16 %v1318, %v1316
    %v1615 = vpack.c.b16 %v1319, %v1317
    %v1616 = vpack.c.b16 %v1322, %v1320
    %v1617 = vpack.c.b16 %v1323, %v1321
    %v1618 = vpack.c.b16 %v1326, %v1324
    %v1619 = vpack.c.b16 %v1327, %v1325
    %v1620 = vpack.c.b16 %v1330, %v1328
    %v1621 = vpack.c.b16 %v1331, %v1329
    %v1622 = vpack.c.b16 %v1334, %v1332
    %v1623 = vpack.c.b16 %v1335, %v1333
    %1912 = vmatprep.subr.bf16.mxu0 %v1351
    %1913 = vmatpush1.bf16.msra.mxu0 %v1350
    %1914 = vmatprep.subr.bf16.mxu0 %v1349
    %1915 = vmatpush1.bf16.msra.mxu0 %v1348
    %1916 = vmatprep.subr.bf16.mxu0 %v1347
    %1917 = vmatpush1.bf16.msra.mxu0 %v1346
    %1918 = vmatprep.subr.bf16.mxu0 %v1345
    %1919 = vmatpush1.bf16.msra.mxu0 %v1344
    %1920 = vmatprep.subr.bf16.mxu0 %v1343
    %1921 = vmatpush1.bf16.msra.mxu0 %v1342
    %1922 = vmatprep.subr.bf16.mxu0 %v1341
    %1923 = vmatpush1.bf16.msra.mxu0 %v1340
    %1924 = vmatprep.subr.bf16.mxu0 %v1339
    %1925 = vmatpush1.bf16.msra.mxu0 %v1338
    %1926 = vmatprep.subr.bf16.mxu0 %v1337
    %1927 = vmatpush1.bf16.msra.mxu0 %v1336
    %1928 = vmatprep.subr.bf16.mxu0 %v1367
    %1929 = vmatpush2.bf16.msra.mxu0 %v1366
    %1930 = vmatprep.subr.bf16.mxu0 %v1365
    %1931 = vmatpush2.bf16.msra.mxu0 %v1364
    %1932 = vmatprep.subr.bf16.mxu0 %v1363
    %1933 = vmatpush2.bf16.msra.mxu0 %v1362
    %1934 = vmatprep.subr.bf16.mxu0 %v1361
    %1935 = vmatpush2.bf16.msra.mxu0 %v1360
    %1936 = vmatprep.subr.bf16.mxu0 %v1359
    %1937 = vmatpush2.bf16.msra.mxu0 %v1358
    %1938 = vmatprep.subr.bf16.mxu0 %v1357
    %1939 = vmatpush2.bf16.msra.mxu0 %v1356
    %1940 = vmatprep.subr.bf16.mxu0 %v1355
    %1941 = vmatpush2.bf16.msra.mxu0 %v1354
    %1942 = vmatprep.subr.bf16.mxu0 %v1353
    %1943 = vmatpush2.bf16.msra.mxu0 %v1352
    %1944 = vmatprep.mubr.bf16.mxu0 %v371
    %1945 = vmatmul.mubr.bf16.gmra.mxu0 %v357
    %v1946 = vpop.f32.mrf.mxu0
    %v1947 = vadd.f32 %v324, %v1946
    %v1948 = vpop.f32.mrf.mxu0
    %v1949 = vadd.f32 %v328, %v1948
    %v1950 = vpop.f32.mrf.mxu0
    %v1951 = vpop.f32.mrf.mxu0
    %1952 = vdwg.mxu0
    %1953 = vmatprep.subr.bf16.mxu0 %v1383
    %1954 = vmatpush1.bf16.msra.mxu0 %v1382
    %1955 = vmatprep.subr.bf16.mxu0 %v1381
    %1956 = vmatpush1.bf16.msra.mxu0 %v1380
    %1957 = vmatprep.subr.bf16.mxu0 %v1379
    %1958 = vmatpush1.bf16.msra.mxu0 %v1378
    %1959 = vmatprep.subr.bf16.mxu0 %v1377
    %1960 = vmatpush1.bf16.msra.mxu0 %v1376
    %1961 = vmatprep.subr.bf16.mxu0 %v1375
    %1962 = vmatpush1.bf16.msra.mxu0 %v1374
    %1963 = vmatprep.subr.bf16.mxu0 %v1373
    %1964 = vmatpush1.bf16.msra.mxu0 %v1372
    %1965 = vmatprep.subr.bf16.mxu0 %v1371
    %1966 = vmatpush1.bf16.msra.mxu0 %v1370
    %1967 = vmatprep.subr.bf16.mxu0 %v1369
    %1968 = vmatpush1.bf16.msra.mxu0 %v1368
    %1969 = vmatprep.subr.bf16.mxu0 %v1399
    %1970 = vmatpush2.bf16.msra.mxu0 %v1398
    %1971 = vmatprep.subr.bf16.mxu0 %v1397
    %1972 = vmatpush2.bf16.msra.mxu0 %v1396
    %1973 = vmatprep.subr.bf16.mxu0 %v1395
    %1974 = vmatpush2.bf16.msra.mxu0 %v1394
    %1975 = vmatprep.subr.bf16.mxu0 %v1393
    %1976 = vmatpush2.bf16.msra.mxu0 %v1392
    %1977 = vmatprep.subr.bf16.mxu0 %v1391
    %1978 = vmatpush2.bf16.msra.mxu0 %v1390
    %1979 = vmatprep.subr.bf16.mxu0 %v1389
    %1980 = vmatpush2.bf16.msra.mxu0 %v1388
    %1981 = vmatprep.subr.bf16.mxu0 %v1387
    %1982 = vmatpush2.bf16.msra.mxu0 %v1386
    %1983 = vmatprep.subr.bf16.mxu0 %v1385
    %1984 = vmatpush2.bf16.msra.mxu0 %v1384
    %1985 = vmatprep.mubr.bf16.mxu0 %v381
    %1986 = vmatmul.mubr.bf16.gmra.mxu0 %v379
    %v1987 = vpop.f32.mrf.mxu0
    %v1988 = vadd.f32 %v1947, %v1987
    %v1989 = vpop.f32.mrf.mxu0
    %v1990 = vadd.f32 %v1949, %v1989
    %v1991 = vpop.f32.mrf.mxu0
    %v1992 = vpop.f32.mrf.mxu0
    %1993 = vdwg.mxu0
    %1994 = vmatprep.subr.bf16.mxu0 %v1415
    %1995 = vmatpush1.bf16.msra.mxu0 %v1414
    %1996 = vmatprep.subr.bf16.mxu0 %v1413
    %1997 = vmatpush1.bf16.msra.mxu0 %v1412
    %1998 = vmatprep.subr.bf16.mxu0 %v1411
    %1999 = vmatpush1.bf16.msra.mxu0 %v1410
    %2000 = vmatprep.subr.bf16.mxu0 %v1409
    %2001 = vmatpush1.bf16.msra.mxu0 %v1408
    %2002 = vmatprep.subr.bf16.mxu0 %v1407
    %2003 = vmatpush1.bf16.msra.mxu0 %v1406
    %2004 = vmatprep.subr.bf16.mxu0 %v1405
    %2005 = vmatpush1.bf16.msra.mxu0 %v1404
    %2006 = vmatprep.subr.bf16.mxu0 %v1403
    %2007 = vmatpush1.bf16.msra.mxu0 %v1402
    %2008 = vmatprep.subr.bf16.mxu0 %v1401
    %2009 = vmatpush1.bf16.msra.mxu0 %v1400
    %2010 = vmatprep.subr.bf16.mxu0 %v1431
    %2011 = vmatpush2.bf16.msra.mxu0 %v1430
    %2012 = vmatprep.subr.bf16.mxu0 %v1429
    %2013 = vmatpush2.bf16.msra.mxu0 %v1428
    %2014 = vmatprep.subr.bf16.mxu0 %v1427
    %2015 = vmatpush2.bf16.msra.mxu0 %v1426
    %2016 = vmatprep.subr.bf16.mxu0 %v1425
    %2017 = vmatpush2.bf16.msra.mxu0 %v1424
    %2018 = vmatprep.subr.bf16.mxu0 %v1423
    %2019 = vmatpush2.bf16.msra.mxu0 %v1422
    %2020 = vmatprep.subr.bf16.mxu0 %v1421
    %2021 = vmatpush2.bf16.msra.mxu0 %v1420
    %2022 = vmatprep.subr.bf16.mxu0 %v1419
    %2023 = vmatpush2.bf16.msra.mxu0 %v1418
    %2024 = vmatprep.subr.bf16.mxu0 %v1417
    %2025 = vmatpush2.bf16.msra.mxu0 %v1416
    %2026 = vmatprep.mubr.bf16.mxu0 %v378
    %2027 = vmatmul.mubr.bf16.gmra.mxu0 %v364
    %v2028 = vpop.f32.mrf.mxu0
    %v2029 = vadd.f32 %v1988, %v2028
    %v2030 = vpop.f32.mrf.mxu0
    %v2031 = vadd.f32 %v1990, %v2030
    %v2032 = vpop.f32.mrf.mxu0
    %v2033 = vpop.f32.mrf.mxu0
    %2034 = vdwg.mxu0
    %2035 = vmatprep.subr.bf16.mxu0 %v1447
    %2036 = vmatpush1.bf16.msra.mxu0 %v1446
    %2037 = vmatprep.subr.bf16.mxu0 %v1445
    %2038 = vmatpush1.bf16.msra.mxu0 %v1444
    %2039 = vmatprep.subr.bf16.mxu0 %v1443
    %2040 = vmatpush1.bf16.msra.mxu0 %v1442
    %2041 = vmatprep.subr.bf16.mxu0 %v1441
    %2042 = vmatpush1.bf16.msra.mxu0 %v1440
    %2043 = vmatprep.subr.bf16.mxu0 %v1439
    %2044 = vmatpush1.bf16.msra.mxu0 %v1438
    %2045 = vmatprep.subr.bf16.mxu0 %v1437
    %2046 = vmatpush1.bf16.msra.mxu0 %v1436
    %2047 = vmatprep.subr.bf16.mxu0 %v1435
    %2048 = vmatpush1.bf16.msra.mxu0 %v1434
    %2049 = vmatprep.subr.bf16.mxu0 %v1433
    %2050 = vmatpush1.bf16.msra.mxu0 %v1432
    %2051 = vmatprep.subr.bf16.mxu0 %v1463
    %2052 = vmatpush2.bf16.msra.mxu0 %v1462
    %2053 = vmatprep.subr.bf16.mxu0 %v1461
    %2054 = vmatpush2.bf16.msra.mxu0 %v1460
    %2055 = vmatprep.subr.bf16.mxu0 %v1459
    %2056 = vmatpush2.bf16.msra.mxu0 %v1458
    %2057 = vmatprep.subr.bf16.mxu0 %v1457
    %2058 = vmatpush2.bf16.msra.mxu0 %v1456
    %2059 = vmatprep.subr.bf16.mxu0 %v1455
    %2060 = vmatpush2.bf16.msra.mxu0 %v1454
    %2061 = vmatprep.subr.bf16.mxu0 %v1453
    %2062 = vmatpush2.bf16.msra.mxu0 %v1452
    %2063 = vmatprep.subr.bf16.mxu0 %v1451
    %2064 = vmatpush2.bf16.msra.mxu0 %v1450
    %2065 = vmatprep.subr.bf16.mxu0 %v1449
    %2066 = vmatpush2.bf16.msra.mxu0 %v1448
    %2067 = vmatprep.mubr.bf16.mxu0 %v382
    %2068 = vmatmul.mubr.bf16.gmra.mxu0 %v380
    %v2069 = vpop.f32.mrf.mxu0
    %v2070 = vadd.f32 %v2029, %v2069
    %v2071 = vpop.f32.mrf.mxu0
    %v2072 = vadd.f32 %v2031, %v2071
    %v2073 = vpop.f32.mrf.mxu0
    %v2074 = vpop.f32.mrf.mxu0
    %2075 = vdwg.mxu0
    %2076 = vmatprep.subr.bf16.mxu0 %v1479
    %2077 = vmatpush1.bf16.msra.mxu0 %v1478
    %2078 = vmatprep.subr.bf16.mxu0 %v1477
    %2079 = vmatpush1.bf16.msra.mxu0 %v1476
    %2080 = vmatprep.subr.bf16.mxu0 %v1475
    %2081 = vmatpush1.bf16.msra.mxu0 %v1474
    %2082 = vmatprep.subr.bf16.mxu0 %v1473
    %2083 = vmatpush1.bf16.msra.mxu0 %v1472
    %2084 = vmatprep.subr.bf16.mxu0 %v1471
    %2085 = vmatpush1.bf16.msra.mxu0 %v1470
    %2086 = vmatprep.subr.bf16.mxu0 %v1469
    %2087 = vmatpush1.bf16.msra.mxu0 %v1468
    %2088 = vmatprep.subr.bf16.mxu0 %v1467
    %2089 = vmatpush1.bf16.msra.mxu0 %v1466
    %2090 = vmatprep.subr.bf16.mxu0 %v1465
    %2091 = vmatpush1.bf16.msra.mxu0 %v1464
    %2092 = vmatprep.subr.bf16.mxu0 %v1495
    %2093 = vmatpush2.bf16.msra.mxu0 %v1494
    %2094 = vmatprep.subr.bf16.mxu0 %v1493
    %2095 = vmatpush2.bf16.msra.mxu0 %v1492
    %2096 = vmatprep.subr.bf16.mxu0 %v1491
    %2097 = vmatpush2.bf16.msra.mxu0 %v1490
    %2098 = vmatprep.subr.bf16.mxu0 %v1489
    %2099 = vmatpush2.bf16.msra.mxu0 %v1488
    %2100 = vmatprep.subr.bf16.mxu0 %v1487
    %2101 = vmatpush2.bf16.msra.mxu0 %v1486
    %2102 = vmatprep.subr.bf16.mxu0 %v1485
    %2103 = vmatpush2.bf16.msra.mxu0 %v1484
    %2104 = vmatprep.subr.bf16.mxu0 %v1483
    %2105 = vmatpush2.bf16.msra.mxu0 %v1482
    %2106 = vmatprep.subr.bf16.mxu0 %v1481
    %2107 = vmatpush2.bf16.msra.mxu0 %v1480
    %2108 = vmatprep.mubr.bf16.mxu0 %v420
    %2109 = vmatmul.mubr.bf16.gmra.mxu0 %v406
    %v2110 = vpop.f32.mrf.mxu0
    %v2111 = vadd.f32 %v2070, %v2110
    %v2112 = vpop.f32.mrf.mxu0
    %v2113 = vadd.f32 %v2072, %v2112
    %v2114 = vpop.f32.mrf.mxu0
    %v2115 = vpop.f32.mrf.mxu0
    %2116 = vdwg.mxu0
    %2117 = vmatprep.subr.bf16.mxu0 %v1511
    %2118 = vmatpush1.bf16.msra.mxu0 %v1510
    %2119 = vmatprep.subr.bf16.mxu0 %v1509
    %2120 = vmatpush1.bf16.msra.mxu0 %v1508
    %2121 = vmatprep.subr.bf16.mxu0 %v1507
    %2122 = vmatpush1.bf16.msra.mxu0 %v1506
    %2123 = vmatprep.subr.bf16.mxu0 %v1505
    %2124 = vmatpush1.bf16.msra.mxu0 %v1504
    %2125 = vmatprep.subr.bf16.mxu0 %v1503
    %2126 = vmatpush1.bf16.msra.mxu0 %v1502
    %2127 = vmatprep.subr.bf16.mxu0 %v1501
    %2128 = vmatpush1.bf16.msra.mxu0 %v1500
    %2129 = vmatprep.subr.bf16.mxu0 %v1499
    %2130 = vmatpush1.bf16.msra.mxu0 %v1498
    %2131 = vmatprep.subr.bf16.mxu0 %v1497
    %2132 = vmatpush1.bf16.msra.mxu0 %v1496
    %2133 = vmatprep.subr.bf16.mxu0 %v1527
    %2134 = vmatpush2.bf16.msra.mxu0 %v1526
    %2135 = vmatprep.subr.bf16.mxu0 %v1525
    %2136 = vmatpush2.bf16.msra.mxu0 %v1524
    %2137 = vmatprep.subr.bf16.mxu0 %v1523
    %2138 = vmatpush2.bf16.msra.mxu0 %v1522
    %2139 = vmatprep.subr.bf16.mxu0 %v1521
    %2140 = vmatpush2.bf16.msra.mxu0 %v1520
    %2141 = vmatprep.subr.bf16.mxu0 %v1519
    %2142 = vmatpush2.bf16.msra.mxu0 %v1518
    %2143 = vmatprep.subr.bf16.mxu0 %v1517
    %2144 = vmatpush2.bf16.msra.mxu0 %v1516
    %2145 = vmatprep.subr.bf16.mxu0 %v1515
    %2146 = vmatpush2.bf16.msra.mxu0 %v1514
    %2147 = vmatprep.subr.bf16.mxu0 %v1513
    %2148 = vmatpush2.bf16.msra.mxu0 %v1512
    %2149 = vmatprep.mubr.bf16.mxu0 %v430
    %2150 = vmatmul.mubr.bf16.gmra.mxu0 %v428
    %v2151 = vpop.f32.mrf.mxu0
    %v2152 = vadd.f32 %v2111, %v2151
    %v2153 = vpop.f32.mrf.mxu0
    %v2154 = vadd.f32 %v2113, %v2153
    %v2155 = vpop.f32.mrf.mxu0
    %v2156 = vpop.f32.mrf.mxu0
    %2157 = vdwg.mxu0
    %2158 = vmatprep.subr.bf16.mxu0 %v1543
    %2159 = vmatpush1.bf16.msra.mxu0 %v1542
    %2160 = vmatprep.subr.bf16.mxu0 %v1541
    %2161 = vmatpush1.bf16.msra.mxu0 %v1540
    %2162 = vmatprep.subr.bf16.mxu0 %v1539
    %2163 = vmatpush1.bf16.msra.mxu0 %v1538
    %2164 = vmatprep.subr.bf16.mxu0 %v1537
    %2165 = vmatpush1.bf16.msra.mxu0 %v1536
    %2166 = vmatprep.subr.bf16.mxu0 %v1535
    %2167 = vmatpush1.bf16.msra.mxu0 %v1534
    %2168 = vmatprep.subr.bf16.mxu0 %v1533
    %2169 = vmatpush1.bf16.msra.mxu0 %v1532
    %2170 = vmatprep.subr.bf16.mxu0 %v1531
    %2171 = vmatpush1.bf16.msra.mxu0 %v1530
    %2172 = vmatprep.subr.bf16.mxu0 %v1529
    %2173 = vmatpush1.bf16.msra.mxu0 %v1528
    %2174 = vmatprep.subr.bf16.mxu0 %v1559
    %2175 = vmatpush2.bf16.msra.mxu0 %v1558
    %2176 = vmatprep.subr.bf16.mxu0 %v1557
    %2177 = vmatpush2.bf16.msra.mxu0 %v1556
    %2178 = vmatprep.subr.bf16.mxu0 %v1555
    %2179 = vmatpush2.bf16.msra.mxu0 %v1554
    %2180 = vmatprep.subr.bf16.mxu0 %v1553
    %2181 = vmatpush2.bf16.msra.mxu0 %v1552
    %2182 = vmatprep.subr.bf16.mxu0 %v1551
    %2183 = vmatpush2.bf16.msra.mxu0 %v1550
    %2184 = vmatprep.subr.bf16.mxu0 %v1549
    %2185 = vmatpush2.bf16.msra.mxu0 %v1548
    %2186 = vmatprep.subr.bf16.mxu0 %v1547
    %2187 = vmatpush2.bf16.msra.mxu0 %v1546
    %2188 = vmatprep.subr.bf16.mxu0 %v1545
    %2189 = vmatpush2.bf16.msra.mxu0 %v1544
    %2190 = vmatprep.mubr.bf16.mxu0 %v427
    %2191 = vmatmul.mubr.bf16.gmra.mxu0 %v413
    %v2192 = vpop.f32.mrf.mxu0
    %v2193 = vadd.f32 %v2152, %v2192
    %v2194 = vpop.f32.mrf.mxu0
    %v2195 = vadd.f32 %v2154, %v2194
    %v2196 = vpop.f32.mrf.mxu0
    %v2197 = vpop.f32.mrf.mxu0
    %2198 = vdwg.mxu0
    %2199 = vmatprep.subr.bf16.mxu0 %v1575
    %2200 = vmatpush1.bf16.msra.mxu0 %v1574
    %2201 = vmatprep.subr.bf16.mxu0 %v1573
    %2202 = vmatpush1.bf16.msra.mxu0 %v1572
    %2203 = vmatprep.subr.bf16.mxu0 %v1571
    %2204 = vmatpush1.bf16.msra.mxu0 %v1570
    %2205 = vmatprep.subr.bf16.mxu0 %v1569
    %2206 = vmatpush1.bf16.msra.mxu0 %v1568
    %2207 = vmatprep.subr.bf16.mxu0 %v1567
    %2208 = vmatpush1.bf16.msra.mxu0 %v1566
    %2209 = vmatprep.subr.bf16.mxu0 %v1565
    %2210 = vmatpush1.bf16.msra.mxu0 %v1564
    %2211 = vmatprep.subr.bf16.mxu0 %v1563
    %2212 = vmatpush1.bf16.msra.mxu0 %v1562
    %2213 = vmatprep.subr.bf16.mxu0 %v1561
    %2214 = vmatpush1.bf16.msra.mxu0 %v1560
    %2215 = vmatprep.subr.bf16.mxu0 %v1591
    %2216 = vmatpush2.bf16.msra.mxu0 %v1590
    %2217 = vmatprep.subr.bf16.mxu0 %v1589
    %2218 = vmatpush2.bf16.msra.mxu0 %v1588
    %2219 = vmatprep.subr.bf16.mxu0 %v1587
    %2220 = vmatpush2.bf16.msra.mxu0 %v1586
    %2221 = vmatprep.subr.bf16.mxu0 %v1585
    %2222 = vmatpush2.bf16.msra.mxu0 %v1584
    %2223 = vmatprep.subr.bf16.mxu0 %v1583
    %2224 = vmatpush2.bf16.msra.mxu0 %v1582
    %2225 = vmatprep.subr.bf16.mxu0 %v1581
    %2226 = vmatpush2.bf16.msra.mxu0 %v1580
    %2227 = vmatprep.subr.bf16.mxu0 %v1579
    %2228 = vmatpush2.bf16.msra.mxu0 %v1578
    %2229 = vmatprep.subr.bf16.mxu0 %v1577
    %2230 = vmatpush2.bf16.msra.mxu0 %v1576
    %2231 = vmatprep.mubr.bf16.mxu0 %v431
    %2232 = vmatmul.mubr.bf16.gmra.mxu0 %v429
    %v2233 = vpop.f32.mrf.mxu0
    %v2234 = vadd.f32 %v2193, %v2233
    %v2235 = vpop.f32.mrf.mxu0
    %v2236 = vadd.f32 %v2195, %v2235
    %v2237 = vpop.f32.mrf.mxu0
    %v2238 = vpop.f32.mrf.mxu0
    %2239 = vdwg.mxu0
    %2240 = vmatprep.subr.bf16.mxu0 %v1607
    %2241 = vmatpush1.bf16.msra.mxu0 %v1606
    %2242 = vmatprep.subr.bf16.mxu0 %v1605
    %2243 = vmatpush1.bf16.msra.mxu0 %v1604
    %2244 = vmatprep.subr.bf16.mxu0 %v1603
    %2245 = vmatpush1.bf16.msra.mxu0 %v1602
    %2246 = vmatprep.subr.bf16.mxu0 %v1601
    %2247 = vmatpush1.bf16.msra.mxu0 %v1600
    %2248 = vmatprep.subr.bf16.mxu0 %v1599
    %2249 = vmatpush1.bf16.msra.mxu0 %v1598
    %2250 = vmatprep.subr.bf16.mxu0 %v1597
    %2251 = vmatpush1.bf16.msra.mxu0 %v1596
    %2252 = vmatprep.subr.bf16.mxu0 %v1595
    %2253 = vmatpush1.bf16.msra.mxu0 %v1594
    %2254 = vmatprep.subr.bf16.mxu0 %v1593
    %2255 = vmatpush1.bf16.msra.mxu0 %v1592
    %2256 = vmatprep.subr.bf16.mxu0 %v1623
    %2257 = vmatpush2.bf16.msra.mxu0 %v1622
    %2258 = vmatprep.subr.bf16.mxu0 %v1621
    %2259 = vmatpush2.bf16.msra.mxu0 %v1620
    %2260 = vmatprep.subr.bf16.mxu0 %v1619
    %2261 = vmatpush2.bf16.msra.mxu0 %v1618
    %2262 = vmatprep.subr.bf16.mxu0 %v1617
    %2263 = vmatpush2.bf16.msra.mxu0 %v1616
    %2264 = vmatprep.subr.bf16.mxu0 %v1615
    %2265 = vmatpush2.bf16.msra.mxu0 %v1614
    %2266 = vmatprep.subr.bf16.mxu0 %v1613
    %2267 = vmatpush2.bf16.msra.mxu0 %v1612
    %2268 = vmatprep.subr.bf16.mxu0 %v1611
    %2269 = vmatpush2.bf16.msra.mxu0 %v1610
    %2270 = vmatprep.subr.bf16.mxu0 %v1609
    %2271 = vmatpush2.bf16.msra.mxu0 %v1608
    %2272 = vmatprep.mubr.bf16.mxu0 %v453
    %2273 = vmatmul.mubr.bf16.gmra.mxu0 %v446
    %v2274 = vpop.f32.mrf.mxu0
    %v2275 = vadd.f32 %v2234, %v2274
    %v2276 = vpop.f32.mrf.mxu0
    %v2277 = vadd.f32 %v2236, %v2276
    %v2278 = vpop.f32.mrf.mxu0
    %v2279 = vpop.f32.mrf.mxu0
    %2280 = vdwg.mxu0
    %v2281 = vmax.f32 %v2275, 0.0
    %v2282 = vmax.f32 %v2277, 0.0
    %v2283 = vpack.c.bf16 %v2281, %v2281
    %v2284 = vpack.c.bf16 %v2282, %v2282
    %v2285 = vld [vmem:[%s3] sm:$0xf]
    %v2286 = vld [vmem:[%s3 + $0x4] sm:$0xf]
    %v2287 = vld [vmem:[%s3 + $0x8] sm:$0xf]
    %v2288 = vld [vmem:[%s3 + $0xc] sm:$0xf]
    %v2289 = vld [vmem:[%s3 + $0x10] sm:$0xf]
    %v2290 = vld [vmem:[%s3 + $0x14] sm:$0xf]
    %v2291 = vld [vmem:[%s3 + $0x18] sm:$0xf]
    %v2292 = vld [vmem:[%s3 + $0x1c] sm:$0xf]
    %v2293 = vld [vmem:[%s3 + $0x20] sm:$0xf]
    %v2294 = vld [vmem:[%s3 + $0x24] sm:$0xf]
    %v2295 = vld [vmem:[%s3 + $0x28] sm:$0xf]
    %v2296 = vld [vmem:[%s3 + $0x2c] sm:$0xf]
    %v2297 = vld [vmem:[%s3 + $0x30] sm:$0xf]
    %v2298 = vld [vmem:[%s3 + $0x34] sm:$0xf]
    %v2299 = vld [vmem:[%s3 + $0x38] sm:$0xf]
    %v2300 = vld [vmem:[%s3 + $0x3c] sm:$0xf]
    %v2301 = vld [vmem:[%s3 + $0x40] sm:$0xf]
    %v2302 = vld [vmem:[%s3 + $0x44] sm:$0xf]
    %v2303 = vld [vmem:[%s3 + $0x48] sm:$0xf]
    %v2304 = vld [vmem:[%s3 + $0x4c] sm:$0xf]
    %v2305 = vld [vmem:[%s3 + $0x50] sm:$0xf]
    %v2306 = vld [vmem:[%s3 + $0x54] sm:$0xf]
    %v2307 = vld [vmem:[%s3 + $0x58] sm:$0xf]
    %v2308 = vld [vmem:[%s3 + $0x5c] sm:$0xf]
    %v2309 = vld [vmem:[%s3 + $0x60] sm:$0xf]
    %v2310 = vld [vmem:[%s3 + $0x64] sm:$0xf]
    %v2311 = vld [vmem:[%s3 + $0x68] sm:$0xf]
    %v2312 = vld [vmem:[%s3 + $0x6c] sm:$0xf]
    %v2313 = vld [vmem:[%s3 + $0x70] sm:$0xf]
    %v2314 = vld [vmem:[%s3 + $0x74] sm:$0xf]
    %v2315 = vld [vmem:[%s3 + $0x78] sm:$0xf]
    %v2316 = vld [vmem:[%s3 + $0x7c] sm:$0xf]
    %v2317 = vld [vmem:[%s4] sm:$0x1]
    %v2319 = vlaneseq
    %v2320 = vshrl.u32 %v2319, 7
    %v2321 = vsub.s32 0, %v2320
    %v2322 = vrot.slane %v2317, %v2321
    %v2356 = vunpack.c.l.b16 %v2285
    %v2357 = vunpack.c.l.b16 %v2286
    %v2358 = vunpack.c.l.b16 %v2287
    %v2359 = vunpack.c.l.b16 %v2288
    %v2360 = vunpack.c.l.b16 %v2289
    %v2361 = vunpack.c.l.b16 %v2290
    %v2362 = vunpack.c.l.b16 %v2291
    %v2363 = vunpack.c.l.b16 %v2292
    %v2364 = vunpack.c.l.b16 %v2293
    %v2365 = vunpack.c.l.b16 %v2294
    %v2366 = vunpack.c.l.b16 %v2295
    %v2367 = vunpack.c.l.b16 %v2296
    %v2368 = vunpack.c.l.b16 %v2297
    %v2369 = vunpack.c.l.b16 %v2298
    %v2370 = vunpack.c.l.b16 %v2299
    %v2371 = vunpack.c.l.b16 %v2300
    %v2372 = vunpack.c.l.b16 %v2301
    %v2373 = vunpack.c.l.b16 %v2302
    %v2374 = vunpack.c.l.b16 %v2303
    %v2375 = vunpack.c.l.b16 %v2304
    %v2376 = vunpack.c.l.b16 %v2305
    %v2377 = vunpack.c.l.b16 %v2306
    %v2378 = vunpack.c.l.b16 %v2307
    %v2379 = vunpack.c.l.b16 %v2308
    %v2380 = vunpack.c.l.b16 %v2309
    %v2381 = vunpack.c.l.b16 %v2310
    %v2382 = vunpack.c.l.b16 %v2311
    %v2383 = vunpack.c.l.b16 %v2312
    %v2384 = vunpack.c.l.b16 %v2313
    %v2385 = vunpack.c.l.b16 %v2314
    %v2386 = vunpack.c.l.b16 %v2315
    %v2387 = vunpack.c.l.b16 %v2316
    %v2388 = vpack.c.b16 %v2357, %v2356
    %v2389 = vpack.c.b16 %v2359, %v2358
    %v2390 = vpack.c.b16 %v2361, %v2360
    %v2391 = vpack.c.b16 %v2363, %v2362
    %v2392 = vpack.c.b16 %v2365, %v2364
    %v2393 = vpack.c.b16 %v2367, %v2366
    %v2394 = vpack.c.b16 %v2369, %v2368
    %v2395 = vpack.c.b16 %v2371, %v2370
    %v2396 = vpack.c.b16 %v2373, %v2372
    %v2397 = vpack.c.b16 %v2375, %v2374
    %v2398 = vpack.c.b16 %v2377, %v2376
    %v2399 = vpack.c.b16 %v2379, %v2378
    %v2400 = vpack.c.b16 %v2381, %v2380
    %v2401 = vpack.c.b16 %v2383, %v2382
    %v2402 = vpack.c.b16 %v2385, %v2384
    %v2403 = vpack.c.b16 %v2387, %v2386
    %2420 = vmatprep.subr.bf16.mxu0 0
    %2421 = vmatpush1.bf16.msra.mxu0 %v2395
    %2422 = vmatprep.subr.bf16.mxu0 0
    %2423 = vmatpush1.bf16.msra.mxu0 %v2394
    %2424 = vmatprep.subr.bf16.mxu0 0
    %2425 = vmatpush1.bf16.msra.mxu0 %v2393
    %2426 = vmatprep.subr.bf16.mxu0 0
    %2427 = vmatpush1.bf16.msra.mxu0 %v2392
    %2428 = vmatprep.subr.bf16.mxu0 0
    %2429 = vmatpush1.bf16.msra.mxu0 %v2391
    %2430 = vmatprep.subr.bf16.mxu0 0
    %2431 = vmatpush1.bf16.msra.mxu0 %v2390
    %2432 = vmatprep.subr.bf16.mxu0 0
    %2433 = vmatpush1.bf16.msra.mxu0 %v2389
    %2434 = vmatprep.subr.bf16.mxu0 0
    %2435 = vmatpush1.bf16.msra.mxu0 %v2388
    %2436 = vmatprep.subr.bf16.mxu0 0
    %2437 = vmatpush2.bf16.msra.mxu0 %v2403
    %2438 = vmatprep.subr.bf16.mxu0 0
    %2439 = vmatpush2.bf16.msra.mxu0 %v2402
    %2440 = vmatprep.subr.bf16.mxu0 0
    %2441 = vmatpush2.bf16.msra.mxu0 %v2401
    %2442 = vmatprep.subr.bf16.mxu0 0
    %2443 = vmatpush2.bf16.msra.mxu0 %v2400
    %2444 = vmatprep.subr.bf16.mxu0 0
    %2445 = vmatpush2.bf16.msra.mxu0 %v2399
    %2446 = vmatprep.subr.bf16.mxu0 0
    %2447 = vmatpush2.bf16.msra.mxu0 %v2398
    %2448 = vmatprep.subr.bf16.mxu0 0
    %2449 = vmatpush2.bf16.msra.mxu0 %v2397
    %2450 = vmatprep.subr.bf16.mxu0 0
    %2451 = vmatpush2.bf16.msra.mxu0 %v2396
    %2452 = vmatprep.mubr.bf16.mxu0 %v2284
    %2453 = vmatmul.mubr.bf16.gmra.mxu0 %v2283
    %v2454 = vpop.f32.mrf.mxu0
    %v2455 = vadd.f32 %v2322, %v2454
    %v2456 = vpop.f32.mrf.mxu0
    %v2457 = vpop.f32.mrf.mxu0
    %v2458 = vpop.f32.mrf.mxu0
    %2459 = vdwg.mxu0
    %v2460 = vmax.f32 %v2455, 0.0
    %v2461 = vpack.c.bf16 %v2460, %v2460
    %v2462 = vld [vmem:[%s5] sm:$0xf]
    %v2463 = vld [vmem:[%s5 + $0x4] sm:$0xf]
    %v2464 = vld [vmem:[%s5 + $0x8] sm:$0xf]
    %v2465 = vld [vmem:[%s5 + $0xc] sm:$0xf]
    %v2466 = vld [vmem:[%s5 + $0x10] sm:$0xf]
    %v2467 = vld [vmem:[%s5 + $0x14] sm:$0xf]
    %v2468 = vld [vmem:[%s5 + $0x18] sm:$0xf]
    %v2469 = vld [vmem:[%s5 + $0x1c] sm:$0xf]
    %v2470 = vld [vmem:[%s5 + $0x20] sm:$0xf]
    %v2471 = vld [vmem:[%s5 + $0x24] sm:$0xf]
    %v2472 = vld [vmem:[%s5 + $0x28] sm:$0xf]
    %v2473 = vld [vmem:[%s5 + $0x2c] sm:$0xf]
    %v2474 = vld [vmem:[%s5 + $0x30] sm:$0xf]
    %v2475 = vld [vmem:[%s5 + $0x34] sm:$0xf]
    %v2476 = vld [vmem:[%s5 + $0x38] sm:$0xf]
    %v2477 = vld [vmem:[%s5 + $0x3c] sm:$0xf]
    %v2478 = vld [vmem:[%s6] sm:$0x1]
    %v2480 = vlaneseq
    %v2481 = vshrl.u32 %v2480, 7
    %v2482 = vsub.s32 0, %v2481
    %v2483 = vrot.slane %v2478, %v2482
    %v2501 = vunpack.c.l.b16 %v2462
    %v2502 = vunpack.c.l.b16 %v2463
    %v2503 = vunpack.c.l.b16 %v2464
    %v2504 = vunpack.c.l.b16 %v2465
    %v2505 = vunpack.c.l.b16 %v2466
    %v2506 = vunpack.c.l.b16 %v2467
    %v2507 = vunpack.c.l.b16 %v2468
    %v2508 = vunpack.c.l.b16 %v2469
    %v2509 = vunpack.c.l.b16 %v2470
    %v2510 = vunpack.c.l.b16 %v2471
    %v2511 = vunpack.c.l.b16 %v2472
    %v2512 = vunpack.c.l.b16 %v2473
    %v2513 = vunpack.c.l.b16 %v2474
    %v2514 = vunpack.c.l.b16 %v2475
    %v2515 = vunpack.c.l.b16 %v2476
    %v2516 = vunpack.c.l.b16 %v2477
    %v2517 = vpack.c.b16 %v2502, %v2501
    %v2518 = vpack.c.b16 %v2504, %v2503
    %v2519 = vpack.c.b16 %v2506, %v2505
    %v2520 = vpack.c.b16 %v2508, %v2507
    %v2521 = vpack.c.b16 %v2510, %v2509
    %v2522 = vpack.c.b16 %v2512, %v2511
    %v2523 = vpack.c.b16 %v2514, %v2513
    %v2524 = vpack.c.b16 %v2516, %v2515
    %2533 = vmatprep.subr.bf16.mxu0 0
    %2534 = vmatpush1.bf16.msra.mxu0 %v2524
    %2535 = vmatprep.subr.bf16.mxu0 0
    %2536 = vmatpush1.bf16.msra.mxu0 %v2523
    %2537 = vmatprep.subr.bf16.mxu0 0
    %2538 = vmatpush1.bf16.msra.mxu0 %v2522
    %2539 = vmatprep.subr.bf16.mxu0 0
    %2540 = vmatpush1.bf16.msra.mxu0 %v2521
    %2541 = vmatprep.subr.bf16.mxu0 0
    %2542 = vmatpush1.bf16.msra.mxu0 %v2520
    %2543 = vmatprep.subr.bf16.mxu0 0
    %2544 = vmatpush1.bf16.msra.mxu0 %v2519
    %2545 = vmatprep.subr.bf16.mxu0 0
    %2546 = vmatpush1.bf16.msra.mxu0 %v2518
    %2547 = vmatprep.subr.bf16.mxu0 0
    %2548 = vmatpush1.bf16.msra.mxu0 %v2517
    %2549 = vmatprep.subr.bf16.mxu0 0
    %2550 = vmatpush2.bf16.msra.mxu0 0
    %2551 = vmatprep.subr.bf16.mxu0 0
    %2552 = vmatpush2.bf16.msra.mxu0 0
    %2553 = vmatprep.subr.bf16.mxu0 0
    %2554 = vmatpush2.bf16.msra.mxu0 0
    %2555 = vmatprep.subr.bf16.mxu0 0
    %2556 = vmatpush2.bf16.msra.mxu0 0
    %2557 = vmatprep.subr.bf16.mxu0 0
    %2558 = vmatpush2.bf16.msra.mxu0 0
    %2559 = vmatprep.subr.bf16.mxu0 0
    %2560 = vmatpush2.bf16.msra.mxu0 0
    %2561 = vmatprep.subr.bf16.mxu0 0
    %2562 = vmatpush2.bf16.msra.mxu0 0
    %2563 = vmatprep.subr.bf16.mxu0 0
    %2564 = vmatpush2.bf16.msra.mxu0 0
    %2565 = vmatprep.mubr.bf16.mxu0 0
    %2566 = vmatmul.mubr.bf16.gmra.mxu0 %v2461
    %v2567 = vpop.f32.mrf.mxu0
    %v2568 = vadd.f32 %v2483, %v2567
    %v2569 = vpop.f32.mrf.mxu0
    %v2570 = vpop.f32.mrf.mxu0
    %v2571 = vpop.f32.mrf.mxu0
    %2572 = vdwg.mxu0
    %vm2573 = vcmask 74752
    %2574 = vst.msk [vmem:[#allocation2] sm:$0x3] %vm2573, %v2568
    // Predicated region
    $region30: #{firenet_forward.7} parent=1 // pred_check
      _
    $region31: #{firenet_forward.7} parent=1 // pred_check_branch
      %2576 = sbr.rel (0) target = $region33
    $region32: #{firenet_forward.7} parent=1 // pred_region
      %s2578 = ssub.s32 32, 32
      %2579 = vsyncadd [#allocation3], %s2578
      %s2581 = sshll.u32 [#allocation2], 4
      %s2582 = int_to_ptr.vmem [resolvable:$true] %s2581
      %2584 = dma.vmem_to_hbm [thread:$0]  %s2582, 32, %s7, [#allocation3]
    $region33: #{firenet_forward.7} parent=1 // pred_fallthru
      _
    // Predicated region
    $region34: #{firenet_forward.7} parent=1 // pred_check
      _
    $region35: #{firenet_forward.7} parent=1 // pred_check_branch
      %2586 = sbr.rel (0) target = $region37
    $region36: #{firenet_forward.7} parent=1 // pred_region
      %2587 = dma.done [#allocation3], 32
    $region37: #{firenet_forward.7} parent=1 // pred_fallthru
      _
    %2588 = vsyncpa [#allocation3], 1

</llo_original>
